<compile_context>
chip_gen: v5e
topology: v5e:2x2
jax: 0.10.0
libtpu: 0.0.40
codegen_flags: <defaults>
</compile_context>

<pallas_src>
import functools

import jax
import jax.numpy as jnp
from jax.experimental import pallas as pl
from jax.experimental.pallas import tpu as pltpu

SUBLANE = 8  # f32 sublane tile; batch is padded up to a multiple of this.


# ----------------------------------------------------------------------------
# Pallas kernel: one bidirectional GRU layer (optionally fused with fc+tanh)
# ----------------------------------------------------------------------------
def _bigru_layer_kernel(x_ref, wih_ref, whh_ref, bgi_ref, bhn_ref, *rest,
                        seq_len, batch, hidden, with_fc):
    """grid=(2,): program 0 = forward direction, program 1 = backward direction.

    x_ref   : (T*B, In)        whole sequence, time-major then batch
    wih_ref : (1, 3, In, H)    per-gate W_ih^T for this direction (gate order r, z, n)
    whh_ref : (1, 3, H, H)     per-gate W_hh^T
    bgi_ref : (1, 3, 1, H)     b_ih (+ b_hh for r,z gates)
    bhn_ref : (1, 1, H)        b_hh for the n gate (must stay inside r*(...))
    [fcw_ref: (2, H, H), fcb_ref: (1, H)]      only when with_fc
    outputs : hts (T*B, 2H) resident across the direction axis
              [hid (B, H)]                      only when with_fc
    scratch : gi_r/gi_z/gi_n/hts (T*B, H) VMEM, [h_fwd (B, H)] when with_fc
    """
    T, B, H = seq_len, batch, hidden
    if with_fc:
        (fcw_ref, fcb_ref, hts_ref, hid_ref,
         gir_scr, giz_scr, gin_scr, hts_scr, hfwd_scr) = rest
    else:
        (hts_ref, gir_scr, giz_scr, gin_scr, hts_scr) = rest
        fcw_ref = fcb_ref = hid_ref = hfwd_scr = None

    d = pl.program_id(0)  # 0 = forward, 1 = backward

    # ---- hoisted input projection: one (T*B, In)x(In, H) matmul per gate --------
    x = x_ref[...]
    gir_scr[...] = (jnp.dot(x, wih_ref[0, 0], preferred_element_type=jnp.float32)
                    + bgi_ref[0, 0])
    giz_scr[...] = (jnp.dot(x, wih_ref[0, 1], preferred_element_type=jnp.float32)
                    + bgi_ref[0, 1])
    gin_scr[...] = (jnp.dot(x, wih_ref[0, 2], preferred_element_type=jnp.float32)
                    + bgi_ref[0, 2])

    whh_r = whh_ref[0, 0]
    whh_z = whh_ref[0, 1]
    whh_n = whh_ref[0, 2]
    b_hn = bhn_ref[0]  # (1, H)

    # ---- time recurrence: h carried in vregs; only h @ W_hh inside the loop -----
    def step(t, h):
        idx = jnp.where(d == 0, t, T - 1 - t)
        row = pl.multiple_of(idx * B, B)  # B is a multiple of the 8-row sublane tile
        gh_r = jnp.dot(h, whh_r, preferred_element_type=jnp.float32)
        gh_z = jnp.dot(h, whh_z, preferred_element_type=jnp.float32)
        gh_n = jnp.dot(h, whh_n, preferred_element_type=jnp.float32)
        r = jax.nn.sigmoid(gir_scr[pl.ds(row, B), :] + gh_r)
        z = jax.nn.sigmoid(giz_scr[pl.ds(row, B), :] + gh_z)
        n = jnp.tanh(gin_scr[pl.ds(row, B), :] + r * (gh_n + b_hn))
        h_new = (1.0 - z) * n + z * h
        hts_scr[pl.ds(row, B), :] = h_new
        return h_new

    h_last = jax.lax.fori_loop(0, T, step, jnp.zeros((B, H), jnp.float32),
                               unroll=True)

    # ---- write this direction's half of the resident (T*B, 2H) output block -----
    @pl.when(d == 0)
    def _():
        hts_ref[:, 0:H] = hts_scr[...]
        if with_fc:
            hfwd_scr[...] = h_last

    @pl.when(d == 1)
    def _():
        hts_ref[:, H:2 * H] = hts_scr[...]
        if with_fc:
            # hidden = tanh([h_fwd, h_bwd] @ W_fc^T + b_fc), W_fc^T pre-split per half
            hid_ref[...] = jnp.tanh(
                jnp.dot(hfwd_scr[...], fcw_ref[0], preferred_element_type=jnp.float32)
                + jnp.dot(h_last, fcw_ref[1], preferred_element_type=jnp.float32)
                + fcb_ref[...])


# ----------------------------------------------------------------------------
# Wrapper for one layer
# ----------------------------------------------------------------------------
def bigru_layer(x2d, lw, *, fc, seq_len, batch, hidden):
    """x2d: (T*B, In).  Returns (hts (T*B, 2H), hid (B, H) or None)."""
    TB, In = x2d.shape
    H = hidden
    with_fc = fc is not None

    kernel = functools.partial(_bigru_layer_kernel, seq_len=seq_len, batch=batch,
                               hidden=H, with_fc=with_fc)

    in_specs = [
        pl.BlockSpec((TB, In), lambda d: (0, 0)),
        pl.BlockSpec((1, 3, In, H), lambda d: (d, 0, 0, 0)),
        pl.BlockSpec((1, 3, H, H), lambda d: (d, 0, 0, 0)),
        pl.BlockSpec((1, 3, 1, H), lambda d: (d, 0, 0, 0)),
        pl.BlockSpec((1, 1, H), lambda d: (d, 0, 0)),
    ]
    inputs = [x2d, lw["wih"], lw["whh"], lw["bgi"], lw["bhn"]]
    out_shape = [jax.ShapeDtypeStruct((TB, 2 * H), jnp.float32)]
    out_specs = [pl.BlockSpec((TB, 2 * H), lambda d: (0, 0))]
    scratch = [pltpu.VMEM((TB, H), jnp.float32) for _ in range(4)]

    if with_fc:
        fcw, fcb = fc
        in_specs += [pl.BlockSpec((2, H, H), lambda d: (0, 0, 0)),
                     pl.BlockSpec((1, H), lambda d: (0, 0))]
        inputs += [fcw, fcb]
        out_shape.append(jax.ShapeDtypeStruct((batch, H), jnp.float32))
        out_specs.append(pl.BlockSpec((batch, H), lambda d: (0, 0)))
        scratch.append(pltpu.VMEM((batch, H), jnp.float32))

    outs = pl.pallas_call(
        kernel,
        out_shape=tuple(out_shape),
        grid_spec=pltpu.PrefetchScalarGridSpec(
            num_scalar_prefetch=0,
            grid=(2,),  # direction axis (fwd, bwd)
            in_specs=in_specs,
            out_specs=out_specs,
            scratch_shapes=scratch,
        ),
        compiler_params=pltpu.CompilerParams(
            # outputs are revisited (accumulated) across the direction axis
            dimension_semantics=("arbitrary",)),
    )(*inputs)

    if with_fc:
        hts, hid = outs
        return hts, hid
    (hts,) = outs
    return hts, None


# ----------------------------------------------------------------------------
# Encoder forward (mirrors Encoder.forward)
# ----------------------------------------------------------------------------
def encoder_forward(kparams, xt):
    """xt: (T, B) int32 token ids.  Returns (hts (T,B,2H), hidden (1,B,H))."""
    T, B = xt.shape
    H = kparams["gru"][0]["whh"].shape[-1]
    Bp = ((B + SUBLANE - 1) // SUBLANE) * SUBLANE

    # pad batch to the sublane tile (padded rows use token 0, dropped at the end)
    xt_p = jnp.pad(xt, ((0, 0), (0, Bp - B)))
    x = kparams["embedding"][xt_p].astype(jnp.float32)   # (T, Bp, E) gather = plain-JAX glue
    # self.dropout(...) : identity in eval mode.
    x2d = x.reshape(T * Bp, -1)

    n_layers = len(kparams["gru"])
    hidden = None
    for li, lw in enumerate(kparams["gru"]):
        is_last = li == n_layers - 1
        fc = (kparams["fc_w"], kparams["fc_b"]) if is_last else None
        x2d, hid = bigru_layer(x2d, lw, fc=fc, seq_len=T, batch=Bp, hidden=H)
        if is_last:
            hidden = hid
        # inter-layer GRU dropout: identity in eval mode.

    hts = x2d.reshape(T, Bp, 2 * H)[:, :B]   # (T, B, 2H)
    hidden = hidden[:B][None]                # (1, B, H)
    return hts, hidden


# ----------------------------------------------------------------------------
# Parameters: torch-style shapes, then repacked into the kernel layout
# ----------------------------------------------------------------------------
def make_torch_style_params(key, input_size, embedding_size, hidden_size, layers):
    H = hidden_size

    def uni(k, shape, bound):
        return jax.random.uniform(k, shape, jnp.float32, -bound, bound)

    keys = iter(jax.random.split(key, 1 + layers * 8 + 2))
    params = {
        "embedding": jax.random.normal(next(keys), (input_size, embedding_size),
                                       jnp.float32),
        "gru": [],
    }
    k_gru = 1.0 / float(H) ** 0.5
    in_dim = embedding_size
    for _ in range(layers):
        layer = {}
        for d in ("f", "b"):
            layer[f"w_ih_{d}"] = uni(next(keys), (3 * H, in_dim), k_gru)
            layer[f"w_hh_{d}"] = uni(next(keys), (3 * H, H), k_gru)
            layer[f"b_ih_{d}"] = uni(next(keys), (3 * H,), k_gru)
            layer[f"b_hh_{d}"] = uni(next(keys), (3 * H,), k_gru)
        params["gru"].append(layer)
        in_dim = 2 * H
    k_fc = 1.0 / float(2 * H) ** 0.5
    params["fc_w"] = uni(next(keys), (H, 2 * H), k_fc)   # torch Linear: (out, in)
    params["fc_b"] = uni(next(keys), (H,), k_fc)
    return params


def prepare_kernel_params(params, hidden_size):
    H = hidden_size

    def split_gates(w):               # (3H, X) -> (3, X, H), gate order (r, z, n)
        return jnp.stack([w[0:H].T, w[H:2 * H].T, w[2 * H:3 * H].T], axis=0)

    def fold_bias(b_ih, b_hh):
        bg = jnp.stack([b_ih[0:H] + b_hh[0:H],
                        b_ih[H:2 * H] + b_hh[H:2 * H],
                        b_ih[2 * H:3 * H]], axis=0)          # (3, H)
        return bg[:, None, :], b_hh[2 * H:3 * H][None, :]    # (3,1,H), (1,H)

    kp = {"embedding": params["embedding"], "gru": []}
    for layer in params["gru"]:
        bgi_f, bhn_f = fold_bias(layer["b_ih_f"], layer["b_hh_f"])
        bgi_b, bhn_b = fold_bias(layer["b_ih_b"], layer["b_hh_b"])
        kp["gru"].append({
            "wih": jnp.stack([split_gates(layer["w_ih_f"]),
                              split_gates(layer["w_ih_b"])], 0),   # (2,3,In,H)
            "whh": jnp.stack([split_gates(layer["w_hh_f"]),
                              split_gates(layer["w_hh_b"])], 0),   # (2,3,H,H)
            "bgi": jnp.stack([bgi_f, bgi_b], 0),                   # (2,3,1,H)
            "bhn": jnp.stack([bhn_f, bhn_b], 0),                   # (2,1,H)
        })
    wt = params["fc_w"].T                          # (2H, H)
    kp["fc_w"] = jnp.stack([wt[:H], wt[H:]], 0)    # (2,H,H): fwd / bwd halves
    kp["fc_b"] = params["fc_b"][None, :]           # (1,H)
    return kp


# ----------------------------------------------------------------------------
# Pure-JAX reference (torch.nn.GRU semantics) for a sanity check
# ----------------------------------------------------------------------------
def _ref_gru_cell(x, h, w_ih, w_hh, b_ih, b_hh, H):
    gi = x @ w_ih.T + b_ih
    gh = h @ w_hh.T + b_hh
    r = jax.nn.sigmoid(gi[:, :H] + gh[:, :H])
    z = jax.nn.sigmoid(gi[:, H:2 * H] + gh[:, H:2 * H])
    n = jnp.tanh(gi[:, 2 * H:] + r * gh[:, 2 * H:])
    return (1.0 - z) * n + z * h


def encoder_reference(params, xt, hidden_size):
    H = hidden_size
    T, B = xt.shape
    x = params["embedding"][xt]
    hf = hb = None
    for layer in params["gru"]:
        hf = jnp.zeros((B, H), jnp.float32)
        hb = jnp.zeros((B, H), jnp.float32)
        outs_f, outs_b = [], [None] * T
        for t in range(T):
            hf = _ref_gru_cell(x[t], hf, layer["w_ih_f"], layer["w_hh_f"],
                               layer["b_ih_f"], layer["b_hh_f"], H)
            outs_f.append(hf)
        for t in range(T - 1, -1, -1):
            hb = _ref_gru_cell(x[t], hb, layer["w_ih_b"], layer["w_hh_b"],
                               layer["b_ih_b"], layer["b_hh_b"], H)
            outs_b[t] = hb
        x = jnp.stack([jnp.concatenate([outs_f[t], outs_b[t]], axis=-1)
                       for t in range(T)], axis=0)
    hidden = jnp.tanh(jnp.concatenate([hf, hb], -1) @ params["fc_w"].T
                      + params["fc_b"])[None]
    return x, hidden


# ----------------------------------------------------------------------------
if __name__ == "__main__":
    input_size = 50      # vocab
    embedding_size = 16
    hidden_size = 32
    layers = 2
    seq_len = 8
    batch = 4

    key = jax.random.PRNGKey(0)
    k_params, k_tokens = jax.random.split(key)

    params = make_torch_style_params(k_params, input_size, embedding_size,
                                     hidden_size, layers)
    kparams = prepare_kernel_params(params, hidden_size)
    xt = jax.random.randint(k_tokens, (seq_len, batch), 0, input_size, jnp.int32)

    fwd = jax.jit(encoder_forward)
    hts, hidden = fwd(kparams, xt)
    jax.block_until_ready((hts, hidden))

    assert hts.shape == (seq_len, batch, 2 * hidden_size), hts.shape
    assert hidden.shape == (1, batch, hidden_size), hidden.shape

    # loose tolerance: MXU vs XLA f32 matmuls may use different internal precision
    hts_ref, hid_ref = encoder_reference(params, xt, hidden_size)
    err_hts = float(jnp.max(jnp.abs(hts - hts_ref)))
    err_hid = float(jnp.max(jnp.abs(hidden - hid_ref)))
    assert err_hts < 5e-2 and err_hid < 5e-2, (err_hts, err_hid)

    print("KERNEL_OK")
</pallas_src>

<mosaic_0001>
module attributes {stable_mosaic.version = 11 : i64} {
  func.func @_bigru_layer_kernel(%arg0: i32, %arg1: memref<64x16xf32, #tpu.memory_space<vmem>>, %arg2: memref<1x3x16x32xf32, #tpu.memory_space<vmem>>, %arg3: memref<1x3x32x32xf32, #tpu.memory_space<vmem>>, %arg4: memref<1x3x1x32xf32, #tpu.memory_space<vmem>>, %arg5: memref<1x1x32xf32, #tpu.memory_space<vmem>>, %arg6: memref<64x64xf32, #tpu.memory_space<vmem>>, %arg7: memref<64x32xf32, #tpu.memory_space<vmem>>, %arg8: memref<64x32xf32, #tpu.memory_space<vmem>>, %arg9: memref<64x32xf32, #tpu.memory_space<vmem>>, %arg10: memref<64x32xf32, #tpu.memory_space<vmem>>) attributes {dimension_semantics = [#tpu.dimension_semantics<arbitrary>], iteration_bounds = array<i64: 2>, scalar_prefetch = 0 : i64, scratch_operands = 4 : i64, tpu.core_type = #tpu.core_type<tc>, window_params = [{pipeline_mode = #tpu.pipeline_mode<synchronous>, transform_indices = @transform_0, window_bounds = array<i64: 64, 16>}, {transform_indices = @transform_1, window_bounds = array<i64: 1, 3, 16, 32>}, {transform_indices = @transform_2, window_bounds = array<i64: 1, 3, 32, 32>}, {transform_indices = @transform_3, window_bounds = array<i64: 1, 3, 1, 32>}, {transform_indices = @transform_4, window_bounds = array<i64: 1, 1, 32>}, {pipeline_mode = #tpu.pipeline_mode<synchronous>, transform_indices = @transform_5, window_bounds = array<i64: 64, 64>}]} {
    %c0 = arith.constant 0 : index
    %c0_0 = arith.constant 0 : index
    %0 = vector.load %arg1[%c0, %c0_0] : memref<64x16xf32, #tpu.memory_space<vmem>>, vector<64x16xf32>
    %c0_1 = arith.constant 0 : index
    %c0_2 = arith.constant 0 : index
    %c0_3 = arith.constant 0 : index
    %c0_4 = arith.constant 0 : index
    %1 = vector.load %arg2[%c0_1, %c0_2, %c0_3, %c0_4] : memref<1x3x16x32xf32, #tpu.memory_space<vmem>>, vector<1x1x16x32xf32>
    %2 = vector.shape_cast %1 : vector<1x1x16x32xf32> to vector<16x32xf32>
    %cst = arith.constant dense<0.000000e+00> : vector<64x32xf32>
    %3 = tpu.matmul %0, %2, %cst {dimension_numbers = #tpu.dot_dimension_numbers<[1], [0], [0], [1], [0, 0, 1, 1], [], []>} : vector<64x16xf32>, vector<16x32xf32>, vector<64x32xf32> -> vector<64x32xf32>
    %c0_5 = arith.constant 0 : index
    %c0_6 = arith.constant 0 : index
    %c0_7 = arith.constant 0 : index
    %c0_8 = arith.constant 0 : index
    %4 = vector.load %arg4[%c0_5, %c0_6, %c0_7, %c0_8] : memref<1x3x1x32xf32, #tpu.memory_space<vmem>>, vector<1x1x1x32xf32>
    %5 = vector.shape_cast %4 : vector<1x1x1x32xf32> to vector<1x32xf32>
    %6 = vector.broadcast %5 : vector<1x32xf32> to vector<64x32xf32>
    %7 = arith.addf %3, %6 : vector<64x32xf32>
    %c0_9 = arith.constant 0 : index
    %c0_10 = arith.constant 0 : index
    %8 = vector.load %arg7[%c0_9, %c0_10] : memref<64x32xf32, #tpu.memory_space<vmem>>, vector<64x32xf32>
    tpu.vector_store %arg7[%c0_9, %c0_10], %7 {strides = array<i32>} : memref<64x32xf32, #tpu.memory_space<vmem>>, vector<64x32xf32>,
    %c0_11 = arith.constant 0 : index
    %c1 = arith.constant 1 : index
    %c0_12 = arith.constant 0 : index
    %c0_13 = arith.constant 0 : index
    %9 = vector.load %arg2[%c0_11, %c1, %c0_12, %c0_13] : memref<1x3x16x32xf32, #tpu.memory_space<vmem>>, vector<1x1x16x32xf32>
    %10 = vector.shape_cast %9 : vector<1x1x16x32xf32> to vector<16x32xf32>
    %cst_14 = arith.constant dense<0.000000e+00> : vector<64x32xf32>
    %11 = tpu.matmul %0, %10, %cst_14 {dimension_numbers = #tpu.dot_dimension_numbers<[1], [0], [0], [1], [0, 0, 1, 1], [], []>} : vector<64x16xf32>, vector<16x32xf32>, vector<64x32xf32> -> vector<64x32xf32>
    %c0_15 = arith.constant 0 : index
    %c1_16 = arith.constant 1 : index
    %c0_17 = arith.constant 0 : index
    %c0_18 = arith.constant 0 : index
    %12 = vector.load %arg4[%c0_15, %c1_16, %c0_17, %c0_18] : memref<1x3x1x32xf32, #tpu.memory_space<vmem>>, vector<1x1x1x32xf32>
    %13 = vector.shape_cast %12 : vector<1x1x1x32xf32> to vector<1x32xf32>
    %14 = vector.broadcast %13 : vector<1x32xf32> to vector<64x32xf32>
    %15 = arith.addf %11, %14 : vector<64x32xf32>
    %c0_19 = arith.constant 0 : index
    %c0_20 = arith.constant 0 : index
    %16 = vector.load %arg8[%c0_19, %c0_20] : memref<64x32xf32, #tpu.memory_space<vmem>>, vector<64x32xf32>
    tpu.vector_store %arg8[%c0_19, %c0_20], %15 {strides = array<i32>} : memref<64x32xf32, #tpu.memory_space<vmem>>, vector<64x32xf32>,
    %c0_21 = arith.constant 0 : index
    %c2 = arith.constant 2 : index
    %c0_22 = arith.constant 0 : index
    %c0_23 = arith.constant 0 : index
    %17 = vector.load %arg2[%c0_21, %c2, %c0_22, %c0_23] : memref<1x3x16x32xf32, #tpu.memory_space<vmem>>, vector<1x1x16x32xf32>
    %18 = vector.shape_cast %17 : vector<1x1x16x32xf32> to vector<16x32xf32>
    %cst_24 = arith.constant dense<0.000000e+00> : vector<64x32xf32>
    %19 = tpu.matmul %0, %18, %cst_24 {dimension_numbers = #tpu.dot_dimension_numbers<[1], [0], [0], [1], [0, 0, 1, 1], [], []>} : vector<64x16xf32>, vector<16x32xf32>, vector<64x32xf32> -> vector<64x32xf32>
    %c0_25 = arith.constant 0 : index
    %c2_26 = arith.constant 2 : index
    %c0_27 = arith.constant 0 : index
    %c0_28 = arith.constant 0 : index
    %20 = vector.load %arg4[%c0_25, %c2_26, %c0_27, %c0_28] : memref<1x3x1x32xf32, #tpu.memory_space<vmem>>, vector<1x1x1x32xf32>
    %21 = vector.shape_cast %20 : vector<1x1x1x32xf32> to vector<1x32xf32>
    %22 = vector.broadcast %21 : vector<1x32xf32> to vector<64x32xf32>
    %23 = arith.addf %19, %22 : vector<64x32xf32>
    %c0_29 = arith.constant 0 : index
    %c0_30 = arith.constant 0 : index
    %24 = vector.load %arg9[%c0_29, %c0_30] : memref<64x32xf32, #tpu.memory_space<vmem>>, vector<64x32xf32>
    tpu.vector_store %arg9[%c0_29, %c0_30], %23 {strides = array<i32>} : memref<64x32xf32, #tpu.memory_space<vmem>>, vector<64x32xf32>,
    %c0_31 = arith.constant 0 : index
    %c0_32 = arith.constant 0 : index
    %c0_33 = arith.constant 0 : index
    %c0_34 = arith.constant 0 : index
    %25 = vector.load %arg3[%c0_31, %c0_32, %c0_33, %c0_34] : memref<1x3x32x32xf32, #tpu.memory_space<vmem>>, vector<1x1x32x32xf32>
    %26 = vector.shape_cast %25 : vector<1x1x32x32xf32> to vector<32x32xf32>
    %c0_35 = arith.constant 0 : index
    %c1_36 = arith.constant 1 : index
    %c0_37 = arith.constant 0 : index
    %c0_38 = arith.constant 0 : index
    %27 = vector.load %arg3[%c0_35, %c1_36, %c0_37, %c0_38] : memref<1x3x32x32xf32, #tpu.memory_space<vmem>>, vector<1x1x32x32xf32>
    %28 = vector.shape_cast %27 : vector<1x1x32x32xf32> to vector<32x32xf32>
    %c0_39 = arith.constant 0 : index
    %c2_40 = arith.constant 2 : index
    %c0_41 = arith.constant 0 : index
    %c0_42 = arith.constant 0 : index
    %29 = vector.load %arg3[%c0_39, %c2_40, %c0_41, %c0_42] : memref<1x3x32x32xf32, #tpu.memory_space<vmem>>, vector<1x1x32x32xf32>
    %30 = vector.shape_cast %29 : vector<1x1x32x32xf32> to vector<32x32xf32>
    %c0_43 = arith.constant 0 : index
    %c0_44 = arith.constant 0 : index
    %c0_45 = arith.constant 0 : index
    %31 = vector.load %arg5[%c0_43, %c0_44, %c0_45] : memref<1x1x32xf32, #tpu.memory_space<vmem>>, vector<1x1x32xf32>
    %32 = vector.shape_cast %31 : vector<1x1x32xf32> to vector<1x32xf32>
    %cst_46 = arith.constant 0.000000e+00 : f32
    %33 = vector.broadcast %cst_46 : f32 to vector<8x32xf32>
    %c0_i32 = arith.constant 0 : i32
    %c0_i32_47 = arith.constant 0 : i32
    %34 = arith.cmpi eq, %arg0, %c0_i32_47 : i32
    %c7_i32 = arith.constant 7 : i32
    %35 = arith.subi %c7_i32, %c0_i32 : i32
    %36 = arith.select %34, %c0_i32, %35 : i32
    %c8_i32 = arith.constant 8 : i32
    %37 = arith.muli %36, %c8_i32 : i32
    %38 = tpu.assume_multiple %37, 8 : i32
    %cst_48 = arith.constant dense<0.000000e+00> : vector<8x32xf32>
    %39 = tpu.matmul %33, %26, %cst_48 {dimension_numbers = #tpu.dot_dimension_numbers<[1], [0], [0], [1], [0, 0, 1, 1], [], []>} : vector<8x32xf32>, vector<32x32xf32>, vector<8x32xf32> -> vector<8x32xf32>
    %cst_49 = arith.constant dense<0.000000e+00> : vector<8x32xf32>
    %40 = tpu.matmul %33, %28, %cst_49 {dimension_numbers = #tpu.dot_dimension_numbers<[1], [0], [0], [1], [0, 0, 1, 1], [], []>} : vector<8x32xf32>, vector<32x32xf32>, vector<8x32xf32> -> vector<8x32xf32>
    %cst_50 = arith.constant dense<0.000000e+00> : vector<8x32xf32>
    %41 = tpu.matmul %33, %30, %cst_50 {dimension_numbers = #tpu.dot_dimension_numbers<[1], [0], [0], [1], [0, 0, 1, 1], [], []>} : vector<8x32xf32>, vector<32x32xf32>, vector<8x32xf32> -> vector<8x32xf32>
    %42 = arith.index_cast %38 : i32 to index
    %c0_51 = arith.constant 0 : index
    %43 = vector.load %arg7[%42, %c0_51] : memref<64x32xf32, #tpu.memory_space<vmem>>, vector<8x32xf32>
    %44 = arith.addf %43, %39 : vector<8x32xf32>
    %45 = arith.negf %44 : vector<8x32xf32>
    %46 = math.exp %45 : vector<8x32xf32>
    %cst_52 = arith.constant 1.000000e+00 : f32
    %47 = vector.broadcast %cst_52 : f32 to vector<8x32xf32>
    %48 = arith.addf %47, %46 : vector<8x32xf32>
    %49 = arith.divf %47, %48 : vector<8x32xf32>
    %50 = arith.index_cast %38 : i32 to index
    %c0_53 = arith.constant 0 : index
    %51 = vector.load %arg8[%50, %c0_53] : memref<64x32xf32, #tpu.memory_space<vmem>>, vector<8x32xf32>
    %52 = arith.addf %51, %40 : vector<8x32xf32>
    %53 = arith.negf %52 : vector<8x32xf32>
    %54 = math.exp %53 : vector<8x32xf32>
    %cst_54 = arith.constant 1.000000e+00 : f32
    %55 = vector.broadcast %cst_54 : f32 to vector<8x32xf32>
    %56 = arith.addf %55, %54 : vector<8x32xf32>
    %57 = arith.divf %55, %56 : vector<8x32xf32>
    %58 = arith.index_cast %38 : i32 to index
    %c0_55 = arith.constant 0 : index
    %59 = vector.load %arg9[%58, %c0_55] : memref<64x32xf32, #tpu.memory_space<vmem>>, vector<8x32xf32>
    %60 = vector.broadcast %32 : vector<1x32xf32> to vector<8x32xf32>
    %61 = arith.addf %41, %60 : vector<8x32xf32>
    %62 = arith.mulf %49, %61 : vector<8x32xf32>
    %63 = arith.addf %59, %62 : vector<8x32xf32>
    %64 = math.tanh %63 : vector<8x32xf32>
    %cst_56 = arith.constant 1.000000e+00 : f32
    %65 = vector.broadcast %cst_56 : f32 to vector<8x32xf32>
    %66 = arith.subf %65, %57 : vector<8x32xf32>
    %67 = arith.mulf %66, %64 : vector<8x32xf32>
    %68 = arith.mulf %57, %33 : vector<8x32xf32>
    %69 = arith.addf %67, %68 : vector<8x32xf32>
    %70 = arith.index_cast %38 : i32 to index
    %c0_57 = arith.constant 0 : index
    %71 = vector.load %arg10[%70, %c0_57] : memref<64x32xf32, #tpu.memory_space<vmem>>, vector<8x32xf32>
    tpu.vector_store %arg10[%70, %c0_57], %69 {strides = array<i32>} : memref<64x32xf32, #tpu.memory_space<vmem>>, vector<8x32xf32>,
    %c1_i32 = arith.constant 1 : i32
    %c0_i32_58 = arith.constant 0 : i32
    %72 = arith.cmpi eq, %arg0, %c0_i32_58 : i32
    %c7_i32_59 = arith.constant 7 : i32
    %73 = arith.subi %c7_i32_59, %c1_i32 : i32
    %74 = arith.select %72, %c1_i32, %73 : i32
    %c8_i32_60 = arith.constant 8 : i32
    %75 = arith.muli %74, %c8_i32_60 : i32
    %76 = tpu.assume_multiple %75, 8 : i32
    %cst_61 = arith.constant dense<0.000000e+00> : vector<8x32xf32>
    %77 = tpu.matmul %69, %26, %cst_61 {dimension_numbers = #tpu.dot_dimension_numbers<[1], [0], [0], [1], [0, 0, 1, 1], [], []>} : vector<8x32xf32>, vector<32x32xf32>, vector<8x32xf32> -> vector<8x32xf32>
    %cst_62 = arith.constant dense<0.000000e+00> : vector<8x32xf32>
    %78 = tpu.matmul %69, %28, %cst_62 {dimension_numbers = #tpu.dot_dimension_numbers<[1], [0], [0], [1], [0, 0, 1, 1], [], []>} : vector<8x32xf32>, vector<32x32xf32>, vector<8x32xf32> -> vector<8x32xf32>
    %cst_63 = arith.constant dense<0.000000e+00> : vector<8x32xf32>
    %79 = tpu.matmul %69, %30, %cst_63 {dimension_numbers = #tpu.dot_dimension_numbers<[1], [0], [0], [1], [0, 0, 1, 1], [], []>} : vector<8x32xf32>, vector<32x32xf32>, vector<8x32xf32> -> vector<8x32xf32>
    %80 = arith.index_cast %76 : i32 to index
    %c0_64 = arith.constant 0 : index
    %81 = vector.load %arg7[%80, %c0_64] : memref<64x32xf32, #tpu.memory_space<vmem>>, vector<8x32xf32>
    %82 = arith.addf %81, %77 : vector<8x32xf32>
    %83 = arith.negf %82 : vector<8x32xf32>
    %84 = math.exp %83 : vector<8x32xf32>
    %cst_65 = arith.constant 1.000000e+00 : f32
    %85 = vector.broadcast %cst_65 : f32 to vector<8x32xf32>
    %86 = arith.addf %85, %84 : vector<8x32xf32>
    %87 = arith.divf %85, %86 : vector<8x32xf32>
    %88 = arith.index_cast %76 : i32 to index
    %c0_66 = arith.constant 0 : index
    %89 = vector.load %arg8[%88, %c0_66] : memref<64x32xf32, #tpu.memory_space<vmem>>, vector<8x32xf32>
    %90 = arith.addf %89, %78 : vector<8x32xf32>
    %91 = arith.negf %90 : vector<8x32xf32>
    %92 = math.exp %91 : vector<8x32xf32>
    %cst_67 = arith.constant 1.000000e+00 : f32
    %93 = vector.broadcast %cst_67 : f32 to vector<8x32xf32>
    %94 = arith.addf %93, %92 : vector<8x32xf32>
    %95 = arith.divf %93, %94 : vector<8x32xf32>
    %96 = arith.index_cast %76 : i32 to index
    %c0_68 = arith.constant 0 : index
    %97 = vector.load %arg9[%96, %c0_68] : memref<64x32xf32, #tpu.memory_space<vmem>>, vector<8x32xf32>
    %98 = vector.broadcast %32 : vector<1x32xf32> to vector<8x32xf32>
    %99 = arith.addf %79, %98 : vector<8x32xf32>
    %100 = arith.mulf %87, %99 : vector<8x32xf32>
    %101 = arith.addf %97, %100 : vector<8x32xf32>
    %102 = math.tanh %101 : vector<8x32xf32>
    %cst_69 = arith.constant 1.000000e+00 : f32
    %103 = vector.broadcast %cst_69 : f32 to vector<8x32xf32>
    %104 = arith.subf %103, %95 : vector<8x32xf32>
    %105 = arith.mulf %104, %102 : vector<8x32xf32>
    %106 = arith.mulf %95, %69 : vector<8x32xf32>
    %107 = arith.addf %105, %106 : vector<8x32xf32>
    %108 = arith.index_cast %76 : i32 to index
    %c0_70 = arith.constant 0 : index
    %109 = vector.load %arg10[%108, %c0_70] : memref<64x32xf32, #tpu.memory_space<vmem>>, vector<8x32xf32>
    tpu.vector_store %arg10[%108, %c0_70], %107 {strides = array<i32>} : memref<64x32xf32, #tpu.memory_space<vmem>>, vector<8x32xf32>,
    %c2_i32 = arith.constant 2 : i32
    %c0_i32_71 = arith.constant 0 : i32
    %110 = arith.cmpi eq, %arg0, %c0_i32_71 : i32
    %c7_i32_72 = arith.constant 7 : i32
    %111 = arith.subi %c7_i32_72, %c2_i32 : i32
    %112 = arith.select %110, %c2_i32, %111 : i32
    %c8_i32_73 = arith.constant 8 : i32
    %113 = arith.muli %112, %c8_i32_73 : i32
    %114 = tpu.assume_multiple %113, 8 : i32
    %cst_74 = arith.constant dense<0.000000e+00> : vector<8x32xf32>
    %115 = tpu.matmul %107, %26, %cst_74 {dimension_numbers = #tpu.dot_dimension_numbers<[1], [0], [0], [1], [0, 0, 1, 1], [], []>} : vector<8x32xf32>, vector<32x32xf32>, vector<8x32xf32> -> vector<8x32xf32>
    %cst_75 = arith.constant dense<0.000000e+00> : vector<8x32xf32>
    %116 = tpu.matmul %107, %28, %cst_75 {dimension_numbers = #tpu.dot_dimension_numbers<[1], [0], [0], [1], [0, 0, 1, 1], [], []>} : vector<8x32xf32>, vector<32x32xf32>, vector<8x32xf32> -> vector<8x32xf32>
    %cst_76 = arith.constant dense<0.000000e+00> : vector<8x32xf32>
    %117 = tpu.matmul %107, %30, %cst_76 {dimension_numbers = #tpu.dot_dimension_numbers<[1], [0], [0], [1], [0, 0, 1, 1], [], []>} : vector<8x32xf32>, vector<32x32xf32>, vector<8x32xf32> -> vector<8x32xf32>
    %118 = arith.index_cast %114 : i32 to index
    %c0_77 = arith.constant 0 : index
    %119 = vector.load %arg7[%118, %c0_77] : memref<64x32xf32, #tpu.memory_space<vmem>>, vector<8x32xf32>
    %120 = arith.addf %119, %115 : vector<8x32xf32>
    %121 = arith.negf %120 : vector<8x32xf32>
    %122 = math.exp %121 : vector<8x32xf32>
    %cst_78 = arith.constant 1.000000e+00 : f32
    %123 = vector.broadcast %cst_78 : f32 to vector<8x32xf32>
    %124 = arith.addf %123, %122 : vector<8x32xf32>
    %125 = arith.divf %123, %124 : vector<8x32xf32>
    %126 = arith.index_cast %114 : i32 to index
    %c0_79 = arith.constant 0 : index
    %127 = vector.load %arg8[%126, %c0_79] : memref<64x32xf32, #tpu.memory_space<vmem>>, vector<8x32xf32>
    %128 = arith.addf %127, %116 : vector<8x32xf32>
    %129 = arith.negf %128 : vector<8x32xf32>
    %130 = math.exp %129 : vector<8x32xf32>
    %cst_80 = arith.constant 1.000000e+00 : f32
    %131 = vector.broadcast %cst_80 : f32 to vector<8x32xf32>
    %132 = arith.addf %131, %130 : vector<8x32xf32>
    %133 = arith.divf %131, %132 : vector<8x32xf32>
    %134 = arith.index_cast %114 : i32 to index
    %c0_81 = arith.constant 0 : index
    %135 = vector.load %arg9[%134, %c0_81] : memref<64x32xf32, #tpu.memory_space<vmem>>, vector<8x32xf32>
    %136 = vector.broadcast %32 : vector<1x32xf32> to vector<8x32xf32>
    %137 = arith.addf %117, %136 : vector<8x32xf32>
    %138 = arith.mulf %125, %137 : vector<8x32xf32>
    %139 = arith.addf %135, %138 : vector<8x32xf32>
    %140 = math.tanh %139 : vector<8x32xf32>
    %cst_82 = arith.constant 1.000000e+00 : f32
    %141 = vector.broadcast %cst_82 : f32 to vector<8x32xf32>
    %142 = arith.subf %141, %133 : vector<8x32xf32>
    %143 = arith.mulf %142, %140 : vector<8x32xf32>
    %144 = arith.mulf %133, %107 : vector<8x32xf32>
    %145 = arith.addf %143, %144 : vector<8x32xf32>
    %146 = arith.index_cast %114 : i32 to index
    %c0_83 = arith.constant 0 : index
    %147 = vector.load %arg10[%146, %c0_83] : memref<64x32xf32, #tpu.memory_space<vmem>>, vector<8x32xf32>
    tpu.vector_store %arg10[%146, %c0_83], %145 {strides = array<i32>} : memref<64x32xf32, #tpu.memory_space<vmem>>, vector<8x32xf32>,
    %c3_i32 = arith.constant 3 : i32
    %c0_i32_84 = arith.constant 0 : i32
    %148 = arith.cmpi eq, %arg0, %c0_i32_84 : i32
    %c7_i32_85 = arith.constant 7 : i32
    %149 = arith.subi %c7_i32_85, %c3_i32 : i32
    %150 = arith.select %148, %c3_i32, %149 : i32
    %c8_i32_86 = arith.constant 8 : i32
    %151 = arith.muli %150, %c8_i32_86 : i32
    %152 = tpu.assume_multiple %151, 8 : i32
    %cst_87 = arith.constant dense<0.000000e+00> : vector<8x32xf32>
    %153 = tpu.matmul %145, %26, %cst_87 {dimension_numbers = #tpu.dot_dimension_numbers<[1], [0], [0], [1], [0, 0, 1, 1], [], []>} : vector<8x32xf32>, vector<32x32xf32>, vector<8x32xf32> -> vector<8x32xf32>
    %cst_88 = arith.constant dense<0.000000e+00> : vector<8x32xf32>
    %154 = tpu.matmul %145, %28, %cst_88 {dimension_numbers = #tpu.dot_dimension_numbers<[1], [0], [0], [1], [0, 0, 1, 1], [], []>} : vector<8x32xf32>, vector<32x32xf32>, vector<8x32xf32> -> vector<8x32xf32>
    %cst_89 = arith.constant dense<0.000000e+00> : vector<8x32xf32>
    %155 = tpu.matmul %145, %30, %cst_89 {dimension_numbers = #tpu.dot_dimension_numbers<[1], [0], [0], [1], [0, 0, 1, 1], [], []>} : vector<8x32xf32>, vector<32x32xf32>, vector<8x32xf32> -> vector<8x32xf32>
    %156 = arith.index_cast %152 : i32 to index
    %c0_90 = arith.constant 0 : index
    %157 = vector.load %arg7[%156, %c0_90] : memref<64x32xf32, #tpu.memory_space<vmem>>, vector<8x32xf32>
    %158 = arith.addf %157, %153 : vector<8x32xf32>
    %159 = arith.negf %158 : vector<8x32xf32>
    %160 = math.exp %159 : vector<8x32xf32>
    %cst_91 = arith.constant 1.000000e+00 : f32
    %161 = vector.broadcast %cst_91 : f32 to vector<8x32xf32>
    %162 = arith.addf %161, %160 : vector<8x32xf32>
    %163 = arith.divf %161, %162 : vector<8x32xf32>
    %164 = arith.index_cast %152 : i32 to index
    %c0_92 = arith.constant 0 : index
    %165 = vector.load %arg8[%164, %c0_92] : memref<64x32xf32, #tpu.memory_space<vmem>>, vector<8x32xf32>
    %166 = arith.addf %165, %154 : vector<8x32xf32>
    %167 = arith.negf %166 : vector<8x32xf32>
    %168 = math.exp %167 : vector<8x32xf32>
    %cst_93 = arith.constant 1.000000e+00 : f32
    %169 = vector.broadcast %cst_93 : f32 to vector<8x32xf32>
    %170 = arith.addf %169, %168 : vector<8x32xf32>
    %171 = arith.divf %169, %170 : vector<8x32xf32>
    %172 = arith.index_cast %152 : i32 to index
    %c0_94 = arith.constant 0 : index
    %173 = vector.load %arg9[%172, %c0_94] : memref<64x32xf32, #tpu.memory_space<vmem>>, vector<8x32xf32>
    %174 = vector.broadcast %32 : vector<1x32xf32> to vector<8x32xf32>
    %175 = arith.addf %155, %174 : vector<8x32xf32>
    %176 = arith.mulf %163, %175 : vector<8x32xf32>
    %177 = arith.addf %173, %176 : vector<8x32xf32>
    %178 = math.tanh %177 : vector<8x32xf32>
    %cst_95 = arith.constant 1.000000e+00 : f32
    %179 = vector.broadcast %cst_95 : f32 to vector<8x32xf32>
    %180 = arith.subf %179, %171 : vector<8x32xf32>
    %181 = arith.mulf %180, %178 : vector<8x32xf32>
    %182 = arith.mulf %171, %145 : vector<8x32xf32>
    %183 = arith.addf %181, %182 : vector<8x32xf32>
    %184 = arith.index_cast %152 : i32 to index
    %c0_96 = arith.constant 0 : index
    %185 = vector.load %arg10[%184, %c0_96] : memref<64x32xf32, #tpu.memory_space<vmem>>, vector<8x32xf32>
    tpu.vector_store %arg10[%184, %c0_96], %183 {strides = array<i32>} : memref<64x32xf32, #tpu.memory_space<vmem>>, vector<8x32xf32>,
    %c4_i32 = arith.constant 4 : i32
    %c0_i32_97 = arith.constant 0 : i32
    %186 = arith.cmpi eq, %arg0, %c0_i32_97 : i32
    %c7_i32_98 = arith.constant 7 : i32
    %187 = arith.subi %c7_i32_98, %c4_i32 : i32
    %188 = arith.select %186, %c4_i32, %187 : i32
    %c8_i32_99 = arith.constant 8 : i32
    %189 = arith.muli %188, %c8_i32_99 : i32
    %190 = tpu.assume_multiple %189, 8 : i32
    %cst_100 = arith.constant dense<0.000000e+00> : vector<8x32xf32>
    %191 = tpu.matmul %183, %26, %cst_100 {dimension_numbers = #tpu.dot_dimension_numbers<[1], [0], [0], [1], [0, 0, 1, 1], [], []>} : vector<8x32xf32>, vector<32x32xf32>, vector<8x32xf32> -> vector<8x32xf32>
    %cst_101 = arith.constant dense<0.000000e+00> : vector<8x32xf32>
    %192 = tpu.matmul %183, %28, %cst_101 {dimension_numbers = #tpu.dot_dimension_numbers<[1], [0], [0], [1], [0, 0, 1, 1], [], []>} : vector<8x32xf32>, vector<32x32xf32>, vector<8x32xf32> -> vector<8x32xf32>
    %cst_102 = arith.constant dense<0.000000e+00> : vector<8x32xf32>
    %193 = tpu.matmul %183, %30, %cst_102 {dimension_numbers = #tpu.dot_dimension_numbers<[1], [0], [0], [1], [0, 0, 1, 1], [], []>} : vector<8x32xf32>, vector<32x32xf32>, vector<8x32xf32> -> vector<8x32xf32>
    %194 = arith.index_cast %190 : i32 to index
    %c0_103 = arith.constant 0 : index
    %195 = vector.load %arg7[%194, %c0_103] : memref<64x32xf32, #tpu.memory_space<vmem>>, vector<8x32xf32>
    %196 = arith.addf %195, %191 : vector<8x32xf32>
    %197 = arith.negf %196 : vector<8x32xf32>
    %198 = math.exp %197 : vector<8x32xf32>
    %cst_104 = arith.constant 1.000000e+00 : f32
    %199 = vector.broadcast %cst_104 : f32 to vector<8x32xf32>
    %200 = arith.addf %199, %198 : vector<8x32xf32>
    %201 = arith.divf %199, %200 : vector<8x32xf32>
    %202 = arith.index_cast %190 : i32 to index
    %c0_105 = arith.constant 0 : index
    %203 = vector.load %arg8[%202, %c0_105] : memref<64x32xf32, #tpu.memory_space<vmem>>, vector<8x32xf32>
    %204 = arith.addf %203, %192 : vector<8x32xf32>
    %205 = arith.negf %204 : vector<8x32xf32>
    %206 = math.exp %205 : vector<8x32xf32>
    %cst_106 = arith.constant 1.000000e+00 : f32
    %207 = vector.broadcast %cst_106 : f32 to vector<8x32xf32>
    %208 = arith.addf %207, %206 : vector<8x32xf32>
    %209 = arith.divf %207, %208 : vector<8x32xf32>
    %210 = arith.index_cast %190 : i32 to index
    %c0_107 = arith.constant 0 : index
    %211 = vector.load %arg9[%210, %c0_107] : memref<64x32xf32, #tpu.memory_space<vmem>>, vector<8x32xf32>
    %212 = vector.broadcast %32 : vector<1x32xf32> to vector<8x32xf32>
    %213 = arith.addf %193, %212 : vector<8x32xf32>
    %214 = arith.mulf %201, %213 : vector<8x32xf32>
    %215 = arith.addf %211, %214 : vector<8x32xf32>
    %216 = math.tanh %215 : vector<8x32xf32>
    %cst_108 = arith.constant 1.000000e+00 : f32
    %217 = vector.broadcast %cst_108 : f32 to vector<8x32xf32>
    %218 = arith.subf %217, %209 : vector<8x32xf32>
    %219 = arith.mulf %218, %216 : vector<8x32xf32>
    %220 = arith.mulf %209, %183 : vector<8x32xf32>
    %221 = arith.addf %219, %220 : vector<8x32xf32>
    %222 = arith.index_cast %190 : i32 to index
    %c0_109 = arith.constant 0 : index
    %223 = vector.load %arg10[%222, %c0_109] : memref<64x32xf32, #tpu.memory_space<vmem>>, vector<8x32xf32>
    tpu.vector_store %arg10[%222, %c0_109], %221 {strides = array<i32>} : memref<64x32xf32, #tpu.memory_space<vmem>>, vector<8x32xf32>,
    %c5_i32 = arith.constant 5 : i32
    %c0_i32_110 = arith.constant 0 : i32
    %224 = arith.cmpi eq, %arg0, %c0_i32_110 : i32
    %c7_i32_111 = arith.constant 7 : i32
    %225 = arith.subi %c7_i32_111, %c5_i32 : i32
    %226 = arith.select %224, %c5_i32, %225 : i32
    %c8_i32_112 = arith.constant 8 : i32
    %227 = arith.muli %226, %c8_i32_112 : i32
    %228 = tpu.assume_multiple %227, 8 : i32
    %cst_113 = arith.constant dense<0.000000e+00> : vector<8x32xf32>
    %229 = tpu.matmul %221, %26, %cst_113 {dimension_numbers = #tpu.dot_dimension_numbers<[1], [0], [0], [1], [0, 0, 1, 1], [], []>} : vector<8x32xf32>, vector<32x32xf32>, vector<8x32xf32> -> vector<8x32xf32>
    %cst_114 = arith.constant dense<0.000000e+00> : vector<8x32xf32>
    %230 = tpu.matmul %221, %28, %cst_114 {dimension_numbers = #tpu.dot_dimension_numbers<[1], [0], [0], [1], [0, 0, 1, 1], [], []>} : vector<8x32xf32>, vector<32x32xf32>, vector<8x32xf32> -> vector<8x32xf32>
    %cst_115 = arith.constant dense<0.000000e+00> : vector<8x32xf32>
    %231 = tpu.matmul %221, %30, %cst_115 {dimension_numbers = #tpu.dot_dimension_numbers<[1], [0], [0], [1], [0, 0, 1, 1], [], []>} : vector<8x32xf32>, vector<32x32xf32>, vector<8x32xf32> -> vector<8x32xf32>
    %232 = arith.index_cast %228 : i32 to index
    %c0_116 = arith.constant 0 : index
    %233 = vector.load %arg7[%232, %c0_116] : memref<64x32xf32, #tpu.memory_space<vmem>>, vector<8x32xf32>
    %234 = arith.addf %233, %229 : vector<8x32xf32>
    %235 = arith.negf %234 : vector<8x32xf32>
    %236 = math.exp %235 : vector<8x32xf32>
    %cst_117 = arith.constant 1.000000e+00 : f32
    %237 = vector.broadcast %cst_117 : f32 to vector<8x32xf32>
    %238 = arith.addf %237, %236 : vector<8x32xf32>
    %239 = arith.divf %237, %238 : vector<8x32xf32>
    %240 = arith.index_cast %228 : i32 to index
    %c0_118 = arith.constant 0 : index
    %241 = vector.load %arg8[%240, %c0_118] : memref<64x32xf32, #tpu.memory_space<vmem>>, vector<8x32xf32>
    %242 = arith.addf %241, %230 : vector<8x32xf32>
    %243 = arith.negf %242 : vector<8x32xf32>
    %244 = math.exp %243 : vector<8x32xf32>
    %cst_119 = arith.constant 1.000000e+00 : f32
    %245 = vector.broadcast %cst_119 : f32 to vector<8x32xf32>
    %246 = arith.addf %245, %244 : vector<8x32xf32>
    %247 = arith.divf %245, %246 : vector<8x32xf32>
    %248 = arith.index_cast %228 : i32 to index
    %c0_120 = arith.constant 0 : index
    %249 = vector.load %arg9[%248, %c0_120] : memref<64x32xf32, #tpu.memory_space<vmem>>, vector<8x32xf32>
    %250 = vector.broadcast %32 : vector<1x32xf32> to vector<8x32xf32>
    %251 = arith.addf %231, %250 : vector<8x32xf32>
    %252 = arith.mulf %239, %251 : vector<8x32xf32>
    %253 = arith.addf %249, %252 : vector<8x32xf32>
    %254 = math.tanh %253 : vector<8x32xf32>
    %cst_121 = arith.constant 1.000000e+00 : f32
    %255 = vector.broadcast %cst_121 : f32 to vector<8x32xf32>
    %256 = arith.subf %255, %247 : vector<8x32xf32>
    %257 = arith.mulf %256, %254 : vector<8x32xf32>
    %258 = arith.mulf %247, %221 : vector<8x32xf32>
    %259 = arith.addf %257, %258 : vector<8x32xf32>
    %260 = arith.index_cast %228 : i32 to index
    %c0_122 = arith.constant 0 : index
    %261 = vector.load %arg10[%260, %c0_122] : memref<64x32xf32, #tpu.memory_space<vmem>>, vector<8x32xf32>
    tpu.vector_store %arg10[%260, %c0_122], %259 {strides = array<i32>} : memref<64x32xf32, #tpu.memory_space<vmem>>, vector<8x32xf32>,
    %c6_i32 = arith.constant 6 : i32
    %c0_i32_123 = arith.constant 0 : i32
    %262 = arith.cmpi eq, %arg0, %c0_i32_123 : i32
    %c7_i32_124 = arith.constant 7 : i32
    %263 = arith.subi %c7_i32_124, %c6_i32 : i32
    %264 = arith.select %262, %c6_i32, %263 : i32
    %c8_i32_125 = arith.constant 8 : i32
    %265 = arith.muli %264, %c8_i32_125 : i32
    %266 = tpu.assume_multiple %265, 8 : i32
    %cst_126 = arith.constant dense<0.000000e+00> : vector<8x32xf32>
    %267 = tpu.matmul %259, %26, %cst_126 {dimension_numbers = #tpu.dot_dimension_numbers<[1], [0], [0], [1], [0, 0, 1, 1], [], []>} : vector<8x32xf32>, vector<32x32xf32>, vector<8x32xf32> -> vector<8x32xf32>
    %cst_127 = arith.constant dense<0.000000e+00> : vector<8x32xf32>
    %268 = tpu.matmul %259, %28, %cst_127 {dimension_numbers = #tpu.dot_dimension_numbers<[1], [0], [0], [1], [0, 0, 1, 1], [], []>} : vector<8x32xf32>, vector<32x32xf32>, vector<8x32xf32> -> vector<8x32xf32>
    %cst_128 = arith.constant dense<0.000000e+00> : vector<8x32xf32>
    %269 = tpu.matmul %259, %30, %cst_128 {dimension_numbers = #tpu.dot_dimension_numbers<[1], [0], [0], [1], [0, 0, 1, 1], [], []>} : vector<8x32xf32>, vector<32x32xf32>, vector<8x32xf32> -> vector<8x32xf32>
    %270 = arith.index_cast %266 : i32 to index
    %c0_129 = arith.constant 0 : index
    %271 = vector.load %arg7[%270, %c0_129] : memref<64x32xf32, #tpu.memory_space<vmem>>, vector<8x32xf32>
    %272 = arith.addf %271, %267 : vector<8x32xf32>
    %273 = arith.negf %272 : vector<8x32xf32>
    %274 = math.exp %273 : vector<8x32xf32>
    %cst_130 = arith.constant 1.000000e+00 : f32
    %275 = vector.broadcast %cst_130 : f32 to vector<8x32xf32>
    %276 = arith.addf %275, %274 : vector<8x32xf32>
    %277 = arith.divf %275, %276 : vector<8x32xf32>
    %278 = arith.index_cast %266 : i32 to index
    %c0_131 = arith.constant 0 : index
    %279 = vector.load %arg8[%278, %c0_131] : memref<64x32xf32, #tpu.memory_space<vmem>>, vector<8x32xf32>
    %280 = arith.addf %279, %268 : vector<8x32xf32>
    %281 = arith.negf %280 : vector<8x32xf32>
    %282 = math.exp %281 : vector<8x32xf32>
    %cst_132 = arith.constant 1.000000e+00 : f32
    %283 = vector.broadcast %cst_132 : f32 to vector<8x32xf32>
    %284 = arith.addf %283, %282 : vector<8x32xf32>
    %285 = arith.divf %283, %284 : vector<8x32xf32>
    %286 = arith.index_cast %266 : i32 to index
    %c0_133 = arith.constant 0 : index
    %287 = vector.load %arg9[%286, %c0_133] : memref<64x32xf32, #tpu.memory_space<vmem>>, vector<8x32xf32>
    %288 = vector.broadcast %32 : vector<1x32xf32> to vector<8x32xf32>
    %289 = arith.addf %269, %288 : vector<8x32xf32>
    %290 = arith.mulf %277, %289 : vector<8x32xf32>
    %291 = arith.addf %287, %290 : vector<8x32xf32>
    %292 = math.tanh %291 : vector<8x32xf32>
    %cst_134 = arith.constant 1.000000e+00 : f32
    %293 = vector.broadcast %cst_134 : f32 to vector<8x32xf32>
    %294 = arith.subf %293, %285 : vector<8x32xf32>
    %295 = arith.mulf %294, %292 : vector<8x32xf32>
    %296 = arith.mulf %285, %259 : vector<8x32xf32>
    %297 = arith.addf %295, %296 : vector<8x32xf32>
    %298 = arith.index_cast %266 : i32 to index
    %c0_135 = arith.constant 0 : index
    %299 = vector.load %arg10[%298, %c0_135] : memref<64x32xf32, #tpu.memory_space<vmem>>, vector<8x32xf32>
    tpu.vector_store %arg10[%298, %c0_135], %297 {strides = array<i32>} : memref<64x32xf32, #tpu.memory_space<vmem>>, vector<8x32xf32>,
    %c7_i32_136 = arith.constant 7 : i32
    %c0_i32_137 = arith.constant 0 : i32
    %300 = arith.cmpi eq, %arg0, %c0_i32_137 : i32
    %c7_i32_138 = arith.constant 7 : i32
    %301 = arith.subi %c7_i32_138, %c7_i32_136 : i32
    %302 = arith.select %300, %c7_i32_136, %301 : i32
    %c8_i32_139 = arith.constant 8 : i32
    %303 = arith.muli %302, %c8_i32_139 : i32
    %304 = tpu.assume_multiple %303, 8 : i32
    %cst_140 = arith.constant dense<0.000000e+00> : vector<8x32xf32>
    %305 = tpu.matmul %297, %26, %cst_140 {dimension_numbers = #tpu.dot_dimension_numbers<[1], [0], [0], [1], [0, 0, 1, 1], [], []>} : vector<8x32xf32>, vector<32x32xf32>, vector<8x32xf32> -> vector<8x32xf32>
    %cst_141 = arith.constant dense<0.000000e+00> : vector<8x32xf32>
    %306 = tpu.matmul %297, %28, %cst_141 {dimension_numbers = #tpu.dot_dimension_numbers<[1], [0], [0], [1], [0, 0, 1, 1], [], []>} : vector<8x32xf32>, vector<32x32xf32>, vector<8x32xf32> -> vector<8x32xf32>
    %cst_142 = arith.constant dense<0.000000e+00> : vector<8x32xf32>
    %307 = tpu.matmul %297, %30, %cst_142 {dimension_numbers = #tpu.dot_dimension_numbers<[1], [0], [0], [1], [0, 0, 1, 1], [], []>} : vector<8x32xf32>, vector<32x32xf32>, vector<8x32xf32> -> vector<8x32xf32>
    %308 = arith.index_cast %304 : i32 to index
    %c0_143 = arith.constant 0 : index
    %309 = vector.load %arg7[%308, %c0_143] : memref<64x32xf32, #tpu.memory_space<vmem>>, vector<8x32xf32>
    %310 = arith.addf %309, %305 : vector<8x32xf32>
    %311 = arith.negf %310 : vector<8x32xf32>
    %312 = math.exp %311 : vector<8x32xf32>
    %cst_144 = arith.constant 1.000000e+00 : f32
    %313 = vector.broadcast %cst_144 : f32 to vector<8x32xf32>
    %314 = arith.addf %313, %312 : vector<8x32xf32>
    %315 = arith.divf %313, %314 : vector<8x32xf32>
    %316 = arith.index_cast %304 : i32 to index
    %c0_145 = arith.constant 0 : index
    %317 = vector.load %arg8[%316, %c0_145] : memref<64x32xf32, #tpu.memory_space<vmem>>, vector<8x32xf32>
    %318 = arith.addf %317, %306 : vector<8x32xf32>
    %319 = arith.negf %318 : vector<8x32xf32>
    %320 = math.exp %319 : vector<8x32xf32>
    %cst_146 = arith.constant 1.000000e+00 : f32
    %321 = vector.broadcast %cst_146 : f32 to vector<8x32xf32>
    %322 = arith.addf %321, %320 : vector<8x32xf32>
    %323 = arith.divf %321, %322 : vector<8x32xf32>
    %324 = arith.index_cast %304 : i32 to index
    %c0_147 = arith.constant 0 : index
    %325 = vector.load %arg9[%324, %c0_147] : memref<64x32xf32, #tpu.memory_space<vmem>>, vector<8x32xf32>
    %326 = vector.broadcast %32 : vector<1x32xf32> to vector<8x32xf32>
    %327 = arith.addf %307, %326 : vector<8x32xf32>
    %328 = arith.mulf %315, %327 : vector<8x32xf32>
    %329 = arith.addf %325, %328 : vector<8x32xf32>
    %330 = math.tanh %329 : vector<8x32xf32>
    %cst_148 = arith.constant 1.000000e+00 : f32
    %331 = vector.broadcast %cst_148 : f32 to vector<8x32xf32>
    %332 = arith.subf %331, %323 : vector<8x32xf32>
    %333 = arith.mulf %332, %330 : vector<8x32xf32>
    %334 = arith.mulf %323, %297 : vector<8x32xf32>
    %335 = arith.addf %333, %334 : vector<8x32xf32>
    %336 = arith.index_cast %304 : i32 to index
    %c0_149 = arith.constant 0 : index
    %337 = vector.load %arg10[%336, %c0_149] : memref<64x32xf32, #tpu.memory_space<vmem>>, vector<8x32xf32>
    tpu.vector_store %arg10[%336, %c0_149], %335 {strides = array<i32>} : memref<64x32xf32, #tpu.memory_space<vmem>>, vector<8x32xf32>,
    %c8_i32_150 = arith.constant 8 : i32
    %c0_i32_151 = arith.constant 0 : i32
    %338 = arith.cmpi eq, %arg0, %c0_i32_151 : i32
    %339 = arith.extui %338 : i1 to i32
    %c0_i32_152 = arith.constant 0 : i32
    %340 = arith.cmpi ne, %339, %c0_i32_152 : i32
    scf.if %340 {
      %c0_155 = arith.constant 0 : index
      %c0_156 = arith.constant 0 : index
      %344 = vector.load %arg10[%c0_155, %c0_156] : memref<64x32xf32, #tpu.memory_space<vmem>>, vector<64x32xf32>
      %c0_157 = arith.constant 0 : index
      %c0_158 = arith.constant 0 : index
      %345 = vector.load %arg6[%c0_157, %c0_158] : memref<64x64xf32, #tpu.memory_space<vmem>>, vector<64x32xf32>
      tpu.vector_store %arg6[%c0_157, %c0_158], %344 {strides = array<i32>} : memref<64x64xf32, #tpu.memory_space<vmem>>, vector<64x32xf32>,
    } else {
    }
    %c1_i32_153 = arith.constant 1 : i32
    %341 = arith.cmpi eq, %arg0, %c1_i32_153 : i32
    %342 = arith.extui %341 : i1 to i32
    %c0_i32_154 = arith.constant 0 : i32
    %343 = arith.cmpi ne, %342, %c0_i32_154 : i32
    scf.if %343 {
      %c0_155 = arith.constant 0 : index
      %c0_156 = arith.constant 0 : index
      %344 = vector.load %arg10[%c0_155, %c0_156] : memref<64x32xf32, #tpu.memory_space<vmem>>, vector<64x32xf32>
      %c0_157 = arith.constant 0 : index
      %c32 = arith.constant 32 : index
      %345 = vector.load %arg6[%c0_157, %c32] : memref<64x64xf32, #tpu.memory_space<vmem>>, vector<64x32xf32>
      tpu.vector_store %arg6[%c0_157, %c32], %344 {strides = array<i32>} : memref<64x64xf32, #tpu.memory_space<vmem>>, vector<64x32xf32>,
    } else {
    }
    return
  }
  func.func @transform_0(%arg0: i32) -> (i32, i32) {
    %c0_i32 = arith.constant 0 : i32
    %c0_i32_0 = arith.constant 0 : i32
    %c0_i32_1 = arith.constant 0 : i32
    return %c0_i32, %c0_i32_0 : i32, i32
  }
  func.func @transform_1(%arg0: i32) -> (i32, i32, i32, i32) {
    %c0_i32 = arith.constant 0 : i32
    %c0_i32_0 = arith.constant 0 : i32
    %c0_i32_1 = arith.constant 0 : i32
    %c0_i32_2 = arith.constant 0 : i32
    return %arg0, %c0_i32, %c0_i32_0, %c0_i32_1 : i32, i32, i32, i32
  }
  func.func @transform_2(%arg0: i32) -> (i32, i32, i32, i32) {
    %c0_i32 = arith.constant 0 : i32
    %c0_i32_0 = arith.constant 0 : i32
    %c0_i32_1 = arith.constant 0 : i32
    %c0_i32_2 = arith.constant 0 : i32
    return %arg0, %c0_i32, %c0_i32_0, %c0_i32_1 : i32, i32, i32, i32
  }
  func.func @transform_3(%arg0: i32) -> (i32, i32, i32, i32) {
    %c0_i32 = arith.constant 0 : i32
    %c0_i32_0 = arith.constant 0 : i32
    %c0_i32_1 = arith.constant 0 : i32
    %c0_i32_2 = arith.constant 0 : i32
    return %arg0, %c0_i32, %c0_i32_0, %c0_i32_1 : i32, i32, i32, i32
  }
  func.func @transform_4(%arg0: i32) -> (i32, i32, i32) {
    %c0_i32 = arith.constant 0 : i32
    %c0_i32_0 = arith.constant 0 : i32
    %c0_i32_1 = arith.constant 0 : i32
    return %arg0, %c0_i32, %c0_i32_0 : i32, i32, i32
  }
  func.func @transform_5(%arg0: i32) -> (i32, i32) {
    %c0_i32 = arith.constant 0 : i32
    %c0_i32_0 = arith.constant 0 : i32
    %c0_i32_1 = arith.constant 0 : i32
    return %c0_i32, %c0_i32_0 : i32, i32
  }
}

module attributes {stable_mosaic.version = 11 : i64} {
  func.func @_bigru_layer_kernel(%arg0: i32, %arg1: memref<64x64xf32, #tpu.memory_space<vmem>>, %arg2: memref<1x3x64x32xf32, #tpu.memory_space<vmem>>, %arg3: memref<1x3x32x32xf32, #tpu.memory_space<vmem>>, %arg4: memref<1x3x1x32xf32, #tpu.memory_space<vmem>>, %arg5: memref<1x1x32xf32, #tpu.memory_space<vmem>>, %arg6: memref<2x32x32xf32, #tpu.memory_space<vmem>>, %arg7: memref<1x32xf32, #tpu.memory_space<vmem>>, %arg8: memref<64x64xf32, #tpu.memory_space<vmem>>, %arg9: memref<8x32xf32, #tpu.memory_space<vmem>>, %arg10: memref<64x32xf32, #tpu.memory_space<vmem>>, %arg11: memref<64x32xf32, #tpu.memory_space<vmem>>, %arg12: memref<64x32xf32, #tpu.memory_space<vmem>>, %arg13: memref<64x32xf32, #tpu.memory_space<vmem>>, %arg14: memref<8x32xf32, #tpu.memory_space<vmem>>) attributes {dimension_semantics = [#tpu.dimension_semantics<arbitrary>], iteration_bounds = array<i64: 2>, scalar_prefetch = 0 : i64, scratch_operands = 5 : i64, tpu.core_type = #tpu.core_type<tc>, window_params = [{pipeline_mode = #tpu.pipeline_mode<synchronous>, transform_indices = @transform_0, window_bounds = array<i64: 64, 64>}, {transform_indices = @transform_1, window_bounds = array<i64: 1, 3, 64, 32>}, {transform_indices = @transform_2, window_bounds = array<i64: 1, 3, 32, 32>}, {transform_indices = @transform_3, window_bounds = array<i64: 1, 3, 1, 32>}, {transform_indices = @transform_4, window_bounds = array<i64: 1, 1, 32>}, {pipeline_mode = #tpu.pipeline_mode<synchronous>, transform_indices = @transform_5, window_bounds = array<i64: 2, 32, 32>}, {pipeline_mode = #tpu.pipeline_mode<synchronous>, transform_indices = @transform_6, window_bounds = array<i64: 1, 32>}, {pipeline_mode = #tpu.pipeline_mode<synchronous>, transform_indices = @transform_7, window_bounds = array<i64: 64, 64>}, {pipeline_mode = #tpu.pipeline_mode<synchronous>, transform_indices = @transform_8, window_bounds = array<i64: 8, 32>}]} {
    %c0 = arith.constant 0 : index
    %c0_0 = arith.constant 0 : index
    %0 = vector.load %arg1[%c0, %c0_0] : memref<64x64xf32, #tpu.memory_space<vmem>>, vector<64x64xf32>
    %c0_1 = arith.constant 0 : index
    %c0_2 = arith.constant 0 : index
    %c0_3 = arith.constant 0 : index
    %c0_4 = arith.constant 0 : index
    %1 = vector.load %arg2[%c0_1, %c0_2, %c0_3, %c0_4] : memref<1x3x64x32xf32, #tpu.memory_space<vmem>>, vector<1x1x64x32xf32>
    %2 = vector.shape_cast %1 : vector<1x1x64x32xf32> to vector<64x32xf32>
    %cst = arith.constant dense<0.000000e+00> : vector<64x32xf32>
    %3 = tpu.matmul %0, %2, %cst {dimension_numbers = #tpu.dot_dimension_numbers<[1], [0], [0], [1], [0, 0, 1, 1], [], []>} : vector<64x64xf32>, vector<64x32xf32>, vector<64x32xf32> -> vector<64x32xf32>
    %c0_5 = arith.constant 0 : index
    %c0_6 = arith.constant 0 : index
    %c0_7 = arith.constant 0 : index
    %c0_8 = arith.constant 0 : index
    %4 = vector.load %arg4[%c0_5, %c0_6, %c0_7, %c0_8] : memref<1x3x1x32xf32, #tpu.memory_space<vmem>>, vector<1x1x1x32xf32>
    %5 = vector.shape_cast %4 : vector<1x1x1x32xf32> to vector<1x32xf32>
    %6 = vector.broadcast %5 : vector<1x32xf32> to vector<64x32xf32>
    %7 = arith.addf %3, %6 : vector<64x32xf32>
    %c0_9 = arith.constant 0 : index
    %c0_10 = arith.constant 0 : index
    %8 = vector.load %arg10[%c0_9, %c0_10] : memref<64x32xf32, #tpu.memory_space<vmem>>, vector<64x32xf32>
    tpu.vector_store %arg10[%c0_9, %c0_10], %7 {strides = array<i32>} : memref<64x32xf32, #tpu.memory_space<vmem>>, vector<64x32xf32>,
    %c0_11 = arith.constant 0 : index
    %c1 = arith.constant 1 : index
    %c0_12 = arith.constant 0 : index
    %c0_13 = arith.constant 0 : index
    %9 = vector.load %arg2[%c0_11, %c1, %c0_12, %c0_13] : memref<1x3x64x32xf32, #tpu.memory_space<vmem>>, vector<1x1x64x32xf32>
    %10 = vector.shape_cast %9 : vector<1x1x64x32xf32> to vector<64x32xf32>
    %cst_14 = arith.constant dense<0.000000e+00> : vector<64x32xf32>
    %11 = tpu.matmul %0, %10, %cst_14 {dimension_numbers = #tpu.dot_dimension_numbers<[1], [0], [0], [1], [0, 0, 1, 1], [], []>} : vector<64x64xf32>, vector<64x32xf32>, vector<64x32xf32> -> vector<64x32xf32>
    %c0_15 = arith.constant 0 : index
    %c1_16 = arith.constant 1 : index
    %c0_17 = arith.constant 0 : index
    %c0_18 = arith.constant 0 : index
    %12 = vector.load %arg4[%c0_15, %c1_16, %c0_17, %c0_18] : memref<1x3x1x32xf32, #tpu.memory_space<vmem>>, vector<1x1x1x32xf32>
    %13 = vector.shape_cast %12 : vector<1x1x1x32xf32> to vector<1x32xf32>
    %14 = vector.broadcast %13 : vector<1x32xf32> to vector<64x32xf32>
    %15 = arith.addf %11, %14 : vector<64x32xf32>
    %c0_19 = arith.constant 0 : index
    %c0_20 = arith.constant 0 : index
    %16 = vector.load %arg11[%c0_19, %c0_20] : memref<64x32xf32, #tpu.memory_space<vmem>>, vector<64x32xf32>
    tpu.vector_store %arg11[%c0_19, %c0_20], %15 {strides = array<i32>} : memref<64x32xf32, #tpu.memory_space<vmem>>, vector<64x32xf32>,
    %c0_21 = arith.constant 0 : index
    %c2 = arith.constant 2 : index
    %c0_22 = arith.constant 0 : index
    %c0_23 = arith.constant 0 : index
    %17 = vector.load %arg2[%c0_21, %c2, %c0_22, %c0_23] : memref<1x3x64x32xf32, #tpu.memory_space<vmem>>, vector<1x1x64x32xf32>
    %18 = vector.shape_cast %17 : vector<1x1x64x32xf32> to vector<64x32xf32>
    %cst_24 = arith.constant dense<0.000000e+00> : vector<64x32xf32>
    %19 = tpu.matmul %0, %18, %cst_24 {dimension_numbers = #tpu.dot_dimension_numbers<[1], [0], [0], [1], [0, 0, 1, 1], [], []>} : vector<64x64xf32>, vector<64x32xf32>, vector<64x32xf32> -> vector<64x32xf32>
    %c0_25 = arith.constant 0 : index
    %c2_26 = arith.constant 2 : index
    %c0_27 = arith.constant 0 : index
    %c0_28 = arith.constant 0 : index
    %20 = vector.load %arg4[%c0_25, %c2_26, %c0_27, %c0_28] : memref<1x3x1x32xf32, #tpu.memory_space<vmem>>, vector<1x1x1x32xf32>
    %21 = vector.shape_cast %20 : vector<1x1x1x32xf32> to vector<1x32xf32>
    %22 = vector.broadcast %21 : vector<1x32xf32> to vector<64x32xf32>
    %23 = arith.addf %19, %22 : vector<64x32xf32>
    %c0_29 = arith.constant 0 : index
    %c0_30 = arith.constant 0 : index
    %24 = vector.load %arg12[%c0_29, %c0_30] : memref<64x32xf32, #tpu.memory_space<vmem>>, vector<64x32xf32>
    tpu.vector_store %arg12[%c0_29, %c0_30], %23 {strides = array<i32>} : memref<64x32xf32, #tpu.memory_space<vmem>>, vector<64x32xf32>,
    %c0_31 = arith.constant 0 : index
    %c0_32 = arith.constant 0 : index
    %c0_33 = arith.constant 0 : index
    %c0_34 = arith.constant 0 : index
    %25 = vector.load %arg3[%c0_31, %c0_32, %c0_33, %c0_34] : memref<1x3x32x32xf32, #tpu.memory_space<vmem>>, vector<1x1x32x32xf32>
    %26 = vector.shape_cast %25 : vector<1x1x32x32xf32> to vector<32x32xf32>
    %c0_35 = arith.constant 0 : index
    %c1_36 = arith.constant 1 : index
    %c0_37 = arith.constant 0 : index
    %c0_38 = arith.constant 0 : index
    %27 = vector.load %arg3[%c0_35, %c1_36, %c0_37, %c0_38] : memref<1x3x32x32xf32, #tpu.memory_space<vmem>>, vector<1x1x32x32xf32>
    %28 = vector.shape_cast %27 : vector<1x1x32x32xf32> to vector<32x32xf32>
    %c0_39 = arith.constant 0 : index
    %c2_40 = arith.constant 2 : index
    %c0_41 = arith.constant 0 : index
    %c0_42 = arith.constant 0 : index
    %29 = vector.load %arg3[%c0_39, %c2_40, %c0_41, %c0_42] : memref<1x3x32x32xf32, #tpu.memory_space<vmem>>, vector<1x1x32x32xf32>
    %30 = vector.shape_cast %29 : vector<1x1x32x32xf32> to vector<32x32xf32>
    %c0_43 = arith.constant 0 : index
    %c0_44 = arith.constant 0 : index
    %c0_45 = arith.constant 0 : index
    %31 = vector.load %arg5[%c0_43, %c0_44, %c0_45] : memref<1x1x32xf32, #tpu.memory_space<vmem>>, vector<1x1x32xf32>
    %32 = vector.shape_cast %31 : vector<1x1x32xf32> to vector<1x32xf32>
    %cst_46 = arith.constant 0.000000e+00 : f32
    %33 = vector.broadcast %cst_46 : f32 to vector<8x32xf32>
    %c0_i32 = arith.constant 0 : i32
    %c0_i32_47 = arith.constant 0 : i32
    %34 = arith.cmpi eq, %arg0, %c0_i32_47 : i32
    %c7_i32 = arith.constant 7 : i32
    %35 = arith.subi %c7_i32, %c0_i32 : i32
    %36 = arith.select %34, %c0_i32, %35 : i32
    %c8_i32 = arith.constant 8 : i32
    %37 = arith.muli %36, %c8_i32 : i32
    %38 = tpu.assume_multiple %37, 8 : i32
    %cst_48 = arith.constant dense<0.000000e+00> : vector<8x32xf32>
    %39 = tpu.matmul %33, %26, %cst_48 {dimension_numbers = #tpu.dot_dimension_numbers<[1], [0], [0], [1], [0, 0, 1, 1], [], []>} : vector<8x32xf32>, vector<32x32xf32>, vector<8x32xf32> -> vector<8x32xf32>
    %cst_49 = arith.constant dense<0.000000e+00> : vector<8x32xf32>
    %40 = tpu.matmul %33, %28, %cst_49 {dimension_numbers = #tpu.dot_dimension_numbers<[1], [0], [0], [1], [0, 0, 1, 1], [], []>} : vector<8x32xf32>, vector<32x32xf32>, vector<8x32xf32> -> vector<8x32xf32>
    %cst_50 = arith.constant dense<0.000000e+00> : vector<8x32xf32>
    %41 = tpu.matmul %33, %30, %cst_50 {dimension_numbers = #tpu.dot_dimension_numbers<[1], [0], [0], [1], [0, 0, 1, 1], [], []>} : vector<8x32xf32>, vector<32x32xf32>, vector<8x32xf32> -> vector<8x32xf32>
    %42 = arith.index_cast %38 : i32 to index
    %c0_51 = arith.constant 0 : index
    %43 = vector.load %arg10[%42, %c0_51] : memref<64x32xf32, #tpu.memory_space<vmem>>, vector<8x32xf32>
    %44 = arith.addf %43, %39 : vector<8x32xf32>
    %45 = arith.negf %44 : vector<8x32xf32>
    %46 = math.exp %45 : vector<8x32xf32>
    %cst_52 = arith.constant 1.000000e+00 : f32
    %47 = vector.broadcast %cst_52 : f32 to vector<8x32xf32>
    %48 = arith.addf %47, %46 : vector<8x32xf32>
    %49 = arith.divf %47, %48 : vector<8x32xf32>
    %50 = arith.index_cast %38 : i32 to index
    %c0_53 = arith.constant 0 : index
    %51 = vector.load %arg11[%50, %c0_53] : memref<64x32xf32, #tpu.memory_space<vmem>>, vector<8x32xf32>
    %52 = arith.addf %51, %40 : vector<8x32xf32>
    %53 = arith.negf %52 : vector<8x32xf32>
    %54 = math.exp %53 : vector<8x32xf32>
    %cst_54 = arith.constant 1.000000e+00 : f32
    %55 = vector.broadcast %cst_54 : f32 to vector<8x32xf32>
    %56 = arith.addf %55, %54 : vector<8x32xf32>
    %57 = arith.divf %55, %56 : vector<8x32xf32>
    %58 = arith.index_cast %38 : i32 to index
    %c0_55 = arith.constant 0 : index
    %59 = vector.load %arg12[%58, %c0_55] : memref<64x32xf32, #tpu.memory_space<vmem>>, vector<8x32xf32>
    %60 = vector.broadcast %32 : vector<1x32xf32> to vector<8x32xf32>
    %61 = arith.addf %41, %60 : vector<8x32xf32>
    %62 = arith.mulf %49, %61 : vector<8x32xf32>
    %63 = arith.addf %59, %62 : vector<8x32xf32>
    %64 = math.tanh %63 : vector<8x32xf32>
    %cst_56 = arith.constant 1.000000e+00 : f32
    %65 = vector.broadcast %cst_56 : f32 to vector<8x32xf32>
    %66 = arith.subf %65, %57 : vector<8x32xf32>
    %67 = arith.mulf %66, %64 : vector<8x32xf32>
    %68 = arith.mulf %57, %33 : vector<8x32xf32>
    %69 = arith.addf %67, %68 : vector<8x32xf32>
    %70 = arith.index_cast %38 : i32 to index
    %c0_57 = arith.constant 0 : index
    %71 = vector.load %arg13[%70, %c0_57] : memref<64x32xf32, #tpu.memory_space<vmem>>, vector<8x32xf32>
    tpu.vector_store %arg13[%70, %c0_57], %69 {strides = array<i32>} : memref<64x32xf32, #tpu.memory_space<vmem>>, vector<8x32xf32>,
    %c1_i32 = arith.constant 1 : i32
    %c0_i32_58 = arith.constant 0 : i32
    %72 = arith.cmpi eq, %arg0, %c0_i32_58 : i32
    %c7_i32_59 = arith.constant 7 : i32
    %73 = arith.subi %c7_i32_59, %c1_i32 : i32
    %74 = arith.select %72, %c1_i32, %73 : i32
    %c8_i32_60 = arith.constant 8 : i32
    %75 = arith.muli %74, %c8_i32_60 : i32
    %76 = tpu.assume_multiple %75, 8 : i32
    %cst_61 = arith.constant dense<0.000000e+00> : vector<8x32xf32>
    %77 = tpu.matmul %69, %26, %cst_61 {dimension_numbers = #tpu.dot_dimension_numbers<[1], [0], [0], [1], [0, 0, 1, 1], [], []>} : vector<8x32xf32>, vector<32x32xf32>, vector<8x32xf32> -> vector<8x32xf32>
    %cst_62 = arith.constant dense<0.000000e+00> : vector<8x32xf32>
    %78 = tpu.matmul %69, %28, %cst_62 {dimension_numbers = #tpu.dot_dimension_numbers<[1], [0], [0], [1], [0, 0, 1, 1], [], []>} : vector<8x32xf32>, vector<32x32xf32>, vector<8x32xf32> -> vector<8x32xf32>
    %cst_63 = arith.constant dense<0.000000e+00> : vector<8x32xf32>
    %79 = tpu.matmul %69, %30, %cst_63 {dimension_numbers = #tpu.dot_dimension_numbers<[1], [0], [0], [1], [0, 0, 1, 1], [], []>} : vector<8x32xf32>, vector<32x32xf32>, vector<8x32xf32> -> vector<8x32xf32>
    %80 = arith.index_cast %76 : i32 to index
    %c0_64 = arith.constant 0 : index
    %81 = vector.load %arg10[%80, %c0_64] : memref<64x32xf32, #tpu.memory_space<vmem>>, vector<8x32xf32>
    %82 = arith.addf %81, %77 : vector<8x32xf32>
    %83 = arith.negf %82 : vector<8x32xf32>
    %84 = math.exp %83 : vector<8x32xf32>
    %cst_65 = arith.constant 1.000000e+00 : f32
    %85 = vector.broadcast %cst_65 : f32 to vector<8x32xf32>
    %86 = arith.addf %85, %84 : vector<8x32xf32>
    %87 = arith.divf %85, %86 : vector<8x32xf32>
    %88 = arith.index_cast %76 : i32 to index
    %c0_66 = arith.constant 0 : index
    %89 = vector.load %arg11[%88, %c0_66] : memref<64x32xf32, #tpu.memory_space<vmem>>, vector<8x32xf32>
    %90 = arith.addf %89, %78 : vector<8x32xf32>
    %91 = arith.negf %90 : vector<8x32xf32>
    %92 = math.exp %91 : vector<8x32xf32>
    %cst_67 = arith.constant 1.000000e+00 : f32
    %93 = vector.broadcast %cst_67 : f32 to vector<8x32xf32>
    %94 = arith.addf %93, %92 : vector<8x32xf32>
    %95 = arith.divf %93, %94 : vector<8x32xf32>
    %96 = arith.index_cast %76 : i32 to index
    %c0_68 = arith.constant 0 : index
    %97 = vector.load %arg12[%96, %c0_68] : memref<64x32xf32, #tpu.memory_space<vmem>>, vector<8x32xf32>
    %98 = vector.broadcast %32 : vector<1x32xf32> to vector<8x32xf32>
    %99 = arith.addf %79, %98 : vector<8x32xf32>
    %100 = arith.mulf %87, %99 : vector<8x32xf32>
    %101 = arith.addf %97, %100 : vector<8x32xf32>
    %102 = math.tanh %101 : vector<8x32xf32>
    %cst_69 = arith.constant 1.000000e+00 : f32
    %103 = vector.broadcast %cst_69 : f32 to vector<8x32xf32>
    %104 = arith.subf %103, %95 : vector<8x32xf32>
    %105 = arith.mulf %104, %102 : vector<8x32xf32>
    %106 = arith.mulf %95, %69 : vector<8x32xf32>
    %107 = arith.addf %105, %106 : vector<8x32xf32>
    %108 = arith.index_cast %76 : i32 to index
    %c0_70 = arith.constant 0 : index
    %109 = vector.load %arg13[%108, %c0_70] : memref<64x32xf32, #tpu.memory_space<vmem>>, vector<8x32xf32>
    tpu.vector_store %arg13[%108, %c0_70], %107 {strides = array<i32>} : memref<64x32xf32, #tpu.memory_space<vmem>>, vector<8x32xf32>,
    %c2_i32 = arith.constant 2 : i32
    %c0_i32_71 = arith.constant 0 : i32
    %110 = arith.cmpi eq, %arg0, %c0_i32_71 : i32
    %c7_i32_72 = arith.constant 7 : i32
    %111 = arith.subi %c7_i32_72, %c2_i32 : i32
    %112 = arith.select %110, %c2_i32, %111 : i32
    %c8_i32_73 = arith.constant 8 : i32
    %113 = arith.muli %112, %c8_i32_73 : i32
    %114 = tpu.assume_multiple %113, 8 : i32
    %cst_74 = arith.constant dense<0.000000e+00> : vector<8x32xf32>
    %115 = tpu.matmul %107, %26, %cst_74 {dimension_numbers = #tpu.dot_dimension_numbers<[1], [0], [0], [1], [0, 0, 1, 1], [], []>} : vector<8x32xf32>, vector<32x32xf32>, vector<8x32xf32> -> vector<8x32xf32>
    %cst_75 = arith.constant dense<0.000000e+00> : vector<8x32xf32>
    %116 = tpu.matmul %107, %28, %cst_75 {dimension_numbers = #tpu.dot_dimension_numbers<[1], [0], [0], [1], [0, 0, 1, 1], [], []>} : vector<8x32xf32>, vector<32x32xf32>, vector<8x32xf32> -> vector<8x32xf32>
    %cst_76 = arith.constant dense<0.000000e+00> : vector<8x32xf32>
    %117 = tpu.matmul %107, %30, %cst_76 {dimension_numbers = #tpu.dot_dimension_numbers<[1], [0], [0], [1], [0, 0, 1, 1], [], []>} : vector<8x32xf32>, vector<32x32xf32>, vector<8x32xf32> -> vector<8x32xf32>
    %118 = arith.index_cast %114 : i32 to index
    %c0_77 = arith.constant 0 : index
    %119 = vector.load %arg10[%118, %c0_77] : memref<64x32xf32, #tpu.memory_space<vmem>>, vector<8x32xf32>
    %120 = arith.addf %119, %115 : vector<8x32xf32>
    %121 = arith.negf %120 : vector<8x32xf32>
    %122 = math.exp %121 : vector<8x32xf32>
    %cst_78 = arith.constant 1.000000e+00 : f32
    %123 = vector.broadcast %cst_78 : f32 to vector<8x32xf32>
    %124 = arith.addf %123, %122 : vector<8x32xf32>
    %125 = arith.divf %123, %124 : vector<8x32xf32>
    %126 = arith.index_cast %114 : i32 to index
    %c0_79 = arith.constant 0 : index
    %127 = vector.load %arg11[%126, %c0_79] : memref<64x32xf32, #tpu.memory_space<vmem>>, vector<8x32xf32>
    %128 = arith.addf %127, %116 : vector<8x32xf32>
    %129 = arith.negf %128 : vector<8x32xf32>
    %130 = math.exp %129 : vector<8x32xf32>
    %cst_80 = arith.constant 1.000000e+00 : f32
    %131 = vector.broadcast %cst_80 : f32 to vector<8x32xf32>
    %132 = arith.addf %131, %130 : vector<8x32xf32>
    %133 = arith.divf %131, %132 : vector<8x32xf32>
    %134 = arith.index_cast %114 : i32 to index
    %c0_81 = arith.constant 0 : index
    %135 = vector.load %arg12[%134, %c0_81] : memref<64x32xf32, #tpu.memory_space<vmem>>, vector<8x32xf32>
    %136 = vector.broadcast %32 : vector<1x32xf32> to vector<8x32xf32>
    %137 = arith.addf %117, %136 : vector<8x32xf32>
    %138 = arith.mulf %125, %137 : vector<8x32xf32>
    %139 = arith.addf %135, %138 : vector<8x32xf32>
    %140 = math.tanh %139 : vector<8x32xf32>
    %cst_82 = arith.constant 1.000000e+00 : f32
    %141 = vector.broadcast %cst_82 : f32 to vector<8x32xf32>
    %142 = arith.subf %141, %133 : vector<8x32xf32>
    %143 = arith.mulf %142, %140 : vector<8x32xf32>
    %144 = arith.mulf %133, %107 : vector<8x32xf32>
    %145 = arith.addf %143, %144 : vector<8x32xf32>
    %146 = arith.index_cast %114 : i32 to index
    %c0_83 = arith.constant 0 : index
    %147 = vector.load %arg13[%146, %c0_83] : memref<64x32xf32, #tpu.memory_space<vmem>>, vector<8x32xf32>
    tpu.vector_store %arg13[%146, %c0_83], %145 {strides = array<i32>} : memref<64x32xf32, #tpu.memory_space<vmem>>, vector<8x32xf32>,
    %c3_i32 = arith.constant 3 : i32
    %c0_i32_84 = arith.constant 0 : i32
    %148 = arith.cmpi eq, %arg0, %c0_i32_84 : i32
    %c7_i32_85 = arith.constant 7 : i32
    %149 = arith.subi %c7_i32_85, %c3_i32 : i32
    %150 = arith.select %148, %c3_i32, %149 : i32
    %c8_i32_86 = arith.constant 8 : i32
    %151 = arith.muli %150, %c8_i32_86 : i32
    %152 = tpu.assume_multiple %151, 8 : i32
    %cst_87 = arith.constant dense<0.000000e+00> : vector<8x32xf32>
    %153 = tpu.matmul %145, %26, %cst_87 {dimension_numbers = #tpu.dot_dimension_numbers<[1], [0], [0], [1], [0, 0, 1, 1], [], []>} : vector<8x32xf32>, vector<32x32xf32>, vector<8x32xf32> -> vector<8x32xf32>
    %cst_88 = arith.constant dense<0.000000e+00> : vector<8x32xf32>
    %154 = tpu.matmul %145, %28, %cst_88 {dimension_numbers = #tpu.dot_dimension_numbers<[1], [0], [0], [1], [0, 0, 1, 1], [], []>} : vector<8x32xf32>, vector<32x32xf32>, vector<8x32xf32> -> vector<8x32xf32>
    %cst_89 = arith.constant dense<0.000000e+00> : vector<8x32xf32>
    %155 = tpu.matmul %145, %30, %cst_89 {dimension_numbers = #tpu.dot_dimension_numbers<[1], [0], [0], [1], [0, 0, 1, 1], [], []>} : vector<8x32xf32>, vector<32x32xf32>, vector<8x32xf32> -> vector<8x32xf32>
    %156 = arith.index_cast %152 : i32 to index
    %c0_90 = arith.constant 0 : index
    %157 = vector.load %arg10[%156, %c0_90] : memref<64x32xf32, #tpu.memory_space<vmem>>, vector<8x32xf32>
    %158 = arith.addf %157, %153 : vector<8x32xf32>
    %159 = arith.negf %158 : vector<8x32xf32>
    %160 = math.exp %159 : vector<8x32xf32>
    %cst_91 = arith.constant 1.000000e+00 : f32
    %161 = vector.broadcast %cst_91 : f32 to vector<8x32xf32>
    %162 = arith.addf %161, %160 : vector<8x32xf32>
    %163 = arith.divf %161, %162 : vector<8x32xf32>
    %164 = arith.index_cast %152 : i32 to index
    %c0_92 = arith.constant 0 : index
    %165 = vector.load %arg11[%164, %c0_92] : memref<64x32xf32, #tpu.memory_space<vmem>>, vector<8x32xf32>
    %166 = arith.addf %165, %154 : vector<8x32xf32>
    %167 = arith.negf %166 : vector<8x32xf32>
    %168 = math.exp %167 : vector<8x32xf32>
    %cst_93 = arith.constant 1.000000e+00 : f32
    %169 = vector.broadcast %cst_93 : f32 to vector<8x32xf32>
    %170 = arith.addf %169, %168 : vector<8x32xf32>
    %171 = arith.divf %169, %170 : vector<8x32xf32>
    %172 = arith.index_cast %152 : i32 to index
    %c0_94 = arith.constant 0 : index
    %173 = vector.load %arg12[%172, %c0_94] : memref<64x32xf32, #tpu.memory_space<vmem>>, vector<8x32xf32>
    %174 = vector.broadcast %32 : vector<1x32xf32> to vector<8x32xf32>
    %175 = arith.addf %155, %174 : vector<8x32xf32>
    %176 = arith.mulf %163, %175 : vector<8x32xf32>
    %177 = arith.addf %173, %176 : vector<8x32xf32>
    %178 = math.tanh %177 : vector<8x32xf32>
    %cst_95 = arith.constant 1.000000e+00 : f32
    %179 = vector.broadcast %cst_95 : f32 to vector<8x32xf32>
    %180 = arith.subf %179, %171 : vector<8x32xf32>
    %181 = arith.mulf %180, %178 : vector<8x32xf32>
    %182 = arith.mulf %171, %145 : vector<8x32xf32>
    %183 = arith.addf %181, %182 : vector<8x32xf32>
    %184 = arith.index_cast %152 : i32 to index
    %c0_96 = arith.constant 0 : index
    %185 = vector.load %arg13[%184, %c0_96] : memref<64x32xf32, #tpu.memory_space<vmem>>, vector<8x32xf32>
    tpu.vector_store %arg13[%184, %c0_96], %183 {strides = array<i32>} : memref<64x32xf32, #tpu.memory_space<vmem>>, vector<8x32xf32>,
    %c4_i32 = arith.constant 4 : i32
    %c0_i32_97 = arith.constant 0 : i32
    %186 = arith.cmpi eq, %arg0, %c0_i32_97 : i32
    %c7_i32_98 = arith.constant 7 : i32
    %187 = arith.subi %c7_i32_98, %c4_i32 : i32
    %188 = arith.select %186, %c4_i32, %187 : i32
    %c8_i32_99 = arith.constant 8 : i32
    %189 = arith.muli %188, %c8_i32_99 : i32
    %190 = tpu.assume_multiple %189, 8 : i32
    %cst_100 = arith.constant dense<0.000000e+00> : vector<8x32xf32>
    %191 = tpu.matmul %183, %26, %cst_100 {dimension_numbers = #tpu.dot_dimension_numbers<[1], [0], [0], [1], [0, 0, 1, 1], [], []>} : vector<8x32xf32>, vector<32x32xf32>, vector<8x32xf32> -> vector<8x32xf32>
    %cst_101 = arith.constant dense<0.000000e+00> : vector<8x32xf32>
    %192 = tpu.matmul %183, %28, %cst_101 {dimension_numbers = #tpu.dot_dimension_numbers<[1], [0], [0], [1], [0, 0, 1, 1], [], []>} : vector<8x32xf32>, vector<32x32xf32>, vector<8x32xf32> -> vector<8x32xf32>
    %cst_102 = arith.constant dense<0.000000e+00> : vector<8x32xf32>
    %193 = tpu.matmul %183, %30, %cst_102 {dimension_numbers = #tpu.dot_dimension_numbers<[1], [0], [0], [1], [0, 0, 1, 1], [], []>} : vector<8x32xf32>, vector<32x32xf32>, vector<8x32xf32> -> vector<8x32xf32>
    %194 = arith.index_cast %190 : i32 to index
    %c0_103 = arith.constant 0 : index
    %195 = vector.load %arg10[%194, %c0_103] : memref<64x32xf32, #tpu.memory_space<vmem>>, vector<8x32xf32>
    %196 = arith.addf %195, %191 : vector<8x32xf32>
    %197 = arith.negf %196 : vector<8x32xf32>
    %198 = math.exp %197 : vector<8x32xf32>
    %cst_104 = arith.constant 1.000000e+00 : f32
    %199 = vector.broadcast %cst_104 : f32 to vector<8x32xf32>
    %200 = arith.addf %199, %198 : vector<8x32xf32>
    %201 = arith.divf %199, %200 : vector<8x32xf32>
    %202 = arith.index_cast %190 : i32 to index
    %c0_105 = arith.constant 0 : index
    %203 = vector.load %arg11[%202, %c0_105] : memref<64x32xf32, #tpu.memory_space<vmem>>, vector<8x32xf32>
    %204 = arith.addf %203, %192 : vector<8x32xf32>
    %205 = arith.negf %204 : vector<8x32xf32>
    %206 = math.exp %205 : vector<8x32xf32>
    %cst_106 = arith.constant 1.000000e+00 : f32
    %207 = vector.broadcast %cst_106 : f32 to vector<8x32xf32>
    %208 = arith.addf %207, %206 : vector<8x32xf32>
    %209 = arith.divf %207, %208 : vector<8x32xf32>
    %210 = arith.index_cast %190 : i32 to index
    %c0_107 = arith.constant 0 : index
    %211 = vector.load %arg12[%210, %c0_107] : memref<64x32xf32, #tpu.memory_space<vmem>>, vector<8x32xf32>
    %212 = vector.broadcast %32 : vector<1x32xf32> to vector<8x32xf32>
    %213 = arith.addf %193, %212 : vector<8x32xf32>
    %214 = arith.mulf %201, %213 : vector<8x32xf32>
    %215 = arith.addf %211, %214 : vector<8x32xf32>
    %216 = math.tanh %215 : vector<8x32xf32>
    %cst_108 = arith.constant 1.000000e+00 : f32
    %217 = vector.broadcast %cst_108 : f32 to vector<8x32xf32>
    %218 = arith.subf %217, %209 : vector<8x32xf32>
    %219 = arith.mulf %218, %216 : vector<8x32xf32>
    %220 = arith.mulf %209, %183 : vector<8x32xf32>
    %221 = arith.addf %219, %220 : vector<8x32xf32>
    %222 = arith.index_cast %190 : i32 to index
    %c0_109 = arith.constant 0 : index
    %223 = vector.load %arg13[%222, %c0_109] : memref<64x32xf32, #tpu.memory_space<vmem>>, vector<8x32xf32>
    tpu.vector_store %arg13[%222, %c0_109], %221 {strides = array<i32>} : memref<64x32xf32, #tpu.memory_space<vmem>>, vector<8x32xf32>,
    %c5_i32 = arith.constant 5 : i32
    %c0_i32_110 = arith.constant 0 : i32
    %224 = arith.cmpi eq, %arg0, %c0_i32_110 : i32
    %c7_i32_111 = arith.constant 7 : i32
    %225 = arith.subi %c7_i32_111, %c5_i32 : i32
    %226 = arith.select %224, %c5_i32, %225 : i32
    %c8_i32_112 = arith.constant 8 : i32
    %227 = arith.muli %226, %c8_i32_112 : i32
    %228 = tpu.assume_multiple %227, 8 : i32
    %cst_113 = arith.constant dense<0.000000e+00> : vector<8x32xf32>
    %229 = tpu.matmul %221, %26, %cst_113 {dimension_numbers = #tpu.dot_dimension_numbers<[1], [0], [0], [1], [0, 0, 1, 1], [], []>} : vector<8x32xf32>, vector<32x32xf32>, vector<8x32xf32> -> vector<8x32xf32>
    %cst_114 = arith.constant dense<0.000000e+00> : vector<8x32xf32>
    %230 = tpu.matmul %221, %28, %cst_114 {dimension_numbers = #tpu.dot_dimension_numbers<[1], [0], [0], [1], [0, 0, 1, 1], [], []>} : vector<8x32xf32>, vector<32x32xf32>, vector<8x32xf32> -> vector<8x32xf32>
    %cst_115 = arith.constant dense<0.000000e+00> : vector<8x32xf32>
    %231 = tpu.matmul %221, %30, %cst_115 {dimension_numbers = #tpu.dot_dimension_numbers<[1], [0], [0], [1], [0, 0, 1, 1], [], []>} : vector<8x32xf32>, vector<32x32xf32>, vector<8x32xf32> -> vector<8x32xf32>
    %232 = arith.index_cast %228 : i32 to index
    %c0_116 = arith.constant 0 : index
    %233 = vector.load %arg10[%232, %c0_116] : memref<64x32xf32, #tpu.memory_space<vmem>>, vector<8x32xf32>
    %234 = arith.addf %233, %229 : vector<8x32xf32>
    %235 = arith.negf %234 : vector<8x32xf32>
    %236 = math.exp %235 : vector<8x32xf32>
    %cst_117 = arith.constant 1.000000e+00 : f32
    %237 = vector.broadcast %cst_117 : f32 to vector<8x32xf32>
    %238 = arith.addf %237, %236 : vector<8x32xf32>
    %239 = arith.divf %237, %238 : vector<8x32xf32>
    %240 = arith.index_cast %228 : i32 to index
    %c0_118 = arith.constant 0 : index
    %241 = vector.load %arg11[%240, %c0_118] : memref<64x32xf32, #tpu.memory_space<vmem>>, vector<8x32xf32>
    %242 = arith.addf %241, %230 : vector<8x32xf32>
    %243 = arith.negf %242 : vector<8x32xf32>
    %244 = math.exp %243 : vector<8x32xf32>
    %cst_119 = arith.constant 1.000000e+00 : f32
    %245 = vector.broadcast %cst_119 : f32 to vector<8x32xf32>
    %246 = arith.addf %245, %244 : vector<8x32xf32>
    %247 = arith.divf %245, %246 : vector<8x32xf32>
    %248 = arith.index_cast %228 : i32 to index
    %c0_120 = arith.constant 0 : index
    %249 = vector.load %arg12[%248, %c0_120] : memref<64x32xf32, #tpu.memory_space<vmem>>, vector<8x32xf32>
    %250 = vector.broadcast %32 : vector<1x32xf32> to vector<8x32xf32>
    %251 = arith.addf %231, %250 : vector<8x32xf32>
    %252 = arith.mulf %239, %251 : vector<8x32xf32>
    %253 = arith.addf %249, %252 : vector<8x32xf32>
    %254 = math.tanh %253 : vector<8x32xf32>
    %cst_121 = arith.constant 1.000000e+00 : f32
    %255 = vector.broadcast %cst_121 : f32 to vector<8x32xf32>
    %256 = arith.subf %255, %247 : vector<8x32xf32>
    %257 = arith.mulf %256, %254 : vector<8x32xf32>
    %258 = arith.mulf %247, %221 : vector<8x32xf32>
    %259 = arith.addf %257, %258 : vector<8x32xf32>
    %260 = arith.index_cast %228 : i32 to index
    %c0_122 = arith.constant 0 : index
    %261 = vector.load %arg13[%260, %c0_122] : memref<64x32xf32, #tpu.memory_space<vmem>>, vector<8x32xf32>
    tpu.vector_store %arg13[%260, %c0_122], %259 {strides = array<i32>} : memref<64x32xf32, #tpu.memory_space<vmem>>, vector<8x32xf32>,
    %c6_i32 = arith.constant 6 : i32
    %c0_i32_123 = arith.constant 0 : i32
    %262 = arith.cmpi eq, %arg0, %c0_i32_123 : i32
    %c7_i32_124 = arith.constant 7 : i32
    %263 = arith.subi %c7_i32_124, %c6_i32 : i32
    %264 = arith.select %262, %c6_i32, %263 : i32
    %c8_i32_125 = arith.constant 8 : i32
    %265 = arith.muli %264, %c8_i32_125 : i32
    %266 = tpu.assume_multiple %265, 8 : i32
    %cst_126 = arith.constant dense<0.000000e+00> : vector<8x32xf32>
    %267 = tpu.matmul %259, %26, %cst_126 {dimension_numbers = #tpu.dot_dimension_numbers<[1], [0], [0], [1], [0, 0, 1, 1], [], []>} : vector<8x32xf32>, vector<32x32xf32>, vector<8x32xf32> -> vector<8x32xf32>
    %cst_127 = arith.constant dense<0.000000e+00> : vector<8x32xf32>
    %268 = tpu.matmul %259, %28, %cst_127 {dimension_numbers = #tpu.dot_dimension_numbers<[1], [0], [0], [1], [0, 0, 1, 1], [], []>} : vector<8x32xf32>, vector<32x32xf32>, vector<8x32xf32> -> vector<8x32xf32>
    %cst_128 = arith.constant dense<0.000000e+00> : vector<8x32xf32>
    %269 = tpu.matmul %259, %30, %cst_128 {dimension_numbers = #tpu.dot_dimension_numbers<[1], [0], [0], [1], [0, 0, 1, 1], [], []>} : vector<8x32xf32>, vector<32x32xf32>, vector<8x32xf32> -> vector<8x32xf32>
    %270 = arith.index_cast %266 : i32 to index
    %c0_129 = arith.constant 0 : index
    %271 = vector.load %arg10[%270, %c0_129] : memref<64x32xf32, #tpu.memory_space<vmem>>, vector<8x32xf32>
    %272 = arith.addf %271, %267 : vector<8x32xf32>
    %273 = arith.negf %272 : vector<8x32xf32>
    %274 = math.exp %273 : vector<8x32xf32>
    %cst_130 = arith.constant 1.000000e+00 : f32
    %275 = vector.broadcast %cst_130 : f32 to vector<8x32xf32>
    %276 = arith.addf %275, %274 : vector<8x32xf32>
    %277 = arith.divf %275, %276 : vector<8x32xf32>
    %278 = arith.index_cast %266 : i32 to index
    %c0_131 = arith.constant 0 : index
    %279 = vector.load %arg11[%278, %c0_131] : memref<64x32xf32, #tpu.memory_space<vmem>>, vector<8x32xf32>
    %280 = arith.addf %279, %268 : vector<8x32xf32>
    %281 = arith.negf %280 : vector<8x32xf32>
    %282 = math.exp %281 : vector<8x32xf32>
    %cst_132 = arith.constant 1.000000e+00 : f32
    %283 = vector.broadcast %cst_132 : f32 to vector<8x32xf32>
    %284 = arith.addf %283, %282 : vector<8x32xf32>
    %285 = arith.divf %283, %284 : vector<8x32xf32>
    %286 = arith.index_cast %266 : i32 to index
    %c0_133 = arith.constant 0 : index
    %287 = vector.load %arg12[%286, %c0_133] : memref<64x32xf32, #tpu.memory_space<vmem>>, vector<8x32xf32>
    %288 = vector.broadcast %32 : vector<1x32xf32> to vector<8x32xf32>
    %289 = arith.addf %269, %288 : vector<8x32xf32>
    %290 = arith.mulf %277, %289 : vector<8x32xf32>
    %291 = arith.addf %287, %290 : vector<8x32xf32>
    %292 = math.tanh %291 : vector<8x32xf32>
    %cst_134 = arith.constant 1.000000e+00 : f32
    %293 = vector.broadcast %cst_134 : f32 to vector<8x32xf32>
    %294 = arith.subf %293, %285 : vector<8x32xf32>
    %295 = arith.mulf %294, %292 : vector<8x32xf32>
    %296 = arith.mulf %285, %259 : vector<8x32xf32>
    %297 = arith.addf %295, %296 : vector<8x32xf32>
    %298 = arith.index_cast %266 : i32 to index
    %c0_135 = arith.constant 0 : index
    %299 = vector.load %arg13[%298, %c0_135] : memref<64x32xf32, #tpu.memory_space<vmem>>, vector<8x32xf32>
    tpu.vector_store %arg13[%298, %c0_135], %297 {strides = array<i32>} : memref<64x32xf32, #tpu.memory_space<vmem>>, vector<8x32xf32>,
    %c7_i32_136 = arith.constant 7 : i32
    %c0_i32_137 = arith.constant 0 : i32
    %300 = arith.cmpi eq, %arg0, %c0_i32_137 : i32
    %c7_i32_138 = arith.constant 7 : i32
    %301 = arith.subi %c7_i32_138, %c7_i32_136 : i32
    %302 = arith.select %300, %c7_i32_136, %301 : i32
    %c8_i32_139 = arith.constant 8 : i32
    %303 = arith.muli %302, %c8_i32_139 : i32
    %304 = tpu.assume_multiple %303, 8 : i32
    %cst_140 = arith.constant dense<0.000000e+00> : vector<8x32xf32>
    %305 = tpu.matmul %297, %26, %cst_140 {dimension_numbers = #tpu.dot_dimension_numbers<[1], [0], [0], [1], [0, 0, 1, 1], [], []>} : vector<8x32xf32>, vector<32x32xf32>, vector<8x32xf32> -> vector<8x32xf32>
    %cst_141 = arith.constant dense<0.000000e+00> : vector<8x32xf32>
    %306 = tpu.matmul %297, %28, %cst_141 {dimension_numbers = #tpu.dot_dimension_numbers<[1], [0], [0], [1], [0, 0, 1, 1], [], []>} : vector<8x32xf32>, vector<32x32xf32>, vector<8x32xf32> -> vector<8x32xf32>
    %cst_142 = arith.constant dense<0.000000e+00> : vector<8x32xf32>
    %307 = tpu.matmul %297, %30, %cst_142 {dimension_numbers = #tpu.dot_dimension_numbers<[1], [0], [0], [1], [0, 0, 1, 1], [], []>} : vector<8x32xf32>, vector<32x32xf32>, vector<8x32xf32> -> vector<8x32xf32>
    %308 = arith.index_cast %304 : i32 to index
    %c0_143 = arith.constant 0 : index
    %309 = vector.load %arg10[%308, %c0_143] : memref<64x32xf32, #tpu.memory_space<vmem>>, vector<8x32xf32>
    %310 = arith.addf %309, %305 : vector<8x32xf32>
    %311 = arith.negf %310 : vector<8x32xf32>
    %312 = math.exp %311 : vector<8x32xf32>
    %cst_144 = arith.constant 1.000000e+00 : f32
    %313 = vector.broadcast %cst_144 : f32 to vector<8x32xf32>
    %314 = arith.addf %313, %312 : vector<8x32xf32>
    %315 = arith.divf %313, %314 : vector<8x32xf32>
    %316 = arith.index_cast %304 : i32 to index
    %c0_145 = arith.constant 0 : index
    %317 = vector.load %arg11[%316, %c0_145] : memref<64x32xf32, #tpu.memory_space<vmem>>, vector<8x32xf32>
    %318 = arith.addf %317, %306 : vector<8x32xf32>
    %319 = arith.negf %318 : vector<8x32xf32>
    %320 = math.exp %319 : vector<8x32xf32>
    %cst_146 = arith.constant 1.000000e+00 : f32
    %321 = vector.broadcast %cst_146 : f32 to vector<8x32xf32>
    %322 = arith.addf %321, %320 : vector<8x32xf32>
    %323 = arith.divf %321, %322 : vector<8x32xf32>
    %324 = arith.index_cast %304 : i32 to index
    %c0_147 = arith.constant 0 : index
    %325 = vector.load %arg12[%324, %c0_147] : memref<64x32xf32, #tpu.memory_space<vmem>>, vector<8x32xf32>
    %326 = vector.broadcast %32 : vector<1x32xf32> to vector<8x32xf32>
    %327 = arith.addf %307, %326 : vector<8x32xf32>
    %328 = arith.mulf %315, %327 : vector<8x32xf32>
    %329 = arith.addf %325, %328 : vector<8x32xf32>
    %330 = math.tanh %329 : vector<8x32xf32>
    %cst_148 = arith.constant 1.000000e+00 : f32
    %331 = vector.broadcast %cst_148 : f32 to vector<8x32xf32>
    %332 = arith.subf %331, %323 : vector<8x32xf32>
    %333 = arith.mulf %332, %330 : vector<8x32xf32>
    %334 = arith.mulf %323, %297 : vector<8x32xf32>
    %335 = arith.addf %333, %334 : vector<8x32xf32>
    %336 = arith.index_cast %304 : i32 to index
    %c0_149 = arith.constant 0 : index
    %337 = vector.load %arg13[%336, %c0_149] : memref<64x32xf32, #tpu.memory_space<vmem>>, vector<8x32xf32>
    tpu.vector_store %arg13[%336, %c0_149], %335 {strides = array<i32>} : memref<64x32xf32, #tpu.memory_space<vmem>>, vector<8x32xf32>,
    %c8_i32_150 = arith.constant 8 : i32
    %c0_i32_151 = arith.constant 0 : i32
    %338 = arith.cmpi eq, %arg0, %c0_i32_151 : i32
    %339 = arith.extui %338 : i1 to i32
    %c0_i32_152 = arith.constant 0 : i32
    %340 = arith.cmpi ne, %339, %c0_i32_152 : i32
    scf.if %340 {
      %c0_155 = arith.constant 0 : index
      %c0_156 = arith.constant 0 : index
      %344 = vector.load %arg13[%c0_155, %c0_156] : memref<64x32xf32, #tpu.memory_space<vmem>>, vector<64x32xf32>
      %c0_157 = arith.constant 0 : index
      %c0_158 = arith.constant 0 : index
      %345 = vector.load %arg8[%c0_157, %c0_158] : memref<64x64xf32, #tpu.memory_space<vmem>>, vector<64x32xf32>
      tpu.vector_store %arg8[%c0_157, %c0_158], %344 {strides = array<i32>} : memref<64x64xf32, #tpu.memory_space<vmem>>, vector<64x32xf32>,
      %c0_159 = arith.constant 0 : index
      %c0_160 = arith.constant 0 : index
      %346 = vector.load %arg14[%c0_159, %c0_160] : memref<8x32xf32, #tpu.memory_space<vmem>>, vector<8x32xf32>
      tpu.vector_store %arg14[%c0_159, %c0_160], %335 {strides = array<i32>} : memref<8x32xf32, #tpu.memory_space<vmem>>, vector<8x32xf32>,
    } else {
    }
    %c1_i32_153 = arith.constant 1 : i32
    %341 = arith.cmpi eq, %arg0, %c1_i32_153 : i32
    %342 = arith.extui %341 : i1 to i32
    %c0_i32_154 = arith.constant 0 : i32
    %343 = arith.cmpi ne, %342, %c0_i32_154 : i32
    scf.if %343 {
      %c0_155 = arith.constant 0 : index
      %c0_156 = arith.constant 0 : index
      %344 = vector.load %arg13[%c0_155, %c0_156] : memref<64x32xf32, #tpu.memory_space<vmem>>, vector<64x32xf32>
      %c0_157 = arith.constant 0 : index
      %c32 = arith.constant 32 : index
      %345 = vector.load %arg8[%c0_157, %c32] : memref<64x64xf32, #tpu.memory_space<vmem>>, vector<64x32xf32>
      tpu.vector_store %arg8[%c0_157, %c32], %344 {strides = array<i32>} : memref<64x64xf32, #tpu.memory_space<vmem>>, vector<64x32xf32>,
      %c0_158 = arith.constant 0 : index
      %c0_159 = arith.constant 0 : index
      %346 = vector.load %arg14[%c0_158, %c0_159] : memref<8x32xf32, #tpu.memory_space<vmem>>, vector<8x32xf32>
      %c0_160 = arith.constant 0 : index
      %c0_161 = arith.constant 0 : index
      %c0_162 = arith.constant 0 : index
      %347 = vector.load %arg6[%c0_160, %c0_161, %c0_162] : memref<2x32x32xf32, #tpu.memory_space<vmem>>, vector<1x32x32xf32>
      %348 = vector.shape_cast %347 : vector<1x32x32xf32> to vector<32x32xf32>
      %cst_163 = arith.constant dense<0.000000e+00> : vector<8x32xf32>
      %349 = tpu.matmul %346, %348, %cst_163 {dimension_numbers = #tpu.dot_dimension_numbers<[1], [0], [0], [1], [0, 0, 1, 1], [], []>} : vector<8x32xf32>, vector<32x32xf32>, vector<8x32xf32> -> vector<8x32xf32>
      %c1_164 = arith.constant 1 : index
      %c0_165 = arith.constant 0 : index
      %c0_166 = arith.constant 0 : index
      %350 = vector.load %arg6[%c1_164, %c0_165, %c0_166] : memref<2x32x32xf32, #tpu.memory_space<vmem>>, vector<1x32x32xf32>
      %351 = vector.shape_cast %350 : vector<1x32x32xf32> to vector<32x32xf32>
      %cst_167 = arith.constant dense<0.000000e+00> : vector<8x32xf32>
      %352 = tpu.matmul %335, %351, %cst_167 {dimension_numbers = #tpu.dot_dimension_numbers<[1], [0], [0], [1], [0, 0, 1, 1], [], []>} : vector<8x32xf32>, vector<32x32xf32>, vector<8x32xf32> -> vector<8x32xf32>
      %353 = arith.addf %349, %352 : vector<8x32xf32>
      %c0_168 = arith.constant 0 : index
      %c0_169 = arith.constant 0 : index
      %354 = vector.load %arg7[%c0_168, %c0_169] : memref<1x32xf32, #tpu.memory_space<vmem>>, vector<1x32xf32>
      %355 = vector.broadcast %354 : vector<1x32xf32> to vector<8x32xf32>
      %356 = arith.addf %353, %355 : vector<8x32xf32>
      %357 = math.tanh %356 : vector<8x32xf32>
      %c0_170 = arith.constant 0 : index
      %c0_171 = arith.constant 0 : index
      %358 = vector.load %arg9[%c0_170, %c0_171] : memref<8x32xf32, #tpu.memory_space<vmem>>, vector<8x32xf32>
      tpu.vector_store %arg9[%c0_170, %c0_171], %357 {strides = array<i32>} : memref<8x32xf32, #tpu.memory_space<vmem>>, vector<8x32xf32>,
    } else {
    }
    return
  }
  func.func @transform_0(%arg0: i32) -> (i32, i32) {
    %c0_i32 = arith.constant 0 : i32
    %c0_i32_0 = arith.constant 0 : i32
    %c0_i32_1 = arith.constant 0 : i32
    return %c0_i32, %c0_i32_0 : i32, i32
  }
  func.func @transform_1(%arg0: i32) -> (i32, i32, i32, i32) {
    %c0_i32 = arith.constant 0 : i32
    %c0_i32_0 = arith.constant 0 : i32
    %c0_i32_1 = arith.constant 0 : i32
    %c0_i32_2 = arith.constant 0 : i32
    return %arg0, %c0_i32, %c0_i32_0, %c0_i32_1 : i32, i32, i32, i32
  }
  func.func @transform_2(%arg0: i32) -> (i32, i32, i32, i32) {
    %c0_i32 = arith.constant 0 : i32
    %c0_i32_0 = arith.constant 0 : i32
    %c0_i32_1 = arith.constant 0 : i32
    %c0_i32_2 = arith.constant 0 : i32
    return %arg0, %c0_i32, %c0_i32_0, %c0_i32_1 : i32, i32, i32, i32
  }
  func.func @transform_3(%arg0: i32) -> (i32, i32, i32, i32) {
    %c0_i32 = arith.constant 0 : i32
    %c0_i32_0 = arith.constant 0 : i32
    %c0_i32_1 = arith.constant 0 : i32
    %c0_i32_2 = arith.constant 0 : i32
    return %arg0, %c0_i32, %c0_i32_0, %c0_i32_1 : i32, i32, i32, i32
  }
  func.func @transform_4(%arg0: i32) -> (i32, i32, i32) {
    %c0_i32 = arith.constant 0 : i32
    %c0_i32_0 = arith.constant 0 : i32
    %c0_i32_1 = arith.constant 0 : i32
    return %arg0, %c0_i32, %c0_i32_0 : i32, i32, i32
  }
  func.func @transform_5(%arg0: i32) -> (i32, i32, i32) {
    %c0_i32 = arith.constant 0 : i32
    %c0_i32_0 = arith.constant 0 : i32
    %c0_i32_1 = arith.constant 0 : i32
    %c0_i32_2 = arith.constant 0 : i32
    return %c0_i32, %c0_i32_0, %c0_i32_1 : i32, i32, i32
  }
  func.func @transform_6(%arg0: i32) -> (i32, i32) {
    %c0_i32 = arith.constant 0 : i32
    %c0_i32_0 = arith.constant 0 : i32
    %c0_i32_1 = arith.constant 0 : i32
    return %c0_i32, %c0_i32_0 : i32, i32
  }
  func.func @transform_7(%arg0: i32) -> (i32, i32) {
    %c0_i32 = arith.constant 0 : i32
    %c0_i32_0 = arith.constant 0 : i32
    %c0_i32_1 = arith.constant 0 : i32
    return %c0_i32, %c0_i32_0 : i32, i32
  }
  func.func @transform_8(%arg0: i32) -> (i32, i32) {
    %c0_i32 = arith.constant 0 : i32
    %c0_i32_0 = arith.constant 0 : i32
    %c0_i32_1 = arith.constant 0 : i32
    return %c0_i32, %c0_i32_0 : i32, i32
  }
}

</mosaic_0001>

<llo_original>
// kernel: encoder_forward.2
$region0: #{encoder_forward.2}
  #allocation0 [shape = 'u32[]', space=smem, size = 0x4, offset = 0x4, fixed_abs, tag = 'smem constant byte address 0x4 - core index']
  #allocation1 [shape = 'u32[72,128]{1,0:T(1,128)}', space=vmem, size = 0x9000, scoped, tag = 'internal scratch']
  #allocation2 [shape = 'f32[64,32]{1,0:T(8,128)}', space=vmem, size = 0x8000, scoped, tag = 'scratch operand']
  #allocation3 [shape = 'f32[64,32]{1,0:T(8,128)}', space=vmem, size = 0x8000, scoped, tag = 'scratch operand']
  #allocation4 [shape = 'f32[64,32]{1,0:T(8,128)}', space=vmem, size = 0x8000, scoped, tag = 'scratch operand']
  #allocation5 [shape = 'f32[64,32]{1,0:T(8,128)}', space=vmem, size = 0x8000, scoped, tag = 'scratch operand']
  %s0 = inlined_call_operand.vmem [shape: f32[64,16], index: 0, kind: input, shape index: {}]
  %s1 = inlined_call_operand.vmem [shape: f32[2,3,16,32], index: 1, kind: input, shape index: {}]
  %s2 = inlined_call_operand.vmem [shape: f32[2,3,32,32], index: 2, kind: input, shape index: {}]
  %s3 = inlined_call_operand.vmem [shape: f32[2,3,1,32], index: 3, kind: input, shape index: {}]
  %s4 = inlined_call_operand.vmem [shape: f32[2,1,32], index: 4, kind: input, shape index: {}]
  %s5 = inlined_call_operand.vmem [shape: f32[64,64], index: 5, kind: output, shape index: {}]
  %s6 = sld [smem:[#allocation0]]
  $region61: #{encoder_forward.2} parent=0
    _
  %s8 = ssub.s32 1, %s6
  %s9 = scalar_select 0, %s8, %s6
  loop: start=0, step=1, limit=4
  $region2: #{encoder_forward.2} parent=0 // loop_pre_header
    _
  $region3: #{encoder_forward.2} parent=0 // loop_header
    %s11 = sphi 0, %s15
    %p12 = scmp.ge.s32.totalorder %s11, 4
    %s19 = sphi 0, %s19
    %s21 = sphi 0, %s19
    %s22 = sphi 0, %s21
    %s36 = sphi 0, %s22
    %s42 = sphi 0, %s44
    %s45 = sphi 0, %s42
    %s46 = sphi 0, %s45
    %s62 = sphi 0, %s46
    %s68 = sphi 0, %s70
    %s71 = sphi 0, %s68
    %s72 = sphi 0, %s71
    %s88 = sphi 0, %s72
    %s94 = sphi 0, %s96
    %s97 = sphi 0, %s94
    %s98 = sphi 0, %s97
    %s114 = sphi 0, %s98
    %s120 = sphi 0, %s122
    %s123 = sphi 0, %s120
    %s124 = sphi 0, %s123
    %s140 = sphi 0, %s124
    %s144 = sphi 0, %s144
    %s146 = sphi 0, %s144
    %s147 = sphi 0, %s146
    %s161 = sphi 0, %s147
  $region4: #{encoder_forward.2} parent=0 // loop_header_branch
    %14 = sbr.rel (%p12) target = $region8
  $region5: #{encoder_forward.2} parent=0 // loop_body
    %s16 = ssub.s32 %s11, 1
    %s17 = ssub.s32 %s11, 2
    %s18 = sadd.s32 %s11, 1
    %s20 = sadd.s32 %s19, 1
    %p23 = scmp.eq.s32.totalorder %s11, 1
    %p24 = scmp.ne.s32.totalorder %s19, %s21
    %p25 = scmp.eq.s32.totalorder %s11, 0
    %p26 = por %p24, %p25
    %p27 = scmp.ne.s32.totalorder %s19, %s21
    %p28 = scmp.eq.s32.totalorder %s16, 1
    %p29 = por %p27, %p28
    %p30 = scmp.ne.s32.totalorder %s21, %s22
    %p31 = scmp.eq.s32.totalorder %s16, 0
    %p32 = por %p30, %p31
    %p33 = scmp.ne.s32.totalorder %s21, %s22
    %p34 = scmp.eq.s32.totalorder %s17, 1
    %p35 = por %p33, %p34
    %p37 = scmp.ne.s32.totalorder %s22, %s36
    %p38 = scmp.eq.s32.totalorder %s17, 0
    %p39 = por %p37, %p38
    %s40 = ssub.s32 %s11, %s18
    %p41 = scmp.eq.s32.totalorder %s40, 0
    %s43 = sadd.s32 %s42, 1
    %s44 = scalar_select %p41, %s42, %s43
    %p47 = pneg %p41
    %p48 = scmp.eq.s32.totalorder %s11, 1
    %p49 = por %p47, %p48
    %p50 = scmp.ne.s32.totalorder %s42, %s45
    %p51 = scmp.eq.s32.totalorder %s11, 0
    %p52 = por %p50, %p51
    %p53 = scmp.ne.s32.totalorder %s42, %s45
    %p54 = scmp.eq.s32.totalorder %s16, 1
    %p55 = por %p53, %p54
    %p56 = scmp.ne.s32.totalorder %s45, %s46
    %p57 = scmp.eq.s32.totalorder %s16, 0
    %p58 = por %p56, %p57
    %p59 = scmp.ne.s32.totalorder %s45, %s46
    %p60 = scmp.eq.s32.totalorder %s17, 1
    %p61 = por %p59, %p60
    %p63 = scmp.ne.s32.totalorder %s46, %s62
    %p64 = scmp.eq.s32.totalorder %s17, 0
    %p65 = por %p63, %p64
    %s66 = ssub.s32 %s11, %s18
    %p67 = scmp.eq.s32.totalorder %s66, 0
    %s69 = sadd.s32 %s68, 1
    %s70 = scalar_select %p67, %s68, %s69
    %p73 = pneg %p67
    %p74 = scmp.eq.s32.totalorder %s11, 1
    %p75 = por %p73, %p74
    %p76 = scmp.ne.s32.totalorder %s68, %s71
    %p77 = scmp.eq.s32.totalorder %s11, 0
    %p78 = por %p76, %p77
    %p79 = scmp.ne.s32.totalorder %s68, %s71
    %p80 = scmp.eq.s32.totalorder %s16, 1
    %p81 = por %p79, %p80
    %p82 = scmp.ne.s32.totalorder %s71, %s72
    %p83 = scmp.eq.s32.totalorder %s16, 0
    %p84 = por %p82, %p83
    %p85 = scmp.ne.s32.totalorder %s71, %s72
    %p86 = scmp.eq.s32.totalorder %s17, 1
    %p87 = por %p85, %p86
    %p89 = scmp.ne.s32.totalorder %s72, %s88
    %p90 = scmp.eq.s32.totalorder %s17, 0
    %p91 = por %p89, %p90
    %s92 = ssub.s32 %s11, %s18
    %p93 = scmp.eq.s32.totalorder %s92, 0
    %s95 = sadd.s32 %s94, 1
    %s96 = scalar_select %p93, %s94, %s95
    %p99 = pneg %p93
    %p100 = scmp.eq.s32.totalorder %s11, 1
    %p101 = por %p99, %p100
    %p102 = scmp.ne.s32.totalorder %s94, %s97
    %p103 = scmp.eq.s32.totalorder %s11, 0
    %p104 = por %p102, %p103
    %p105 = scmp.ne.s32.totalorder %s94, %s97
    %p106 = scmp.eq.s32.totalorder %s16, 1
    %p107 = por %p105, %p106
    %p108 = scmp.ne.s32.totalorder %s97, %s98
    %p109 = scmp.eq.s32.totalorder %s16, 0
    %p110 = por %p108, %p109
    %p111 = scmp.ne.s32.totalorder %s97, %s98
    %p112 = scmp.eq.s32.totalorder %s17, 1
    %p113 = por %p111, %p112
    %p115 = scmp.ne.s32.totalorder %s98, %s114
    %p116 = scmp.eq.s32.totalorder %s17, 0
    %p117 = por %p115, %p116
    %s118 = ssub.s32 %s11, %s18
    %p119 = scmp.eq.s32.totalorder %s118, 0
    %s121 = sadd.s32 %s120, 1
    %s122 = scalar_select %p119, %s120, %s121
    %p125 = pneg %p119
    %p126 = scmp.eq.s32.totalorder %s11, 1
    %p127 = por %p125, %p126
    %p128 = scmp.ne.s32.totalorder %s120, %s123
    %p129 = scmp.eq.s32.totalorder %s11, 0
    %p130 = por %p128, %p129
    %p131 = scmp.ne.s32.totalorder %s120, %s123
    %p132 = scmp.eq.s32.totalorder %s16, 1
    %p133 = por %p131, %p132
    %p134 = scmp.ne.s32.totalorder %s123, %s124
    %p135 = scmp.eq.s32.totalorder %s16, 0
    %p136 = por %p134, %p135
    %p137 = scmp.ne.s32.totalorder %s123, %s124
    %p138 = scmp.eq.s32.totalorder %s17, 1
    %p139 = por %p137, %p138
    %p141 = scmp.ne.s32.totalorder %s124, %s140
    %p142 = scmp.eq.s32.totalorder %s17, 0
    %p143 = por %p141, %p142
    %s145 = sadd.s32 %s144, 1
    %p148 = scmp.eq.s32.totalorder %s11, 1
    %p149 = scmp.ne.s32.totalorder %s144, %s146
    %p150 = scmp.eq.s32.totalorder %s11, 0
    %p151 = por %p149, %p150
    %p152 = scmp.ne.s32.totalorder %s144, %s146
    %p153 = scmp.eq.s32.totalorder %s16, 1
    %p154 = por %p152, %p153
    %p155 = scmp.ne.s32.totalorder %s146, %s147
    %p156 = scmp.eq.s32.totalorder %s16, 0
    %p157 = por %p155, %p156
    %p158 = scmp.ne.s32.totalorder %s146, %s147
    %p159 = scmp.eq.s32.totalorder %s17, 1
    %p160 = por %p158, %p159
    %p162 = scmp.ne.s32.totalorder %s147, %s161
    %p163 = scmp.eq.s32.totalorder %s17, 0
    %p164 = por %p162, %p163
    %p165 = scmp.le.s32.totalorder 1, %s11
    %p166 = scmp.lt.s32.totalorder %s11, 3
    %p167 = pnand %p165, %p166
    %p168 = pneg %p167
    // Predicated region
    $region9: #{encoder_forward.2} parent=5 // pred_check
      _
    $region10: #{encoder_forward.2} parent=5 // pred_check_branch
      %170 = sbr.rel (%p167) target = $region12
    $region11: #{encoder_forward.2} parent=5 // pred_region
      %s171 = ssub.s32 %s11, 1
      // Predicated region
      $region13: #{encoder_forward.2} parent=11 // pred_check
        %p172 = pneg %p32
      $region14: #{encoder_forward.2} parent=11 // pred_check_branch
        %174 = sbr.rel (%p172) target = $region16
      $region15: #{encoder_forward.2} parent=11 // pred_region
        _
      $region16: #{encoder_forward.2} parent=11 // pred_fallthru
        _
    $region12: #{encoder_forward.2} parent=5 // pred_fallthru
      _
    %p175 = scmp.lt.s32.totalorder %s11, 2
    // Predicated region
    $region17: #{encoder_forward.2} parent=5 // pred_check
      %p176 = pneg %p175
    $region18: #{encoder_forward.2} parent=5 // pred_check_branch
      %178 = sbr.rel (%p176) target = $region20
    $region19: #{encoder_forward.2} parent=5 // pred_region
      // Predicated region
      $region21: #{encoder_forward.2} parent=19 // pred_check
        %p179 = pneg %p52
      $region22: #{encoder_forward.2} parent=19 // pred_check_branch
        %181 = sbr.rel (%p179) target = $region24
      $region23: #{encoder_forward.2} parent=19 // pred_region
        %p182 = scmp.lt.s32.totalorder %s11, 1
        %s183 = scalar_select %p182, %s11, 1
        %s184 = smul.addr %s183, 6
        %s185 = smul.addr %s184, 8
        %s186 = scalar_lea.vmem %s1, %s185
      $region24: #{encoder_forward.2} parent=19 // pred_fallthru
        _
      // Predicated region
      $region25: #{encoder_forward.2} parent=19 // pred_check
        %p187 = pneg %p78
      $region26: #{encoder_forward.2} parent=19 // pred_check_branch
        %189 = sbr.rel (%p187) target = $region28
      $region27: #{encoder_forward.2} parent=19 // pred_region
        %p190 = scmp.lt.s32.totalorder %s11, 1
        %s191 = scalar_select %p190, %s11, 1
        %s192 = smul.addr %s191, 12
        %s193 = smul.addr %s192, 8
        %s194 = scalar_lea.vmem %s2, %s193
      $region28: #{encoder_forward.2} parent=19 // pred_fallthru
        _
      // Predicated region
      $region29: #{encoder_forward.2} parent=19 // pred_check
        %p195 = pneg %p104
      $region30: #{encoder_forward.2} parent=19 // pred_check_branch
        %197 = sbr.rel (%p195) target = $region32
      $region31: #{encoder_forward.2} parent=19 // pred_region
        %p198 = scmp.lt.s32.totalorder %s11, 1
        %s199 = scalar_select %p198, %s11, 1
        %s200 = smul.addr %s199, 3
        %s201 = scalar_lea.vmem %s3, %s200
      $region32: #{encoder_forward.2} parent=19 // pred_fallthru
        _
      // Predicated region
      $region33: #{encoder_forward.2} parent=19 // pred_check
        %p202 = pneg %p130
      $region34: #{encoder_forward.2} parent=19 // pred_check_branch
        %204 = sbr.rel (%p202) target = $region36
      $region35: #{encoder_forward.2} parent=19 // pred_region
        %p205 = scmp.lt.s32.totalorder %s11, 1
        %s206 = scalar_select %p205, %s11, 1
        %s207 = scalar_lea.vmem %s4, %s206
      $region36: #{encoder_forward.2} parent=19 // pred_fallthru
        _
    $region20: #{encoder_forward.2} parent=5 // pred_fallthru
      _
    %p208 = scmp.le.s32.totalorder 1, %s11
    %p209 = scmp.lt.s32.totalorder %s11, 3
    %p210 = pnand %p208, %p209
    %p211 = pneg %p210
    // Predicated region
    $region37: #{encoder_forward.2} parent=5 // pred_check
      _
    $region38: #{encoder_forward.2} parent=5 // pred_check_branch
      %213 = sbr.rel (%p210) target = $region40
    $region39: #{encoder_forward.2} parent=5 // pred_region
      %s214 = ssub.s32 %s11, 1
      %p215 = pneg %p32
      %p216 = pneg %p29
      %p217 = scmp.lt.s32.totalorder %s16, 1
      %s218 = scalar_select %p217, %s16, 1
      %s219 = smul.addr %s218, 6
      %s220 = smul.addr %s219, 8
      %s221 = scalar_lea.vmem %s1, %s220
      %p222 = pneg %p58
      %p223 = pneg %p55
      %p224 = scmp.lt.s32.totalorder %s16, 1
      %s225 = scalar_select %p224, %s16, 1
      %s226 = smul.addr %s225, 12
      %s227 = smul.addr %s226, 8
      %s228 = scalar_lea.vmem %s2, %s227
      %p229 = pneg %p84
      %p230 = pneg %p81
      %p231 = scmp.lt.s32.totalorder %s16, 1
      %s232 = scalar_select %p231, %s16, 1
      %s233 = smul.addr %s232, 3
      %s234 = scalar_lea.vmem %s3, %s233
      %p235 = pneg %p110
      %p236 = pneg %p107
      %p237 = scmp.lt.s32.totalorder %s16, 1
      %s238 = scalar_select %p237, %s16, 1
      %s239 = scalar_lea.vmem %s4, %s238
      %p240 = pneg %p136
      %p241 = pneg %p133
      %p242 = pneg %p157
      %p243 = pneg %p154
      %p244 = scmp.lt.s32.totalorder %s16, 1
      %s245 = scalar_select %p244, %s16, 1
      %s246 = smul.addr %s245, 6
      %s247 = smul.addr %s246, 8
      %s248 = scalar_lea.vmem %s1, %s247
      %p249 = scmp.lt.s32.totalorder %s16, 1
      %s250 = scalar_select %p249, %s16, 1
      %s251 = smul.addr %s250, 12
      %s252 = smul.addr %s251, 8
      %s253 = scalar_lea.vmem %s2, %s252
      %p254 = scmp.lt.s32.totalorder %s16, 1
      %s255 = scalar_select %p254, %s16, 1
      %s256 = smul.addr %s255, 3
      %s257 = scalar_lea.vmem %s3, %s256
      %p258 = scmp.lt.s32.totalorder %s16, 1
      %s259 = scalar_select %p258, %s16, 1
      %s260 = scalar_lea.vmem %s4, %s259
      %v261 = vld [vmem:[%s0] sm:$0xff]
      %v262 = vld [vmem:[%s0 + $0x8] sm:$0xff]
      %v263 = vld [vmem:[%s0 + $0x10] sm:$0xff]
      %v264 = vld [vmem:[%s0 + $0x18] sm:$0xff]
      %v265 = vld [vmem:[%s0 + $0x20] sm:$0xff]
      %v266 = vld [vmem:[%s0 + $0x28] sm:$0xff]
      %v267 = vld [vmem:[%s0 + $0x30] sm:$0xff]
      %v268 = vld [vmem:[%s0 + $0x38] sm:$0xff]
      %v269 = vld [vmem:[%s248] sm:$0xff]
      %v270 = vld [vmem:[%s248 + $0x8] sm:$0xff]
      %v271 = vld [vmem:[%s257] sm:$0x1]
      %v273 = vperm.slane %v271, 0
      %vm275 = vcmask 130048
      %v277 = vsel %vm275, %v261, 0
      %v280 = vsel %vm275, %v262, 0
      %v283 = vsel %vm275, %v263, 0
      %v286 = vsel %vm275, %v264, 0
      %v289 = vsel %vm275, %v265, 0
      %v292 = vsel %vm275, %v266, 0
      %v295 = vsel %vm275, %v267, 0
      %v298 = vsel %vm275, %v268, 0
      %300 = vmatpush.msra.mxu0 0.0
      %301 = vmatpush.msra.mxu0 0.0
      %302 = vmatpush.msra.mxu0 0.0
      %303 = vmatpush.msra.mxu0 0.0
      %304 = vmatpush.msra.mxu0 0.0
      %305 = vmatpush.msra.mxu0 0.0
      %306 = vmatpush.msra.mxu0 0.0
      %307 = vmatpush.msra.mxu0 0.0
      %308 = vmatpush.msra.mxu0 0.0
      %309 = vmatpush.msra.mxu0 0.0
      %310 = vmatpush.msra.mxu0 0.0
      %311 = vmatpush.msra.mxu0 0.0
      %312 = vmatpush.msra.mxu0 0.0
      %313 = vmatpush.msra.mxu0 0.0
      %314 = vmatpush.msra.mxu0 %v270
      %315 = vmatpush.msra.mxu0 %v269
      %316 = vmatmul.f32.gmra.mxu0 %v277
      %v317 = vpop.f32.mrf.mxu0
      %v318 = vadd.f32 %v273, %v317
      %319 = vmatmul.f32.gmra.mxu0 %v280
      %v320 = vpop.f32.mrf.mxu0
      %v321 = vadd.f32 %v273, %v320
      %322 = vmatmul.f32.gmra.mxu0 %v283
      %v323 = vpop.f32.mrf.mxu0
      %v324 = vadd.f32 %v273, %v323
      %325 = vmatmul.f32.gmra.mxu0 %v286
      %v326 = vpop.f32.mrf.mxu0
      %v327 = vadd.f32 %v273, %v326
      %328 = vmatmul.f32.gmra.mxu0 %v289
      %v329 = vpop.f32.mrf.mxu0
      %v330 = vadd.f32 %v273, %v329
      %331 = vmatmul.f32.gmra.mxu0 %v292
      %v332 = vpop.f32.mrf.mxu0
      %v333 = vadd.f32 %v273, %v332
      %334 = vmatmul.f32.gmra.mxu0 %v295
      %v335 = vpop.f32.mrf.mxu0
      %v336 = vadd.f32 %v273, %v335
      %337 = vmatmul.f32.gmra.mxu0 %v298
      %v338 = vpop.f32.mrf.mxu0
      %v339 = vadd.f32 %v273, %v338
      %340 = vdwg.mxu0
      %vm341 = vcmask 261120
      %342 = vst.msk [vmem:[#allocation2] sm:$0xff] %vm341, %v318
      %343 = vst.msk [vmem:[#allocation2 + $0x8] sm:$0xff] %vm341, %v321
      %344 = vst.msk [vmem:[#allocation2 + $0x10] sm:$0xff] %vm341, %v324
      %345 = vst.msk [vmem:[#allocation2 + $0x18] sm:$0xff] %vm341, %v327
      %346 = vst.msk [vmem:[#allocation2 + $0x20] sm:$0xff] %vm341, %v330
      %347 = vst.msk [vmem:[#allocation2 + $0x28] sm:$0xff] %vm341, %v333
      %348 = vst.msk [vmem:[#allocation2 + $0x30] sm:$0xff] %vm341, %v336
      %349 = vst.msk [vmem:[#allocation2 + $0x38] sm:$0xff] %vm341, %v339
      %s350 = scalar_lea.vmem %s248, 16
      %v351 = vld [vmem:[%s350] sm:$0xff]
      %v352 = vld [vmem:[%s350 + $0x8] sm:$0xff]
      %s353 = scalar_lea.vmem %s257, 1
      %v354 = vld [vmem:[%s353] sm:$0x1]
      %v356 = vperm.slane %v354, 0
      %358 = vmatpush.msra.mxu0 0.0
      %359 = vmatpush.msra.mxu0 0.0
      %360 = vmatpush.msra.mxu0 0.0
      %361 = vmatpush.msra.mxu0 0.0
      %362 = vmatpush.msra.mxu0 0.0
      %363 = vmatpush.msra.mxu0 0.0
      %364 = vmatpush.msra.mxu0 0.0
      %365 = vmatpush.msra.mxu0 0.0
      %366 = vmatpush.msra.mxu0 0.0
      %367 = vmatpush.msra.mxu0 0.0
      %368 = vmatpush.msra.mxu0 0.0
      %369 = vmatpush.msra.mxu0 0.0
      %370 = vmatpush.msra.mxu0 0.0
      %371 = vmatpush.msra.mxu0 0.0
      %372 = vmatpush.msra.mxu0 %v352
      %373 = vmatpush.msra.mxu0 %v351
      %374 = vmatmul.f32.gmra.mxu0 %v277
      %v375 = vpop.f32.mrf.mxu0
      %v376 = vadd.f32 %v356, %v375
      %377 = vmatmul.f32.gmra.mxu0 %v280
      %v378 = vpop.f32.mrf.mxu0
      %v379 = vadd.f32 %v356, %v378
      %380 = vmatmul.f32.gmra.mxu0 %v283
      %v381 = vpop.f32.mrf.mxu0
      %v382 = vadd.f32 %v356, %v381
      %383 = vmatmul.f32.gmra.mxu0 %v286
      %v384 = vpop.f32.mrf.mxu0
      %v385 = vadd.f32 %v356, %v384
      %386 = vmatmul.f32.gmra.mxu0 %v289
      %v387 = vpop.f32.mrf.mxu0
      %v388 = vadd.f32 %v356, %v387
      %389 = vmatmul.f32.gmra.mxu0 %v292
      %v390 = vpop.f32.mrf.mxu0
      %v391 = vadd.f32 %v356, %v390
      %392 = vmatmul.f32.gmra.mxu0 %v295
      %v393 = vpop.f32.mrf.mxu0
      %v394 = vadd.f32 %v356, %v393
      %395 = vmatmul.f32.gmra.mxu0 %v298
      %v396 = vpop.f32.mrf.mxu0
      %v397 = vadd.f32 %v356, %v396
      %398 = vdwg.mxu0
      %399 = vst.msk [vmem:[#allocation3] sm:$0xff] %vm341, %v376
      %400 = vst.msk [vmem:[#allocation3 + $0x8] sm:$0xff] %vm341, %v379
      %401 = vst.msk [vmem:[#allocation3 + $0x10] sm:$0xff] %vm341, %v382
      %402 = vst.msk [vmem:[#allocation3 + $0x18] sm:$0xff] %vm341, %v385
      %403 = vst.msk [vmem:[#allocation3 + $0x20] sm:$0xff] %vm341, %v388
      %404 = vst.msk [vmem:[#allocation3 + $0x28] sm:$0xff] %vm341, %v391
      %405 = vst.msk [vmem:[#allocation3 + $0x30] sm:$0xff] %vm341, %v394
      %406 = vst.msk [vmem:[#allocation3 + $0x38] sm:$0xff] %vm341, %v397
      %s407 = scalar_lea.vmem %s248, 32
      %v408 = vld [vmem:[%s407] sm:$0xff]
      %v409 = vld [vmem:[%s407 + $0x8] sm:$0xff]
      %s410 = scalar_lea.vmem %s257, 2
      %v411 = vld [vmem:[%s410] sm:$0x1]
      %v413 = vperm.slane %v411, 0
      %415 = vmatpush.msra.mxu0 0.0
      %416 = vmatpush.msra.mxu0 0.0
      %417 = vmatpush.msra.mxu0 0.0
      %418 = vmatpush.msra.mxu0 0.0
      %419 = vmatpush.msra.mxu0 0.0
      %420 = vmatpush.msra.mxu0 0.0
      %421 = vmatpush.msra.mxu0 0.0
      %422 = vmatpush.msra.mxu0 0.0
      %423 = vmatpush.msra.mxu0 0.0
      %424 = vmatpush.msra.mxu0 0.0
      %425 = vmatpush.msra.mxu0 0.0
      %426 = vmatpush.msra.mxu0 0.0
      %427 = vmatpush.msra.mxu0 0.0
      %428 = vmatpush.msra.mxu0 0.0
      %429 = vmatpush.msra.mxu0 %v409
      %430 = vmatpush.msra.mxu0 %v408
      %431 = vmatmul.f32.gmra.mxu0 %v277
      %v432 = vpop.f32.mrf.mxu0
      %v433 = vadd.f32 %v413, %v432
      %434 = vmatmul.f32.gmra.mxu0 %v280
      %v435 = vpop.f32.mrf.mxu0
      %v436 = vadd.f32 %v413, %v435
      %437 = vmatmul.f32.gmra.mxu0 %v283
      %v438 = vpop.f32.mrf.mxu0
      %v439 = vadd.f32 %v413, %v438
      %440 = vmatmul.f32.gmra.mxu0 %v286
      %v441 = vpop.f32.mrf.mxu0
      %v442 = vadd.f32 %v413, %v441
      %443 = vmatmul.f32.gmra.mxu0 %v289
      %v444 = vpop.f32.mrf.mxu0
      %v445 = vadd.f32 %v413, %v444
      %446 = vmatmul.f32.gmra.mxu0 %v292
      %v447 = vpop.f32.mrf.mxu0
      %v448 = vadd.f32 %v413, %v447
      %449 = vmatmul.f32.gmra.mxu0 %v295
      %v450 = vpop.f32.mrf.mxu0
      %v451 = vadd.f32 %v413, %v450
      %452 = vmatmul.f32.gmra.mxu0 %v298
      %v453 = vpop.f32.mrf.mxu0
      %v454 = vadd.f32 %v413, %v453
      %455 = vdwg.mxu0
      %456 = vst.msk [vmem:[#allocation4] sm:$0xff] %vm341, %v433
      %457 = vst.msk [vmem:[#allocation4 + $0x8] sm:$0xff] %vm341, %v436
      %458 = vst.msk [vmem:[#allocation4 + $0x10] sm:$0xff] %vm341, %v439
      %459 = vst.msk [vmem:[#allocation4 + $0x18] sm:$0xff] %vm341, %v442
      %460 = vst.msk [vmem:[#allocation4 + $0x20] sm:$0xff] %vm341, %v445
      %461 = vst.msk [vmem:[#allocation4 + $0x28] sm:$0xff] %vm341, %v448
      %462 = vst.msk [vmem:[#allocation4 + $0x30] sm:$0xff] %vm341, %v451
      %463 = vst.msk [vmem:[#allocation4 + $0x38] sm:$0xff] %vm341, %v454
      %v464 = vld [vmem:[%s253] sm:$0xff]
      %v465 = vld [vmem:[%s253 + $0x8] sm:$0xff]
      %v466 = vld [vmem:[%s253 + $0x10] sm:$0xff]
      %v467 = vld [vmem:[%s253 + $0x18] sm:$0xff]
      %s468 = scalar_lea.vmem %s253, 32
      %v469 = vld [vmem:[%s468] sm:$0xff]
      %v470 = vld [vmem:[%s468 + $0x8] sm:$0xff]
      %v471 = vld [vmem:[%s468 + $0x10] sm:$0xff]
      %v472 = vld [vmem:[%s468 + $0x18] sm:$0xff]
      %s473 = scalar_lea.vmem %s253, 64
      %v474 = vld [vmem:[%s473] sm:$0xff]
      %v475 = vld [vmem:[%s473 + $0x8] sm:$0xff]
      %v476 = vld [vmem:[%s473 + $0x10] sm:$0xff]
      %v477 = vld [vmem:[%s473 + $0x18] sm:$0xff]
      %v478 = vld [vmem:[%s260] sm:$0x1]
      %p479 = scmp.eq.s32.totalorder %s16, 0
      %s480 = scalar_select %p479, 0, 7
      %s481 = smul.u32 %s480, 8
      %v483 = vsel %vm341, 0.0, 0
      %485 = vmatpush.msra.mxu0 0.0
      %486 = vmatpush.msra.mxu0 0.0
      %487 = vmatpush.msra.mxu0 0.0
      %488 = vmatpush.msra.mxu0 0.0
      %489 = vmatpush.msra.mxu0 0.0
      %490 = vmatpush.msra.mxu0 0.0
      %491 = vmatpush.msra.mxu0 0.0
      %492 = vmatpush.msra.mxu0 0.0
      %493 = vmatpush.msra.mxu0 0.0
      %494 = vmatpush.msra.mxu0 0.0
      %495 = vmatpush.msra.mxu0 0.0
      %496 = vmatpush.msra.mxu0 0.0
      %497 = vmatpush.msra.mxu0 %v467
      %498 = vmatpush.msra.mxu0 %v466
      %499 = vmatpush.msra.mxu0 %v465
      %500 = vmatpush.msra.mxu0 %v464
      %501 = vmatmul.f32.gmra.mxu0 %v483
      %v502 = vpop.f32.mrf.mxu0
      %v503 = vadd.f32 0.0, %v502
      %504 = vdwg.mxu0
      %505 = vmatpush.msra.mxu0 0.0
      %506 = vmatpush.msra.mxu0 0.0
      %507 = vmatpush.msra.mxu0 0.0
      %508 = vmatpush.msra.mxu0 0.0
      %509 = vmatpush.msra.mxu0 0.0
      %510 = vmatpush.msra.mxu0 0.0
      %511 = vmatpush.msra.mxu0 0.0
      %512 = vmatpush.msra.mxu0 0.0
      %513 = vmatpush.msra.mxu0 0.0
      %514 = vmatpush.msra.mxu0 0.0
      %515 = vmatpush.msra.mxu0 0.0
      %516 = vmatpush.msra.mxu0 0.0
      %517 = vmatpush.msra.mxu0 %v472
      %518 = vmatpush.msra.mxu0 %v471
      %519 = vmatpush.msra.mxu0 %v470
      %520 = vmatpush.msra.mxu0 %v469
      %521 = vmatmul.f32.gmra.mxu0 %v483
      %v522 = vpop.f32.mrf.mxu0
      %v523 = vadd.f32 0.0, %v522
      %524 = vdwg.mxu0
      %s525 = scalar_lea.vmem [#allocation2], %s481
      %v526 = vld [vmem:[%s525] sm:$0xff]
      %v527 = vadd.f32 %v526, %v503
      %v528 = vxor.u32 %v527, 2147483648
      %v529 = vmul.f32 %v528, 1.442695
      %v530 = vpow.pop %v529
      %v531 = vadd.f32 %v530, 1.0
      %v532 = vrcp.pop %v531
      %v533 = vmul.f32 %v531, %v532
      %v534 = vsub.f32 1.0, %v533
      %v535 = vmul.f32 %v532, %v534
      %v536 = vadd.f32 %v532, %v535
      %vm537 = vweird.f32 %v531
      %vm538 = vweird.f32 %v532
      %vm539 = vmor %vm537, %vm538
      %v540 = vsel %vm539, %v532, %v536
      %v541 = vand.u32 2147483647, %v531
      %vm542 = vcmp.eq.f32.partialorder %v541, 8.507059e+37
      %v543 = vand.u32 %v531, 2147483648
      %v544 = vor.u32 1.1754944e-38, %v543
      %v545 = vsel %vm542, %v544, %v540
      %v546 = vmul.f32 1.0, %v545
      %s547 = scalar_lea.vmem [#allocation3], %s481
      %v548 = vld [vmem:[%s547] sm:$0xff]
      %v549 = vadd.f32 %v548, %v523
      %v550 = vxor.u32 %v549, 2147483648
      %v551 = vmul.f32 %v550, 1.442695
      %v552 = vpow.pop %v551
      %v553 = vadd.f32 %v552, 1.0
      %v554 = vrcp.pop %v553
      %v555 = vmul.f32 %v553, %v554
      %v556 = vsub.f32 1.0, %v555
      %v557 = vmul.f32 %v554, %v556
      %v558 = vadd.f32 %v554, %v557
      %vm559 = vweird.f32 %v553
      %vm560 = vweird.f32 %v554
      %vm561 = vmor %vm559, %vm560
      %v562 = vsel %vm561, %v554, %v558
      %v563 = vand.u32 2147483647, %v553
      %vm564 = vcmp.eq.f32.partialorder %v563, 8.507059e+37
      %v565 = vand.u32 %v553, 2147483648
      %v566 = vor.u32 1.1754944e-38, %v565
      %v567 = vsel %vm564, %v566, %v562
      %v568 = vmul.f32 1.0, %v567
      %s569 = scalar_lea.vmem [#allocation4], %s481
      %v570 = vld [vmem:[%s569] sm:$0xff]
      %v572 = vperm.slane %v478, 0
      %574 = vmatpush.msra.mxu0 0.0
      %575 = vmatpush.msra.mxu0 0.0
      %576 = vmatpush.msra.mxu0 0.0
      %577 = vmatpush.msra.mxu0 0.0
      %578 = vmatpush.msra.mxu0 0.0
      %579 = vmatpush.msra.mxu0 0.0
      %580 = vmatpush.msra.mxu0 0.0
      %581 = vmatpush.msra.mxu0 0.0
      %582 = vmatpush.msra.mxu0 0.0
      %583 = vmatpush.msra.mxu0 0.0
      %584 = vmatpush.msra.mxu0 0.0
      %585 = vmatpush.msra.mxu0 0.0
      %586 = vmatpush.msra.mxu0 %v477
      %587 = vmatpush.msra.mxu0 %v476
      %588 = vmatpush.msra.mxu0 %v475
      %589 = vmatpush.msra.mxu0 %v474
      %590 = vmatmul.f32.gmra.mxu0 %v483
      %v591 = vpop.f32.mrf.mxu0
      %v592 = vadd.f32 %v572, %v591
      %593 = vdwg.mxu0
      %v594 = vmul.f32 %v546, %v592
      %v595 = vadd.f32 %v570, %v594
      %v596 = vtanh.pop %v595
      %v597 = vsub.f32 1.0, %v568
      %v598 = vmul.f32 %v597, %v596
      %v599 = vmul.f32 %v568, 0.0
      %v600 = vadd.f32 %v598, %v599
      %s601 = scalar_lea.vmem [#allocation5], %s481
      %602 = vst.msk [vmem:[%s601] sm:$0xff] %vm341, %v600
      %s603 = scalar_select %p479, 1, 6
      %s604 = smul.u32 %s603, 8
      %v606 = vsel %vm341, %v600, 0
      %608 = vmatpush.msra.mxu0 0.0
      %609 = vmatpush.msra.mxu0 0.0
      %610 = vmatpush.msra.mxu0 0.0
      %611 = vmatpush.msra.mxu0 0.0
      %612 = vmatpush.msra.mxu0 0.0
      %613 = vmatpush.msra.mxu0 0.0
      %614 = vmatpush.msra.mxu0 0.0
      %615 = vmatpush.msra.mxu0 0.0
      %616 = vmatpush.msra.mxu0 0.0
      %617 = vmatpush.msra.mxu0 0.0
      %618 = vmatpush.msra.mxu0 0.0
      %619 = vmatpush.msra.mxu0 0.0
      %620 = vmatpush.msra.mxu0 %v467
      %621 = vmatpush.msra.mxu0 %v466
      %622 = vmatpush.msra.mxu0 %v465
      %623 = vmatpush.msra.mxu0 %v464
      %624 = vmatmul.f32.gmra.mxu0 %v606
      %v625 = vpop.f32.mrf.mxu0
      %v626 = vadd.f32 0.0, %v625
      %627 = vdwg.mxu0
      %628 = vmatpush.msra.mxu0 0.0
      %629 = vmatpush.msra.mxu0 0.0
      %630 = vmatpush.msra.mxu0 0.0
      %631 = vmatpush.msra.mxu0 0.0
      %632 = vmatpush.msra.mxu0 0.0
      %633 = vmatpush.msra.mxu0 0.0
      %634 = vmatpush.msra.mxu0 0.0
      %635 = vmatpush.msra.mxu0 0.0
      %636 = vmatpush.msra.mxu0 0.0
      %637 = vmatpush.msra.mxu0 0.0
      %638 = vmatpush.msra.mxu0 0.0
      %639 = vmatpush.msra.mxu0 0.0
      %640 = vmatpush.msra.mxu0 %v472
      %641 = vmatpush.msra.mxu0 %v471
      %642 = vmatpush.msra.mxu0 %v470
      %643 = vmatpush.msra.mxu0 %v469
      %644 = vmatmul.f32.gmra.mxu0 %v606
      %v645 = vpop.f32.mrf.mxu0
      %v646 = vadd.f32 0.0, %v645
      %647 = vdwg.mxu0
      %s648 = scalar_lea.vmem [#allocation2], %s604
      %v649 = vld [vmem:[%s648] sm:$0xff]
      %v650 = vadd.f32 %v649, %v626
      %v651 = vxor.u32 %v650, 2147483648
      %v652 = vmul.f32 %v651, 1.442695
      %v653 = vpow.pop %v652
      %v654 = vadd.f32 %v653, 1.0
      %v655 = vrcp.pop %v654
      %v656 = vmul.f32 %v654, %v655
      %v657 = vsub.f32 1.0, %v656
      %v658 = vmul.f32 %v655, %v657
      %v659 = vadd.f32 %v655, %v658
      %vm660 = vweird.f32 %v654
      %vm661 = vweird.f32 %v655
      %vm662 = vmor %vm660, %vm661
      %v663 = vsel %vm662, %v655, %v659
      %v664 = vand.u32 2147483647, %v654
      %vm665 = vcmp.eq.f32.partialorder %v664, 8.507059e+37
      %v666 = vand.u32 %v654, 2147483648
      %v667 = vor.u32 1.1754944e-38, %v666
      %v668 = vsel %vm665, %v667, %v663
      %v669 = vmul.f32 1.0, %v668
      %s670 = scalar_lea.vmem [#allocation3], %s604
      %v671 = vld [vmem:[%s670] sm:$0xff]
      %v672 = vadd.f32 %v671, %v646
      %v673 = vxor.u32 %v672, 2147483648
      %v674 = vmul.f32 %v673, 1.442695
      %v675 = vpow.pop %v674
      %v676 = vadd.f32 %v675, 1.0
      %v677 = vrcp.pop %v676
      %v678 = vmul.f32 %v676, %v677
      %v679 = vsub.f32 1.0, %v678
      %v680 = vmul.f32 %v677, %v679
      %v681 = vadd.f32 %v677, %v680
      %vm682 = vweird.f32 %v676
      %vm683 = vweird.f32 %v677
      %vm684 = vmor %vm682, %vm683
      %v685 = vsel %vm684, %v677, %v681
      %v686 = vand.u32 2147483647, %v676
      %vm687 = vcmp.eq.f32.partialorder %v686, 8.507059e+37
      %v688 = vand.u32 %v676, 2147483648
      %v689 = vor.u32 1.1754944e-38, %v688
      %v690 = vsel %vm687, %v689, %v685
      %v691 = vmul.f32 1.0, %v690
      %s692 = scalar_lea.vmem [#allocation4], %s604
      %v693 = vld [vmem:[%s692] sm:$0xff]
      %694 = vmatpush.msra.mxu0 0.0
      %695 = vmatpush.msra.mxu0 0.0
      %696 = vmatpush.msra.mxu0 0.0
      %697 = vmatpush.msra.mxu0 0.0
      %698 = vmatpush.msra.mxu0 0.0
      %699 = vmatpush.msra.mxu0 0.0
      %700 = vmatpush.msra.mxu0 0.0
      %701 = vmatpush.msra.mxu0 0.0
      %702 = vmatpush.msra.mxu0 0.0
      %703 = vmatpush.msra.mxu0 0.0
      %704 = vmatpush.msra.mxu0 0.0
      %705 = vmatpush.msra.mxu0 0.0
      %706 = vmatpush.msra.mxu0 %v477
      %707 = vmatpush.msra.mxu0 %v476
      %708 = vmatpush.msra.mxu0 %v475
      %709 = vmatpush.msra.mxu0 %v474
      %710 = vmatmul.f32.gmra.mxu0 %v606
      %v711 = vpop.f32.mrf.mxu0
      %v712 = vadd.f32 %v572, %v711
      %713 = vdwg.mxu0
      %v714 = vmul.f32 %v669, %v712
      %v715 = vadd.f32 %v693, %v714
      %v716 = vtanh.pop %v715
      %v717 = vsub.f32 1.0, %v691
      %v718 = vmul.f32 %v717, %v716
      %v719 = vmul.f32 %v691, %v600
      %v720 = vadd.f32 %v718, %v719
      %s721 = scalar_lea.vmem [#allocation5], %s604
      %722 = vst.msk [vmem:[%s721] sm:$0xff] %vm341, %v720
      %s723 = scalar_select %p479, 2, 5
      %s724 = smul.u32 %s723, 8
      %v726 = vsel %vm341, %v720, 0
      %728 = vmatpush.msra.mxu0 0.0
      %729 = vmatpush.msra.mxu0 0.0
      %730 = vmatpush.msra.mxu0 0.0
      %731 = vmatpush.msra.mxu0 0.0
      %732 = vmatpush.msra.mxu0 0.0
      %733 = vmatpush.msra.mxu0 0.0
      %734 = vmatpush.msra.mxu0 0.0
      %735 = vmatpush.msra.mxu0 0.0
      %736 = vmatpush.msra.mxu0 0.0
      %737 = vmatpush.msra.mxu0 0.0
      %738 = vmatpush.msra.mxu0 0.0
      %739 = vmatpush.msra.mxu0 0.0
      %740 = vmatpush.msra.mxu0 %v467
      %741 = vmatpush.msra.mxu0 %v466
      %742 = vmatpush.msra.mxu0 %v465
      %743 = vmatpush.msra.mxu0 %v464
      %744 = vmatmul.f32.gmra.mxu0 %v726
      %v745 = vpop.f32.mrf.mxu0
      %v746 = vadd.f32 0.0, %v745
      %747 = vdwg.mxu0
      %748 = vmatpush.msra.mxu0 0.0
      %749 = vmatpush.msra.mxu0 0.0
      %750 = vmatpush.msra.mxu0 0.0
      %751 = vmatpush.msra.mxu0 0.0
      %752 = vmatpush.msra.mxu0 0.0
      %753 = vmatpush.msra.mxu0 0.0
      %754 = vmatpush.msra.mxu0 0.0
      %755 = vmatpush.msra.mxu0 0.0
      %756 = vmatpush.msra.mxu0 0.0
      %757 = vmatpush.msra.mxu0 0.0
      %758 = vmatpush.msra.mxu0 0.0
      %759 = vmatpush.msra.mxu0 0.0
      %760 = vmatpush.msra.mxu0 %v472
      %761 = vmatpush.msra.mxu0 %v471
      %762 = vmatpush.msra.mxu0 %v470
      %763 = vmatpush.msra.mxu0 %v469
      %764 = vmatmul.f32.gmra.mxu0 %v726
      %v765 = vpop.f32.mrf.mxu0
      %v766 = vadd.f32 0.0, %v765
      %767 = vdwg.mxu0
      %s768 = scalar_lea.vmem [#allocation2], %s724
      %v769 = vld [vmem:[%s768] sm:$0xff]
      %v770 = vadd.f32 %v769, %v746
      %v771 = vxor.u32 %v770, 2147483648
      %v772 = vmul.f32 %v771, 1.442695
      %v773 = vpow.pop %v772
      %v774 = vadd.f32 %v773, 1.0
      %v775 = vrcp.pop %v774
      %v776 = vmul.f32 %v774, %v775
      %v777 = vsub.f32 1.0, %v776
      %v778 = vmul.f32 %v775, %v777
      %v779 = vadd.f32 %v775, %v778
      %vm780 = vweird.f32 %v774
      %vm781 = vweird.f32 %v775
      %vm782 = vmor %vm780, %vm781
      %v783 = vsel %vm782, %v775, %v779
      %v784 = vand.u32 2147483647, %v774
      %vm785 = vcmp.eq.f32.partialorder %v784, 8.507059e+37
      %v786 = vand.u32 %v774, 2147483648
      %v787 = vor.u32 1.1754944e-38, %v786
      %v788 = vsel %vm785, %v787, %v783
      %v789 = vmul.f32 1.0, %v788
      %s790 = scalar_lea.vmem [#allocation3], %s724
      %v791 = vld [vmem:[%s790] sm:$0xff]
      %v792 = vadd.f32 %v791, %v766
      %v793 = vxor.u32 %v792, 2147483648
      %v794 = vmul.f32 %v793, 1.442695
      %v795 = vpow.pop %v794
      %v796 = vadd.f32 %v795, 1.0
      %v797 = vrcp.pop %v796
      %v798 = vmul.f32 %v796, %v797
      %v799 = vsub.f32 1.0, %v798
      %v800 = vmul.f32 %v797, %v799
      %v801 = vadd.f32 %v797, %v800
      %vm802 = vweird.f32 %v796
      %vm803 = vweird.f32 %v797
      %vm804 = vmor %vm802, %vm803
      %v805 = vsel %vm804, %v797, %v801
      %v806 = vand.u32 2147483647, %v796
      %vm807 = vcmp.eq.f32.partialorder %v806, 8.507059e+37
      %v808 = vand.u32 %v796, 2147483648
      %v809 = vor.u32 1.1754944e-38, %v808
      %v810 = vsel %vm807, %v809, %v805
      %v811 = vmul.f32 1.0, %v810
      %s812 = scalar_lea.vmem [#allocation4], %s724
      %v813 = vld [vmem:[%s812] sm:$0xff]
      %814 = vmatpush.msra.mxu0 0.0
      %815 = vmatpush.msra.mxu0 0.0
      %816 = vmatpush.msra.mxu0 0.0
      %817 = vmatpush.msra.mxu0 0.0
      %818 = vmatpush.msra.mxu0 0.0
      %819 = vmatpush.msra.mxu0 0.0
      %820 = vmatpush.msra.mxu0 0.0
      %821 = vmatpush.msra.mxu0 0.0
      %822 = vmatpush.msra.mxu0 0.0
      %823 = vmatpush.msra.mxu0 0.0
      %824 = vmatpush.msra.mxu0 0.0
      %825 = vmatpush.msra.mxu0 0.0
      %826 = vmatpush.msra.mxu0 %v477
      %827 = vmatpush.msra.mxu0 %v476
      %828 = vmatpush.msra.mxu0 %v475
      %829 = vmatpush.msra.mxu0 %v474
      %830 = vmatmul.f32.gmra.mxu0 %v726
      %v831 = vpop.f32.mrf.mxu0
      %v832 = vadd.f32 %v572, %v831
      %833 = vdwg.mxu0
      %v834 = vmul.f32 %v789, %v832
      %v835 = vadd.f32 %v813, %v834
      %v836 = vtanh.pop %v835
      %v837 = vsub.f32 1.0, %v811
      %v838 = vmul.f32 %v837, %v836
      %v839 = vmul.f32 %v811, %v720
      %v840 = vadd.f32 %v838, %v839
      %s841 = scalar_lea.vmem [#allocation5], %s724
      %842 = vst.msk [vmem:[%s841] sm:$0xff] %vm341, %v840
      %s843 = scalar_select %p479, 3, 4
      %s844 = smul.u32 %s843, 8
      %v846 = vsel %vm341, %v840, 0
      %848 = vmatpush.msra.mxu0 0.0
      %849 = vmatpush.msra.mxu0 0.0
      %850 = vmatpush.msra.mxu0 0.0
      %851 = vmatpush.msra.mxu0 0.0
      %852 = vmatpush.msra.mxu0 0.0
      %853 = vmatpush.msra.mxu0 0.0
      %854 = vmatpush.msra.mxu0 0.0
      %855 = vmatpush.msra.mxu0 0.0
      %856 = vmatpush.msra.mxu0 0.0
      %857 = vmatpush.msra.mxu0 0.0
      %858 = vmatpush.msra.mxu0 0.0
      %859 = vmatpush.msra.mxu0 0.0
      %860 = vmatpush.msra.mxu0 %v467
      %861 = vmatpush.msra.mxu0 %v466
      %862 = vmatpush.msra.mxu0 %v465
      %863 = vmatpush.msra.mxu0 %v464
      %864 = vmatmul.f32.gmra.mxu0 %v846
      %v865 = vpop.f32.mrf.mxu0
      %v866 = vadd.f32 0.0, %v865
      %867 = vdwg.mxu0
      %868 = vmatpush.msra.mxu0 0.0
      %869 = vmatpush.msra.mxu0 0.0
      %870 = vmatpush.msra.mxu0 0.0
      %871 = vmatpush.msra.mxu0 0.0
      %872 = vmatpush.msra.mxu0 0.0
      %873 = vmatpush.msra.mxu0 0.0
      %874 = vmatpush.msra.mxu0 0.0
      %875 = vmatpush.msra.mxu0 0.0
      %876 = vmatpush.msra.mxu0 0.0
      %877 = vmatpush.msra.mxu0 0.0
      %878 = vmatpush.msra.mxu0 0.0
      %879 = vmatpush.msra.mxu0 0.0
      %880 = vmatpush.msra.mxu0 %v472
      %881 = vmatpush.msra.mxu0 %v471
      %882 = vmatpush.msra.mxu0 %v470
      %883 = vmatpush.msra.mxu0 %v469
      %884 = vmatmul.f32.gmra.mxu0 %v846
      %v885 = vpop.f32.mrf.mxu0
      %v886 = vadd.f32 0.0, %v885
      %887 = vdwg.mxu0
      %s888 = scalar_lea.vmem [#allocation2], %s844
      %v889 = vld [vmem:[%s888] sm:$0xff]
      %v890 = vadd.f32 %v889, %v866
      %v891 = vxor.u32 %v890, 2147483648
      %v892 = vmul.f32 %v891, 1.442695
      %v893 = vpow.pop %v892
      %v894 = vadd.f32 %v893, 1.0
      %v895 = vrcp.pop %v894
      %v896 = vmul.f32 %v894, %v895
      %v897 = vsub.f32 1.0, %v896
      %v898 = vmul.f32 %v895, %v897
      %v899 = vadd.f32 %v895, %v898
      %vm900 = vweird.f32 %v894
      %vm901 = vweird.f32 %v895
      %vm902 = vmor %vm900, %vm901
      %v903 = vsel %vm902, %v895, %v899
      %v904 = vand.u32 2147483647, %v894
      %vm905 = vcmp.eq.f32.partialorder %v904, 8.507059e+37
      %v906 = vand.u32 %v894, 2147483648
      %v907 = vor.u32 1.1754944e-38, %v906
      %v908 = vsel %vm905, %v907, %v903
      %v909 = vmul.f32 1.0, %v908
      %s910 = scalar_lea.vmem [#allocation3], %s844
      %v911 = vld [vmem:[%s910] sm:$0xff]
      %v912 = vadd.f32 %v911, %v886
      %v913 = vxor.u32 %v912, 2147483648
      %v914 = vmul.f32 %v913, 1.442695
      %v915 = vpow.pop %v914
      %v916 = vadd.f32 %v915, 1.0
      %v917 = vrcp.pop %v916
      %v918 = vmul.f32 %v916, %v917
      %v919 = vsub.f32 1.0, %v918
      %v920 = vmul.f32 %v917, %v919
      %v921 = vadd.f32 %v917, %v920
      %vm922 = vweird.f32 %v916
      %vm923 = vweird.f32 %v917
      %vm924 = vmor %vm922, %vm923
      %v925 = vsel %vm924, %v917, %v921
      %v926 = vand.u32 2147483647, %v916
      %vm927 = vcmp.eq.f32.partialorder %v926, 8.507059e+37
      %v928 = vand.u32 %v916, 2147483648
      %v929 = vor.u32 1.1754944e-38, %v928
      %v930 = vsel %vm927, %v929, %v925
      %v931 = vmul.f32 1.0, %v930
      %s932 = scalar_lea.vmem [#allocation4], %s844
      %v933 = vld [vmem:[%s932] sm:$0xff]
      %934 = vmatpush.msra.mxu0 0.0
      %935 = vmatpush.msra.mxu0 0.0
      %936 = vmatpush.msra.mxu0 0.0
      %937 = vmatpush.msra.mxu0 0.0
      %938 = vmatpush.msra.mxu0 0.0
      %939 = vmatpush.msra.mxu0 0.0
      %940 = vmatpush.msra.mxu0 0.0
      %941 = vmatpush.msra.mxu0 0.0
      %942 = vmatpush.msra.mxu0 0.0
      %943 = vmatpush.msra.mxu0 0.0
      %944 = vmatpush.msra.mxu0 0.0
      %945 = vmatpush.msra.mxu0 0.0
      %946 = vmatpush.msra.mxu0 %v477
      %947 = vmatpush.msra.mxu0 %v476
      %948 = vmatpush.msra.mxu0 %v475
      %949 = vmatpush.msra.mxu0 %v474
      %950 = vmatmul.f32.gmra.mxu0 %v846
      %v951 = vpop.f32.mrf.mxu0
      %v952 = vadd.f32 %v572, %v951
      %953 = vdwg.mxu0
      %v954 = vmul.f32 %v909, %v952
      %v955 = vadd.f32 %v933, %v954
      %v956 = vtanh.pop %v955
      %v957 = vsub.f32 1.0, %v931
      %v958 = vmul.f32 %v957, %v956
      %v959 = vmul.f32 %v931, %v840
      %v960 = vadd.f32 %v958, %v959
      %s961 = scalar_lea.vmem [#allocation5], %s844
      %962 = vst.msk [vmem:[%s961] sm:$0xff] %vm341, %v960
      %s963 = scalar_select %p479, 4, 3
      %s964 = smul.u32 %s963, 8
      %v966 = vsel %vm341, %v960, 0
      %968 = vmatpush.msra.mxu0 0.0
      %969 = vmatpush.msra.mxu0 0.0
      %970 = vmatpush.msra.mxu0 0.0
      %971 = vmatpush.msra.mxu0 0.0
      %972 = vmatpush.msra.mxu0 0.0
      %973 = vmatpush.msra.mxu0 0.0
      %974 = vmatpush.msra.mxu0 0.0
      %975 = vmatpush.msra.mxu0 0.0
      %976 = vmatpush.msra.mxu0 0.0
      %977 = vmatpush.msra.mxu0 0.0
      %978 = vmatpush.msra.mxu0 0.0
      %979 = vmatpush.msra.mxu0 0.0
      %980 = vmatpush.msra.mxu0 %v467
      %981 = vmatpush.msra.mxu0 %v466
      %982 = vmatpush.msra.mxu0 %v465
      %983 = vmatpush.msra.mxu0 %v464
      %984 = vmatmul.f32.gmra.mxu0 %v966
      %v985 = vpop.f32.mrf.mxu0
      %v986 = vadd.f32 0.0, %v985
      %987 = vdwg.mxu0
      %988 = vmatpush.msra.mxu0 0.0
      %989 = vmatpush.msra.mxu0 0.0
      %990 = vmatpush.msra.mxu0 0.0
      %991 = vmatpush.msra.mxu0 0.0
      %992 = vmatpush.msra.mxu0 0.0
      %993 = vmatpush.msra.mxu0 0.0
      %994 = vmatpush.msra.mxu0 0.0
      %995 = vmatpush.msra.mxu0 0.0
      %996 = vmatpush.msra.mxu0 0.0
      %997 = vmatpush.msra.mxu0 0.0
      %998 = vmatpush.msra.mxu0 0.0
      %999 = vmatpush.msra.mxu0 0.0
      %1000 = vmatpush.msra.mxu0 %v472
      %1001 = vmatpush.msra.mxu0 %v471
      %1002 = vmatpush.msra.mxu0 %v470
      %1003 = vmatpush.msra.mxu0 %v469
      %1004 = vmatmul.f32.gmra.mxu0 %v966
      %v1005 = vpop.f32.mrf.mxu0
      %v1006 = vadd.f32 0.0, %v1005
      %1007 = vdwg.mxu0
      %s1008 = scalar_lea.vmem [#allocation2], %s964
      %v1009 = vld [vmem:[%s1008] sm:$0xff]
      %v1010 = vadd.f32 %v1009, %v986
      %v1011 = vxor.u32 %v1010, 2147483648
      %v1012 = vmul.f32 %v1011, 1.442695
      %v1013 = vpow.pop %v1012
      %v1014 = vadd.f32 %v1013, 1.0
      %v1015 = vrcp.pop %v1014
      %v1016 = vmul.f32 %v1014, %v1015
      %v1017 = vsub.f32 1.0, %v1016
      %v1018 = vmul.f32 %v1015, %v1017
      %v1019 = vadd.f32 %v1015, %v1018
      %vm1020 = vweird.f32 %v1014
      %vm1021 = vweird.f32 %v1015
      %vm1022 = vmor %vm1020, %vm1021
      %v1023 = vsel %vm1022, %v1015, %v1019
      %v1024 = vand.u32 2147483647, %v1014
      %vm1025 = vcmp.eq.f32.partialorder %v1024, 8.507059e+37
      %v1026 = vand.u32 %v1014, 2147483648
      %v1027 = vor.u32 1.1754944e-38, %v1026
      %v1028 = vsel %vm1025, %v1027, %v1023
      %v1029 = vmul.f32 1.0, %v1028
      %s1030 = scalar_lea.vmem [#allocation3], %s964
      %v1031 = vld [vmem:[%s1030] sm:$0xff]
      %v1032 = vadd.f32 %v1031, %v1006
      %v1033 = vxor.u32 %v1032, 2147483648
      %v1034 = vmul.f32 %v1033, 1.442695
      %v1035 = vpow.pop %v1034
      %v1036 = vadd.f32 %v1035, 1.0
      %v1037 = vrcp.pop %v1036
      %v1038 = vmul.f32 %v1036, %v1037
      %v1039 = vsub.f32 1.0, %v1038
      %v1040 = vmul.f32 %v1037, %v1039
      %v1041 = vadd.f32 %v1037, %v1040
      %vm1042 = vweird.f32 %v1036
      %vm1043 = vweird.f32 %v1037
      %vm1044 = vmor %vm1042, %vm1043
      %v1045 = vsel %vm1044, %v1037, %v1041
      %v1046 = vand.u32 2147483647, %v1036
      %vm1047 = vcmp.eq.f32.partialorder %v1046, 8.507059e+37
      %v1048 = vand.u32 %v1036, 2147483648
      %v1049 = vor.u32 1.1754944e-38, %v1048
      %v1050 = vsel %vm1047, %v1049, %v1045
      %v1051 = vmul.f32 1.0, %v1050
      %s1052 = scalar_lea.vmem [#allocation4], %s964
      %v1053 = vld [vmem:[%s1052] sm:$0xff]
      %1054 = vmatpush.msra.mxu0 0.0
      %1055 = vmatpush.msra.mxu0 0.0
      %1056 = vmatpush.msra.mxu0 0.0
      %1057 = vmatpush.msra.mxu0 0.0
      %1058 = vmatpush.msra.mxu0 0.0
      %1059 = vmatpush.msra.mxu0 0.0
      %1060 = vmatpush.msra.mxu0 0.0
      %1061 = vmatpush.msra.mxu0 0.0
      %1062 = vmatpush.msra.mxu0 0.0
      %1063 = vmatpush.msra.mxu0 0.0
      %1064 = vmatpush.msra.mxu0 0.0
      %1065 = vmatpush.msra.mxu0 0.0
      %1066 = vmatpush.msra.mxu0 %v477
      %1067 = vmatpush.msra.mxu0 %v476
      %1068 = vmatpush.msra.mxu0 %v475
      %1069 = vmatpush.msra.mxu0 %v474
      %1070 = vmatmul.f32.gmra.mxu0 %v966
      %v1071 = vpop.f32.mrf.mxu0
      %v1072 = vadd.f32 %v572, %v1071
      %1073 = vdwg.mxu0
      %v1074 = vmul.f32 %v1029, %v1072
      %v1075 = vadd.f32 %v1053, %v1074
      %v1076 = vtanh.pop %v1075
      %v1077 = vsub.f32 1.0, %v1051
      %v1078 = vmul.f32 %v1077, %v1076
      %v1079 = vmul.f32 %v1051, %v960
      %v1080 = vadd.f32 %v1078, %v1079
      %s1081 = scalar_lea.vmem [#allocation5], %s964
      %1082 = vst.msk [vmem:[%s1081] sm:$0xff] %vm341, %v1080
      %s1083 = scalar_select %p479, 5, 2
      %s1084 = smul.u32 %s1083, 8
      %v1086 = vsel %vm341, %v1080, 0
      %1088 = vmatpush.msra.mxu0 0.0
      %1089 = vmatpush.msra.mxu0 0.0
      %1090 = vmatpush.msra.mxu0 0.0
      %1091 = vmatpush.msra.mxu0 0.0
      %1092 = vmatpush.msra.mxu0 0.0
      %1093 = vmatpush.msra.mxu0 0.0
      %1094 = vmatpush.msra.mxu0 0.0
      %1095 = vmatpush.msra.mxu0 0.0
      %1096 = vmatpush.msra.mxu0 0.0
      %1097 = vmatpush.msra.mxu0 0.0
      %1098 = vmatpush.msra.mxu0 0.0
      %1099 = vmatpush.msra.mxu0 0.0
      %1100 = vmatpush.msra.mxu0 %v467
      %1101 = vmatpush.msra.mxu0 %v466
      %1102 = vmatpush.msra.mxu0 %v465
      %1103 = vmatpush.msra.mxu0 %v464
      %1104 = vmatmul.f32.gmra.mxu0 %v1086
      %v1105 = vpop.f32.mrf.mxu0
      %v1106 = vadd.f32 0.0, %v1105
      %1107 = vdwg.mxu0
      %1108 = vmatpush.msra.mxu0 0.0
      %1109 = vmatpush.msra.mxu0 0.0
      %1110 = vmatpush.msra.mxu0 0.0
      %1111 = vmatpush.msra.mxu0 0.0
      %1112 = vmatpush.msra.mxu0 0.0
      %1113 = vmatpush.msra.mxu0 0.0
      %1114 = vmatpush.msra.mxu0 0.0
      %1115 = vmatpush.msra.mxu0 0.0
      %1116 = vmatpush.msra.mxu0 0.0
      %1117 = vmatpush.msra.mxu0 0.0
      %1118 = vmatpush.msra.mxu0 0.0
      %1119 = vmatpush.msra.mxu0 0.0
      %1120 = vmatpush.msra.mxu0 %v472
      %1121 = vmatpush.msra.mxu0 %v471
      %1122 = vmatpush.msra.mxu0 %v470
      %1123 = vmatpush.msra.mxu0 %v469
      %1124 = vmatmul.f32.gmra.mxu0 %v1086
      %v1125 = vpop.f32.mrf.mxu0
      %v1126 = vadd.f32 0.0, %v1125
      %1127 = vdwg.mxu0
      %s1128 = scalar_lea.vmem [#allocation2], %s1084
      %v1129 = vld [vmem:[%s1128] sm:$0xff]
      %v1130 = vadd.f32 %v1129, %v1106
      %v1131 = vxor.u32 %v1130, 2147483648
      %v1132 = vmul.f32 %v1131, 1.442695
      %v1133 = vpow.pop %v1132
      %v1134 = vadd.f32 %v1133, 1.0
      %v1135 = vrcp.pop %v1134
      %v1136 = vmul.f32 %v1134, %v1135
      %v1137 = vsub.f32 1.0, %v1136
      %v1138 = vmul.f32 %v1135, %v1137
      %v1139 = vadd.f32 %v1135, %v1138
      %vm1140 = vweird.f32 %v1134
      %vm1141 = vweird.f32 %v1135
      %vm1142 = vmor %vm1140, %vm1141
      %v1143 = vsel %vm1142, %v1135, %v1139
      %v1144 = vand.u32 2147483647, %v1134
      %vm1145 = vcmp.eq.f32.partialorder %v1144, 8.507059e+37
      %v1146 = vand.u32 %v1134, 2147483648
      %v1147 = vor.u32 1.1754944e-38, %v1146
      %v1148 = vsel %vm1145, %v1147, %v1143
      %v1149 = vmul.f32 1.0, %v1148
      %s1150 = scalar_lea.vmem [#allocation3], %s1084
      %v1151 = vld [vmem:[%s1150] sm:$0xff]
      %v1152 = vadd.f32 %v1151, %v1126
      %v1153 = vxor.u32 %v1152, 2147483648
      %v1154 = vmul.f32 %v1153, 1.442695
      %v1155 = vpow.pop %v1154
      %v1156 = vadd.f32 %v1155, 1.0
      %v1157 = vrcp.pop %v1156
      %v1158 = vmul.f32 %v1156, %v1157
      %v1159 = vsub.f32 1.0, %v1158
      %v1160 = vmul.f32 %v1157, %v1159
      %v1161 = vadd.f32 %v1157, %v1160
      %vm1162 = vweird.f32 %v1156
      %vm1163 = vweird.f32 %v1157
      %vm1164 = vmor %vm1162, %vm1163
      %v1165 = vsel %vm1164, %v1157, %v1161
      %v1166 = vand.u32 2147483647, %v1156
      %vm1167 = vcmp.eq.f32.partialorder %v1166, 8.507059e+37
      %v1168 = vand.u32 %v1156, 2147483648
      %v1169 = vor.u32 1.1754944e-38, %v1168
      %v1170 = vsel %vm1167, %v1169, %v1165
      %v1171 = vmul.f32 1.0, %v1170
      %s1172 = scalar_lea.vmem [#allocation4], %s1084
      %v1173 = vld [vmem:[%s1172] sm:$0xff]
      %1174 = vmatpush.msra.mxu0 0.0
      %1175 = vmatpush.msra.mxu0 0.0
      %1176 = vmatpush.msra.mxu0 0.0
      %1177 = vmatpush.msra.mxu0 0.0
      %1178 = vmatpush.msra.mxu0 0.0
      %1179 = vmatpush.msra.mxu0 0.0
      %1180 = vmatpush.msra.mxu0 0.0
      %1181 = vmatpush.msra.mxu0 0.0
      %1182 = vmatpush.msra.mxu0 0.0
      %1183 = vmatpush.msra.mxu0 0.0
      %1184 = vmatpush.msra.mxu0 0.0
      %1185 = vmatpush.msra.mxu0 0.0
      %1186 = vmatpush.msra.mxu0 %v477
      %1187 = vmatpush.msra.mxu0 %v476
      %1188 = vmatpush.msra.mxu0 %v475
      %1189 = vmatpush.msra.mxu0 %v474
      %1190 = vmatmul.f32.gmra.mxu0 %v1086
      %v1191 = vpop.f32.mrf.mxu0
      %v1192 = vadd.f32 %v572, %v1191
      %1193 = vdwg.mxu0
      %v1194 = vmul.f32 %v1149, %v1192
      %v1195 = vadd.f32 %v1173, %v1194
      %v1196 = vtanh.pop %v1195
      %v1197 = vsub.f32 1.0, %v1171
      %v1198 = vmul.f32 %v1197, %v1196
      %v1199 = vmul.f32 %v1171, %v1080
      %v1200 = vadd.f32 %v1198, %v1199
      %s1201 = scalar_lea.vmem [#allocation5], %s1084
      %1202 = vst.msk [vmem:[%s1201] sm:$0xff] %vm341, %v1200
      %s1203 = scalar_select %p479, 6, 1
      %s1204 = smul.u32 %s1203, 8
      %v1206 = vsel %vm341, %v1200, 0
      %1208 = vmatpush.msra.mxu0 0.0
      %1209 = vmatpush.msra.mxu0 0.0
      %1210 = vmatpush.msra.mxu0 0.0
      %1211 = vmatpush.msra.mxu0 0.0
      %1212 = vmatpush.msra.mxu0 0.0
      %1213 = vmatpush.msra.mxu0 0.0
      %1214 = vmatpush.msra.mxu0 0.0
      %1215 = vmatpush.msra.mxu0 0.0
      %1216 = vmatpush.msra.mxu0 0.0
      %1217 = vmatpush.msra.mxu0 0.0
      %1218 = vmatpush.msra.mxu0 0.0
      %1219 = vmatpush.msra.mxu0 0.0
      %1220 = vmatpush.msra.mxu0 %v467
      %1221 = vmatpush.msra.mxu0 %v466
      %1222 = vmatpush.msra.mxu0 %v465
      %1223 = vmatpush.msra.mxu0 %v464
      %1224 = vmatmul.f32.gmra.mxu0 %v1206
      %v1225 = vpop.f32.mrf.mxu0
      %v1226 = vadd.f32 0.0, %v1225
      %1227 = vdwg.mxu0
      %1228 = vmatpush.msra.mxu0 0.0
      %1229 = vmatpush.msra.mxu0 0.0
      %1230 = vmatpush.msra.mxu0 0.0
      %1231 = vmatpush.msra.mxu0 0.0
      %1232 = vmatpush.msra.mxu0 0.0
      %1233 = vmatpush.msra.mxu0 0.0
      %1234 = vmatpush.msra.mxu0 0.0
      %1235 = vmatpush.msra.mxu0 0.0
      %1236 = vmatpush.msra.mxu0 0.0
      %1237 = vmatpush.msra.mxu0 0.0
      %1238 = vmatpush.msra.mxu0 0.0
      %1239 = vmatpush.msra.mxu0 0.0
      %1240 = vmatpush.msra.mxu0 %v472
      %1241 = vmatpush.msra.mxu0 %v471
      %1242 = vmatpush.msra.mxu0 %v470
      %1243 = vmatpush.msra.mxu0 %v469
      %1244 = vmatmul.f32.gmra.mxu0 %v1206
      %v1245 = vpop.f32.mrf.mxu0
      %v1246 = vadd.f32 0.0, %v1245
      %1247 = vdwg.mxu0
      %s1248 = scalar_lea.vmem [#allocation2], %s1204
      %v1249 = vld [vmem:[%s1248] sm:$0xff]
      %v1250 = vadd.f32 %v1249, %v1226
      %v1251 = vxor.u32 %v1250, 2147483648
      %v1252 = vmul.f32 %v1251, 1.442695
      %v1253 = vpow.pop %v1252
      %v1254 = vadd.f32 %v1253, 1.0
      %v1255 = vrcp.pop %v1254
      %v1256 = vmul.f32 %v1254, %v1255
      %v1257 = vsub.f32 1.0, %v1256
      %v1258 = vmul.f32 %v1255, %v1257
      %v1259 = vadd.f32 %v1255, %v1258
      %vm1260 = vweird.f32 %v1254
      %vm1261 = vweird.f32 %v1255
      %vm1262 = vmor %vm1260, %vm1261
      %v1263 = vsel %vm1262, %v1255, %v1259
      %v1264 = vand.u32 2147483647, %v1254
      %vm1265 = vcmp.eq.f32.partialorder %v1264, 8.507059e+37
      %v1266 = vand.u32 %v1254, 2147483648
      %v1267 = vor.u32 1.1754944e-38, %v1266
      %v1268 = vsel %vm1265, %v1267, %v1263
      %v1269 = vmul.f32 1.0, %v1268
      %s1270 = scalar_lea.vmem [#allocation3], %s1204
      %v1271 = vld [vmem:[%s1270] sm:$0xff]
      %v1272 = vadd.f32 %v1271, %v1246
      %v1273 = vxor.u32 %v1272, 2147483648
      %v1274 = vmul.f32 %v1273, 1.442695
      %v1275 = vpow.pop %v1274
      %v1276 = vadd.f32 %v1275, 1.0
      %v1277 = vrcp.pop %v1276
      %v1278 = vmul.f32 %v1276, %v1277
      %v1279 = vsub.f32 1.0, %v1278
      %v1280 = vmul.f32 %v1277, %v1279
      %v1281 = vadd.f32 %v1277, %v1280
      %vm1282 = vweird.f32 %v1276
      %vm1283 = vweird.f32 %v1277
      %vm1284 = vmor %vm1282, %vm1283
      %v1285 = vsel %vm1284, %v1277, %v1281
      %v1286 = vand.u32 2147483647, %v1276
      %vm1287 = vcmp.eq.f32.partialorder %v1286, 8.507059e+37
      %v1288 = vand.u32 %v1276, 2147483648
      %v1289 = vor.u32 1.1754944e-38, %v1288
      %v1290 = vsel %vm1287, %v1289, %v1285
      %v1291 = vmul.f32 1.0, %v1290
      %s1292 = scalar_lea.vmem [#allocation4], %s1204
      %v1293 = vld [vmem:[%s1292] sm:$0xff]
      %1294 = vmatpush.msra.mxu0 0.0
      %1295 = vmatpush.msra.mxu0 0.0
      %1296 = vmatpush.msra.mxu0 0.0
      %1297 = vmatpush.msra.mxu0 0.0
      %1298 = vmatpush.msra.mxu0 0.0
      %1299 = vmatpush.msra.mxu0 0.0
      %1300 = vmatpush.msra.mxu0 0.0
      %1301 = vmatpush.msra.mxu0 0.0
      %1302 = vmatpush.msra.mxu0 0.0
      %1303 = vmatpush.msra.mxu0 0.0
      %1304 = vmatpush.msra.mxu0 0.0
      %1305 = vmatpush.msra.mxu0 0.0
      %1306 = vmatpush.msra.mxu0 %v477
      %1307 = vmatpush.msra.mxu0 %v476
      %1308 = vmatpush.msra.mxu0 %v475
      %1309 = vmatpush.msra.mxu0 %v474
      %1310 = vmatmul.f32.gmra.mxu0 %v1206
      %v1311 = vpop.f32.mrf.mxu0
      %v1312 = vadd.f32 %v572, %v1311
      %1313 = vdwg.mxu0
      %v1314 = vmul.f32 %v1269, %v1312
      %v1315 = vadd.f32 %v1293, %v1314
      %v1316 = vtanh.pop %v1315
      %v1317 = vsub.f32 1.0, %v1291
      %v1318 = vmul.f32 %v1317, %v1316
      %v1319 = vmul.f32 %v1291, %v1200
      %v1320 = vadd.f32 %v1318, %v1319
      %s1321 = scalar_lea.vmem [#allocation5], %s1204
      %1322 = vst.msk [vmem:[%s1321] sm:$0xff] %vm341, %v1320
      %s1323 = scalar_select %p479, 7, 0
      %s1324 = smul.u32 %s1323, 8
      %v1326 = vsel %vm341, %v1320, 0
      %1328 = vmatpush.msra.mxu0 0.0
      %1329 = vmatpush.msra.mxu0 0.0
      %1330 = vmatpush.msra.mxu0 0.0
      %1331 = vmatpush.msra.mxu0 0.0
      %1332 = vmatpush.msra.mxu0 0.0
      %1333 = vmatpush.msra.mxu0 0.0
      %1334 = vmatpush.msra.mxu0 0.0
      %1335 = vmatpush.msra.mxu0 0.0
      %1336 = vmatpush.msra.mxu0 0.0
      %1337 = vmatpush.msra.mxu0 0.0
      %1338 = vmatpush.msra.mxu0 0.0
      %1339 = vmatpush.msra.mxu0 0.0
      %1340 = vmatpush.msra.mxu0 %v467
      %1341 = vmatpush.msra.mxu0 %v466
      %1342 = vmatpush.msra.mxu0 %v465
      %1343 = vmatpush.msra.mxu0 %v464
      %1344 = vmatmul.f32.gmra.mxu0 %v1326
      %v1345 = vpop.f32.mrf.mxu0
      %v1346 = vadd.f32 0.0, %v1345
      %1347 = vdwg.mxu0
      %1348 = vmatpush.msra.mxu0 0.0
      %1349 = vmatpush.msra.mxu0 0.0
      %1350 = vmatpush.msra.mxu0 0.0
      %1351 = vmatpush.msra.mxu0 0.0
      %1352 = vmatpush.msra.mxu0 0.0
      %1353 = vmatpush.msra.mxu0 0.0
      %1354 = vmatpush.msra.mxu0 0.0
      %1355 = vmatpush.msra.mxu0 0.0
      %1356 = vmatpush.msra.mxu0 0.0
      %1357 = vmatpush.msra.mxu0 0.0
      %1358 = vmatpush.msra.mxu0 0.0
      %1359 = vmatpush.msra.mxu0 0.0
      %1360 = vmatpush.msra.mxu0 %v472
      %1361 = vmatpush.msra.mxu0 %v471
      %1362 = vmatpush.msra.mxu0 %v470
      %1363 = vmatpush.msra.mxu0 %v469
      %1364 = vmatmul.f32.gmra.mxu0 %v1326
      %v1365 = vpop.f32.mrf.mxu0
      %v1366 = vadd.f32 0.0, %v1365
      %1367 = vdwg.mxu0
      %s1368 = scalar_lea.vmem [#allocation2], %s1324
      %v1369 = vld [vmem:[%s1368] sm:$0xff]
      %v1370 = vadd.f32 %v1369, %v1346
      %v1371 = vxor.u32 %v1370, 2147483648
      %v1372 = vmul.f32 %v1371, 1.442695
      %v1373 = vpow.pop %v1372
      %v1374 = vadd.f32 %v1373, 1.0
      %v1375 = vrcp.pop %v1374
      %v1376 = vmul.f32 %v1374, %v1375
      %v1377 = vsub.f32 1.0, %v1376
      %v1378 = vmul.f32 %v1375, %v1377
      %v1379 = vadd.f32 %v1375, %v1378
      %vm1380 = vweird.f32 %v1374
      %vm1381 = vweird.f32 %v1375
      %vm1382 = vmor %vm1380, %vm1381
      %v1383 = vsel %vm1382, %v1375, %v1379
      %v1384 = vand.u32 2147483647, %v1374
      %vm1385 = vcmp.eq.f32.partialorder %v1384, 8.507059e+37
      %v1386 = vand.u32 %v1374, 2147483648
      %v1387 = vor.u32 1.1754944e-38, %v1386
      %v1388 = vsel %vm1385, %v1387, %v1383
      %v1389 = vmul.f32 1.0, %v1388
      %s1390 = scalar_lea.vmem [#allocation3], %s1324
      %v1391 = vld [vmem:[%s1390] sm:$0xff]
      %v1392 = vadd.f32 %v1391, %v1366
      %v1393 = vxor.u32 %v1392, 2147483648
      %v1394 = vmul.f32 %v1393, 1.442695
      %v1395 = vpow.pop %v1394
      %v1396 = vadd.f32 %v1395, 1.0
      %v1397 = vrcp.pop %v1396
      %v1398 = vmul.f32 %v1396, %v1397
      %v1399 = vsub.f32 1.0, %v1398
      %v1400 = vmul.f32 %v1397, %v1399
      %v1401 = vadd.f32 %v1397, %v1400
      %vm1402 = vweird.f32 %v1396
      %vm1403 = vweird.f32 %v1397
      %vm1404 = vmor %vm1402, %vm1403
      %v1405 = vsel %vm1404, %v1397, %v1401
      %v1406 = vand.u32 2147483647, %v1396
      %vm1407 = vcmp.eq.f32.partialorder %v1406, 8.507059e+37
      %v1408 = vand.u32 %v1396, 2147483648
      %v1409 = vor.u32 1.1754944e-38, %v1408
      %v1410 = vsel %vm1407, %v1409, %v1405
      %v1411 = vmul.f32 1.0, %v1410
      %s1412 = scalar_lea.vmem [#allocation4], %s1324
      %v1413 = vld [vmem:[%s1412] sm:$0xff]
      %1414 = vmatpush.msra.mxu0 0.0
      %1415 = vmatpush.msra.mxu0 0.0
      %1416 = vmatpush.msra.mxu0 0.0
      %1417 = vmatpush.msra.mxu0 0.0
      %1418 = vmatpush.msra.mxu0 0.0
      %1419 = vmatpush.msra.mxu0 0.0
      %1420 = vmatpush.msra.mxu0 0.0
      %1421 = vmatpush.msra.mxu0 0.0
      %1422 = vmatpush.msra.mxu0 0.0
      %1423 = vmatpush.msra.mxu0 0.0
      %1424 = vmatpush.msra.mxu0 0.0
      %1425 = vmatpush.msra.mxu0 0.0
      %1426 = vmatpush.msra.mxu0 %v477
      %1427 = vmatpush.msra.mxu0 %v476
      %1428 = vmatpush.msra.mxu0 %v475
      %1429 = vmatpush.msra.mxu0 %v474
      %1430 = vmatmul.f32.gmra.mxu0 %v1326
      %v1431 = vpop.f32.mrf.mxu0
      %v1432 = vadd.f32 %v572, %v1431
      %1433 = vdwg.mxu0
      %v1434 = vmul.f32 %v1389, %v1432
      %v1435 = vadd.f32 %v1413, %v1434
      %v1436 = vtanh.pop %v1435
      %v1437 = vsub.f32 1.0, %v1411
      %v1438 = vmul.f32 %v1437, %v1436
      %v1439 = vmul.f32 %v1411, %v1320
      %v1440 = vadd.f32 %v1438, %v1439
      %s1441 = scalar_lea.vmem [#allocation5], %s1324
      %1442 = vst.msk [vmem:[%s1441] sm:$0xff] %vm341, %v1440
      // Predicated region
      $region41: #{encoder_forward.2} parent=39 // pred_check
        %p1443 = pneg %p479
      $region42: #{encoder_forward.2} parent=39 // pred_check_branch
        %1445 = sbr.rel (%p1443) target = $region44
      $region43: #{encoder_forward.2} parent=39 // pred_region
        %v1446 = vld [vmem:[#allocation5] sm:$0xff]
        %v1447 = vld [vmem:[#allocation5 + $0x8] sm:$0xff]
        %v1448 = vld [vmem:[#allocation5 + $0x10] sm:$0xff]
        %v1449 = vld [vmem:[#allocation5 + $0x18] sm:$0xff]
        %v1450 = vld [vmem:[#allocation5 + $0x20] sm:$0xff]
        %v1451 = vld [vmem:[#allocation5 + $0x28] sm:$0xff]
        %v1452 = vld [vmem:[#allocation5 + $0x30] sm:$0xff]
        %v1453 = vld [vmem:[#allocation5 + $0x38] sm:$0xff]
        %1454 = vst.msk [vmem:[%s5] sm:$0xff] %vm341, %v1446
        %1455 = vst.msk [vmem:[%s5 + $0x8] sm:$0xff] %vm341, %v1447
        %1456 = vst.msk [vmem:[%s5 + $0x10] sm:$0xff] %vm341, %v1448
        %1457 = vst.msk [vmem:[%s5 + $0x18] sm:$0xff] %vm341, %v1449
        %1458 = vst.msk [vmem:[%s5 + $0x20] sm:$0xff] %vm341, %v1450
        %1459 = vst.msk [vmem:[%s5 + $0x28] sm:$0xff] %vm341, %v1451
        %1460 = vst.msk [vmem:[%s5 + $0x30] sm:$0xff] %vm341, %v1452
        %1461 = vst.msk [vmem:[%s5 + $0x38] sm:$0xff] %vm341, %v1453
      $region44: #{encoder_forward.2} parent=39 // pred_fallthru
        _
      %p1462 = scmp.eq.s32.totalorder %s16, 1
      // Predicated region
      $region45: #{encoder_forward.2} parent=39 // pred_check
        %p1463 = pneg %p1462
      $region46: #{encoder_forward.2} parent=39 // pred_check_branch
        %1465 = sbr.rel (%p1463) target = $region48
      $region47: #{encoder_forward.2} parent=39 // pred_region
        %v1466 = vld [vmem:[#allocation5] sm:$0xff]
        %v1467 = vld [vmem:[#allocation5 + $0x8] sm:$0xff]
        %v1468 = vld [vmem:[#allocation5 + $0x10] sm:$0xff]
        %v1469 = vld [vmem:[#allocation5 + $0x18] sm:$0xff]
        %v1470 = vld [vmem:[#allocation5 + $0x20] sm:$0xff]
        %v1471 = vld [vmem:[#allocation5 + $0x28] sm:$0xff]
        %v1472 = vld [vmem:[#allocation5 + $0x30] sm:$0xff]
        %v1473 = vld [vmem:[#allocation5 + $0x38] sm:$0xff]
        %1482 = vrot.lane.b32.xlu0 %v1466, 32
        %v1483 = vpop.permute.xlu0 %1482
        %1484 = vrot.lane.b32.xlu0 %v1467, 32
        %v1485 = vpop.permute.xlu0 %1484
        %1486 = vrot.lane.b32.xlu0 %v1468, 32
        %v1487 = vpop.permute.xlu0 %1486
        %1488 = vrot.lane.b32.xlu0 %v1469, 32
        %v1489 = vpop.permute.xlu0 %1488
        %1490 = vrot.lane.b32.xlu0 %v1470, 32
        %v1491 = vpop.permute.xlu0 %1490
        %1492 = vrot.lane.b32.xlu0 %v1471, 32
        %v1493 = vpop.permute.xlu0 %1492
        %1494 = vrot.lane.b32.xlu0 %v1472, 32
        %v1495 = vpop.permute.xlu0 %1494
        %1496 = vrot.lane.b32.xlu0 %v1473, 32
        %v1497 = vpop.permute.xlu0 %1496
        %vm1506 = vcmask 523520
        %1507 = vst.msk [vmem:[%s5] sm:$0xff] %vm1506, %v1483
        %1508 = vst.msk [vmem:[%s5 + $0x8] sm:$0xff] %vm1506, %v1485
        %1509 = vst.msk [vmem:[%s5 + $0x10] sm:$0xff] %vm1506, %v1487
        %1510 = vst.msk [vmem:[%s5 + $0x18] sm:$0xff] %vm1506, %v1489
        %1511 = vst.msk [vmem:[%s5 + $0x20] sm:$0xff] %vm1506, %v1491
        %1512 = vst.msk [vmem:[%s5 + $0x28] sm:$0xff] %vm1506, %v1493
        %1513 = vst.msk [vmem:[%s5 + $0x30] sm:$0xff] %vm1506, %v1495
        %1514 = vst.msk [vmem:[%s5 + $0x38] sm:$0xff] %vm1506, %v1497
      $region48: #{encoder_forward.2} parent=39 // pred_fallthru
        _
      // Predicated region
      $region49: #{encoder_forward.2} parent=39 // pred_check
        %p1515 = pneg %p154
      $region50: #{encoder_forward.2} parent=39 // pred_check_branch
        %1517 = sbr.rel (%p1515) target = $region52
      $region51: #{encoder_forward.2} parent=39 // pred_region
        _
      $region52: #{encoder_forward.2} parent=39 // pred_fallthru
        _
      // Predicated region
      $region53: #{encoder_forward.2} parent=39 // pred_check
        %p1518 = pneg %p154
      $region54: #{encoder_forward.2} parent=39 // pred_check_branch
        %1520 = sbr.rel (%p1518) target = $region56
      $region55: #{encoder_forward.2} parent=39 // pred_region
        _
      $region56: #{encoder_forward.2} parent=39 // pred_fallthru
        _
    $region40: #{encoder_forward.2} parent=5 // pred_fallthru
      _
    %p1521 = scmp.le.s32.totalorder 2, %s11
    // Predicated region
    $region57: #{encoder_forward.2} parent=5 // pred_check
      %p1522 = pneg %p1521
    $region58: #{encoder_forward.2} parent=5 // pred_check_branch
      %1524 = sbr.rel (%p1522) target = $region60
    $region59: #{encoder_forward.2} parent=5 // pred_region
      %s1525 = ssub.s32 %s11, 2
    $region60: #{encoder_forward.2} parent=5 // pred_fallthru
      _
  $region6: #{encoder_forward.2} parent=0 // loop_footer
    %s15 = sadd.s32 1, %s11
  $region7: #{encoder_forward.2} parent=0 // loop_footer_branch
    %10 = sbr.rel target = $region3
  $region8: #{encoder_forward.2} parent=0 // loop_exit
    _

// kernel: encoder_forward.3
$region0: #{encoder_forward.3}
  #allocation0 [shape = 'u32[]', space=smem, size = 0x4, offset = 0x4, fixed_abs, tag = 'smem constant byte address 0x4 - core index']
  #allocation1 [shape = 'u32[72,128]{1,0:T(1,128)}', space=vmem, size = 0x9000, scoped, tag = 'internal scratch']
  #allocation2 [shape = 'f32[64,32]{1,0:T(8,128)}', space=vmem, size = 0x8000, scoped, tag = 'scratch operand']
  #allocation3 [shape = 'f32[64,32]{1,0:T(8,128)}', space=vmem, size = 0x8000, scoped, tag = 'scratch operand']
  #allocation4 [shape = 'f32[64,32]{1,0:T(8,128)}', space=vmem, size = 0x8000, scoped, tag = 'scratch operand']
  #allocation5 [shape = 'f32[64,32]{1,0:T(8,128)}', space=vmem, size = 0x8000, scoped, tag = 'scratch operand']
  #allocation6 [shape = 'f32[8,32]{1,0:T(8,128)}', space=vmem, size = 0x1000, scoped, tag = 'scratch operand']
  %s0 = inlined_call_operand.vmem [shape: f32[64,64], index: 0, kind: input, shape index: {}]
  %s1 = inlined_call_operand.vmem [shape: f32[2,3,64,32], index: 1, kind: input, shape index: {}]
  %s2 = inlined_call_operand.vmem [shape: f32[2,3,32,32], index: 2, kind: input, shape index: {}]
  %s3 = inlined_call_operand.vmem [shape: f32[2,3,1,32], index: 3, kind: input, shape index: {}]
  %s4 = inlined_call_operand.vmem [shape: f32[2,1,32], index: 4, kind: input, shape index: {}]
  %s5 = inlined_call_operand.vmem [shape: f32[2,32,32], index: 5, kind: input, shape index: {}]
  %s6 = inlined_call_operand.vmem [shape: f32[1,32], index: 6, kind: input, shape index: {}]
  %s7 = inlined_call_operand.vmem [shape: f32[64,64], index: 7, kind: output, shape index: {0}]
  %s8 = inlined_call_operand.vmem [shape: f32[8,32], index: 8, kind: output, shape index: {1}]
  %9 = xla_tuple %s7, %s8
  %s10 = sld [smem:[#allocation0]]
  $region77: #{encoder_forward.3} parent=0
    _
  %s12 = ssub.s32 1, %s10
  %s13 = scalar_select 0, %s12, %s10
  loop: start=0, step=1, limit=4
  $region2: #{encoder_forward.3} parent=0 // loop_pre_header
    _
  $region3: #{encoder_forward.3} parent=0 // loop_header
    %s15 = sphi 0, %s19
    %p16 = scmp.ge.s32.totalorder %s15, 4
    %s23 = sphi 0, %s23
    %s25 = sphi 0, %s23
    %s26 = sphi 0, %s25
    %s40 = sphi 0, %s26
    %s46 = sphi 0, %s48
    %s49 = sphi 0, %s46
    %s50 = sphi 0, %s49
    %s66 = sphi 0, %s50
    %s72 = sphi 0, %s74
    %s75 = sphi 0, %s72
    %s76 = sphi 0, %s75
    %s92 = sphi 0, %s76
    %s98 = sphi 0, %s100
    %s101 = sphi 0, %s98
    %s102 = sphi 0, %s101
    %s118 = sphi 0, %s102
    %s124 = sphi 0, %s126
    %s127 = sphi 0, %s124
    %s128 = sphi 0, %s127
    %s144 = sphi 0, %s128
    %s148 = sphi 0, %s148
    %s150 = sphi 0, %s148
    %s151 = sphi 0, %s150
    %s165 = sphi 0, %s151
    %s169 = sphi 0, %s169
    %s171 = sphi 0, %s169
    %s172 = sphi 0, %s171
    %s186 = sphi 0, %s172
    %s190 = sphi 0, %s190
    %s192 = sphi 0, %s190
    %s193 = sphi 0, %s192
    %s207 = sphi 0, %s193
    %s211 = sphi 0, %s211
    %s213 = sphi 0, %s211
    %s214 = sphi 0, %s213
    %s228 = sphi 0, %s214
  $region4: #{encoder_forward.3} parent=0 // loop_header_branch
    %18 = sbr.rel (%p16) target = $region8
  $region5: #{encoder_forward.3} parent=0 // loop_body
    %s20 = ssub.s32 %s15, 1
    %s21 = ssub.s32 %s15, 2
    %s22 = sadd.s32 %s15, 1
    %s24 = sadd.s32 %s23, 1
    %p27 = scmp.eq.s32.totalorder %s15, 1
    %p28 = scmp.ne.s32.totalorder %s23, %s25
    %p29 = scmp.eq.s32.totalorder %s15, 0
    %p30 = por %p28, %p29
    %p31 = scmp.ne.s32.totalorder %s23, %s25
    %p32 = scmp.eq.s32.totalorder %s20, 1
    %p33 = por %p31, %p32
    %p34 = scmp.ne.s32.totalorder %s25, %s26
    %p35 = scmp.eq.s32.totalorder %s20, 0
    %p36 = por %p34, %p35
    %p37 = scmp.ne.s32.totalorder %s25, %s26
    %p38 = scmp.eq.s32.totalorder %s21, 1
    %p39 = por %p37, %p38
    %p41 = scmp.ne.s32.totalorder %s26, %s40
    %p42 = scmp.eq.s32.totalorder %s21, 0
    %p43 = por %p41, %p42
    %s44 = ssub.s32 %s15, %s22
    %p45 = scmp.eq.s32.totalorder %s44, 0
    %s47 = sadd.s32 %s46, 1
    %s48 = scalar_select %p45, %s46, %s47
    %p51 = pneg %p45
    %p52 = scmp.eq.s32.totalorder %s15, 1
    %p53 = por %p51, %p52
    %p54 = scmp.ne.s32.totalorder %s46, %s49
    %p55 = scmp.eq.s32.totalorder %s15, 0
    %p56 = por %p54, %p55
    %p57 = scmp.ne.s32.totalorder %s46, %s49
    %p58 = scmp.eq.s32.totalorder %s20, 1
    %p59 = por %p57, %p58
    %p60 = scmp.ne.s32.totalorder %s49, %s50
    %p61 = scmp.eq.s32.totalorder %s20, 0
    %p62 = por %p60, %p61
    %p63 = scmp.ne.s32.totalorder %s49, %s50
    %p64 = scmp.eq.s32.totalorder %s21, 1
    %p65 = por %p63, %p64
    %p67 = scmp.ne.s32.totalorder %s50, %s66
    %p68 = scmp.eq.s32.totalorder %s21, 0
    %p69 = por %p67, %p68
    %s70 = ssub.s32 %s15, %s22
    %p71 = scmp.eq.s32.totalorder %s70, 0
    %s73 = sadd.s32 %s72, 1
    %s74 = scalar_select %p71, %s72, %s73
    %p77 = pneg %p71
    %p78 = scmp.eq.s32.totalorder %s15, 1
    %p79 = por %p77, %p78
    %p80 = scmp.ne.s32.totalorder %s72, %s75
    %p81 = scmp.eq.s32.totalorder %s15, 0
    %p82 = por %p80, %p81
    %p83 = scmp.ne.s32.totalorder %s72, %s75
    %p84 = scmp.eq.s32.totalorder %s20, 1
    %p85 = por %p83, %p84
    %p86 = scmp.ne.s32.totalorder %s75, %s76
    %p87 = scmp.eq.s32.totalorder %s20, 0
    %p88 = por %p86, %p87
    %p89 = scmp.ne.s32.totalorder %s75, %s76
    %p90 = scmp.eq.s32.totalorder %s21, 1
    %p91 = por %p89, %p90
    %p93 = scmp.ne.s32.totalorder %s76, %s92
    %p94 = scmp.eq.s32.totalorder %s21, 0
    %p95 = por %p93, %p94
    %s96 = ssub.s32 %s15, %s22
    %p97 = scmp.eq.s32.totalorder %s96, 0
    %s99 = sadd.s32 %s98, 1
    %s100 = scalar_select %p97, %s98, %s99
    %p103 = pneg %p97
    %p104 = scmp.eq.s32.totalorder %s15, 1
    %p105 = por %p103, %p104
    %p106 = scmp.ne.s32.totalorder %s98, %s101
    %p107 = scmp.eq.s32.totalorder %s15, 0
    %p108 = por %p106, %p107
    %p109 = scmp.ne.s32.totalorder %s98, %s101
    %p110 = scmp.eq.s32.totalorder %s20, 1
    %p111 = por %p109, %p110
    %p112 = scmp.ne.s32.totalorder %s101, %s102
    %p113 = scmp.eq.s32.totalorder %s20, 0
    %p114 = por %p112, %p113
    %p115 = scmp.ne.s32.totalorder %s101, %s102
    %p116 = scmp.eq.s32.totalorder %s21, 1
    %p117 = por %p115, %p116
    %p119 = scmp.ne.s32.totalorder %s102, %s118
    %p120 = scmp.eq.s32.totalorder %s21, 0
    %p121 = por %p119, %p120
    %s122 = ssub.s32 %s15, %s22
    %p123 = scmp.eq.s32.totalorder %s122, 0
    %s125 = sadd.s32 %s124, 1
    %s126 = scalar_select %p123, %s124, %s125
    %p129 = pneg %p123
    %p130 = scmp.eq.s32.totalorder %s15, 1
    %p131 = por %p129, %p130
    %p132 = scmp.ne.s32.totalorder %s124, %s127
    %p133 = scmp.eq.s32.totalorder %s15, 0
    %p134 = por %p132, %p133
    %p135 = scmp.ne.s32.totalorder %s124, %s127
    %p136 = scmp.eq.s32.totalorder %s20, 1
    %p137 = por %p135, %p136
    %p138 = scmp.ne.s32.totalorder %s127, %s128
    %p139 = scmp.eq.s32.totalorder %s20, 0
    %p140 = por %p138, %p139
    %p141 = scmp.ne.s32.totalorder %s127, %s128
    %p142 = scmp.eq.s32.totalorder %s21, 1
    %p143 = por %p141, %p142
    %p145 = scmp.ne.s32.totalorder %s128, %s144
    %p146 = scmp.eq.s32.totalorder %s21, 0
    %p147 = por %p145, %p146
    %s149 = sadd.s32 %s148, 1
    %p152 = scmp.eq.s32.totalorder %s15, 1
    %p153 = scmp.ne.s32.totalorder %s148, %s150
    %p154 = scmp.eq.s32.totalorder %s15, 0
    %p155 = por %p153, %p154
    %p156 = scmp.ne.s32.totalorder %s148, %s150
    %p157 = scmp.eq.s32.totalorder %s20, 1
    %p158 = por %p156, %p157
    %p159 = scmp.ne.s32.totalorder %s150, %s151
    %p160 = scmp.eq.s32.totalorder %s20, 0
    %p161 = por %p159, %p160
    %p162 = scmp.ne.s32.totalorder %s150, %s151
    %p163 = scmp.eq.s32.totalorder %s21, 1
    %p164 = por %p162, %p163
    %p166 = scmp.ne.s32.totalorder %s151, %s165
    %p167 = scmp.eq.s32.totalorder %s21, 0
    %p168 = por %p166, %p167
    %s170 = sadd.s32 %s169, 1
    %p173 = scmp.eq.s32.totalorder %s15, 1
    %p174 = scmp.ne.s32.totalorder %s169, %s171
    %p175 = scmp.eq.s32.totalorder %s15, 0
    %p176 = por %p174, %p175
    %p177 = scmp.ne.s32.totalorder %s169, %s171
    %p178 = scmp.eq.s32.totalorder %s20, 1
    %p179 = por %p177, %p178
    %p180 = scmp.ne.s32.totalorder %s171, %s172
    %p181 = scmp.eq.s32.totalorder %s20, 0
    %p182 = por %p180, %p181
    %p183 = scmp.ne.s32.totalorder %s171, %s172
    %p184 = scmp.eq.s32.totalorder %s21, 1
    %p185 = por %p183, %p184
    %p187 = scmp.ne.s32.totalorder %s172, %s186
    %p188 = scmp.eq.s32.totalorder %s21, 0
    %p189 = por %p187, %p188
    %s191 = sadd.s32 %s190, 1
    %p194 = scmp.eq.s32.totalorder %s15, 1
    %p195 = scmp.ne.s32.totalorder %s190, %s192
    %p196 = scmp.eq.s32.totalorder %s15, 0
    %p197 = por %p195, %p196
    %p198 = scmp.ne.s32.totalorder %s190, %s192
    %p199 = scmp.eq.s32.totalorder %s20, 1
    %p200 = por %p198, %p199
    %p201 = scmp.ne.s32.totalorder %s192, %s193
    %p202 = scmp.eq.s32.totalorder %s20, 0
    %p203 = por %p201, %p202
    %p204 = scmp.ne.s32.totalorder %s192, %s193
    %p205 = scmp.eq.s32.totalorder %s21, 1
    %p206 = por %p204, %p205
    %p208 = scmp.ne.s32.totalorder %s193, %s207
    %p209 = scmp.eq.s32.totalorder %s21, 0
    %p210 = por %p208, %p209
    %s212 = sadd.s32 %s211, 1
    %p215 = scmp.eq.s32.totalorder %s15, 1
    %p216 = scmp.ne.s32.totalorder %s211, %s213
    %p217 = scmp.eq.s32.totalorder %s15, 0
    %p218 = por %p216, %p217
    %p219 = scmp.ne.s32.totalorder %s211, %s213
    %p220 = scmp.eq.s32.totalorder %s20, 1
    %p221 = por %p219, %p220
    %p222 = scmp.ne.s32.totalorder %s213, %s214
    %p223 = scmp.eq.s32.totalorder %s20, 0
    %p224 = por %p222, %p223
    %p225 = scmp.ne.s32.totalorder %s213, %s214
    %p226 = scmp.eq.s32.totalorder %s21, 1
    %p227 = por %p225, %p226
    %p229 = scmp.ne.s32.totalorder %s214, %s228
    %p230 = scmp.eq.s32.totalorder %s21, 0
    %p231 = por %p229, %p230
    %p232 = scmp.le.s32.totalorder 1, %s15
    %p233 = scmp.lt.s32.totalorder %s15, 3
    %p234 = pnand %p232, %p233
    %p235 = pneg %p234
    // Predicated region
    $region9: #{encoder_forward.3} parent=5 // pred_check
      _
    $region10: #{encoder_forward.3} parent=5 // pred_check_branch
      %237 = sbr.rel (%p234) target = $region12
    $region11: #{encoder_forward.3} parent=5 // pred_region
      %s238 = ssub.s32 %s15, 1
      // Predicated region
      $region13: #{encoder_forward.3} parent=11 // pred_check
        %p239 = pneg %p36
      $region14: #{encoder_forward.3} parent=11 // pred_check_branch
        %241 = sbr.rel (%p239) target = $region16
      $region15: #{encoder_forward.3} parent=11 // pred_region
        _
      $region16: #{encoder_forward.3} parent=11 // pred_fallthru
        _
      // Predicated region
      $region17: #{encoder_forward.3} parent=11 // pred_check
        %p242 = pneg %p161
      $region18: #{encoder_forward.3} parent=11 // pred_check_branch
        %244 = sbr.rel (%p242) target = $region20
      $region19: #{encoder_forward.3} parent=11 // pred_region
        _
      $region20: #{encoder_forward.3} parent=11 // pred_fallthru
        _
      // Predicated region
      $region21: #{encoder_forward.3} parent=11 // pred_check
        %p245 = pneg %p182
      $region22: #{encoder_forward.3} parent=11 // pred_check_branch
        %247 = sbr.rel (%p245) target = $region24
      $region23: #{encoder_forward.3} parent=11 // pred_region
        _
      $region24: #{encoder_forward.3} parent=11 // pred_fallthru
        _
    $region12: #{encoder_forward.3} parent=5 // pred_fallthru
      _
    %p248 = scmp.lt.s32.totalorder %s15, 2
    // Predicated region
    $region25: #{encoder_forward.3} parent=5 // pred_check
      %p249 = pneg %p248
    $region26: #{encoder_forward.3} parent=5 // pred_check_branch
      %251 = sbr.rel (%p249) target = $region28
    $region27: #{encoder_forward.3} parent=5 // pred_region
      // Predicated region
      $region29: #{encoder_forward.3} parent=27 // pred_check
        %p252 = pneg %p56
      $region30: #{encoder_forward.3} parent=27 // pred_check_branch
        %254 = sbr.rel (%p252) target = $region32
      $region31: #{encoder_forward.3} parent=27 // pred_region
        %p255 = scmp.lt.s32.totalorder %s15, 1
        %s256 = scalar_select %p255, %s15, 1
        %s257 = smul.addr %s256, 24
        %s258 = smul.addr %s257, 8
        %s259 = scalar_lea.vmem %s1, %s258
      $region32: #{encoder_forward.3} parent=27 // pred_fallthru
        _
      // Predicated region
      $region33: #{encoder_forward.3} parent=27 // pred_check
        %p260 = pneg %p82
      $region34: #{encoder_forward.3} parent=27 // pred_check_branch
        %262 = sbr.rel (%p260) target = $region36
      $region35: #{encoder_forward.3} parent=27 // pred_region
        %p263 = scmp.lt.s32.totalorder %s15, 1
        %s264 = scalar_select %p263, %s15, 1
        %s265 = smul.addr %s264, 12
        %s266 = smul.addr %s265, 8
        %s267 = scalar_lea.vmem %s2, %s266
      $region36: #{encoder_forward.3} parent=27 // pred_fallthru
        _
      // Predicated region
      $region37: #{encoder_forward.3} parent=27 // pred_check
        %p268 = pneg %p108
      $region38: #{encoder_forward.3} parent=27 // pred_check_branch
        %270 = sbr.rel (%p268) target = $region40
      $region39: #{encoder_forward.3} parent=27 // pred_region
        %p271 = scmp.lt.s32.totalorder %s15, 1
        %s272 = scalar_select %p271, %s15, 1
        %s273 = smul.addr %s272, 3
        %s274 = scalar_lea.vmem %s3, %s273
      $region40: #{encoder_forward.3} parent=27 // pred_fallthru
        _
      // Predicated region
      $region41: #{encoder_forward.3} parent=27 // pred_check
        %p275 = pneg %p134
      $region42: #{encoder_forward.3} parent=27 // pred_check_branch
        %277 = sbr.rel (%p275) target = $region44
      $region43: #{encoder_forward.3} parent=27 // pred_region
        %p278 = scmp.lt.s32.totalorder %s15, 1
        %s279 = scalar_select %p278, %s15, 1
        %s280 = scalar_lea.vmem %s4, %s279
      $region44: #{encoder_forward.3} parent=27 // pred_fallthru
        _
    $region28: #{encoder_forward.3} parent=5 // pred_fallthru
      _
    %p281 = scmp.le.s32.totalorder 1, %s15
    %p282 = scmp.lt.s32.totalorder %s15, 3
    %p283 = pnand %p281, %p282
    %p284 = pneg %p283
    // Predicated region
    $region45: #{encoder_forward.3} parent=5 // pred_check
      _
    $region46: #{encoder_forward.3} parent=5 // pred_check_branch
      %286 = sbr.rel (%p283) target = $region48
    $region47: #{encoder_forward.3} parent=5 // pred_region
      %s287 = ssub.s32 %s15, 1
      %p288 = pneg %p36
      %p289 = pneg %p33
      %p290 = scmp.lt.s32.totalorder %s20, 1
      %s291 = scalar_select %p290, %s20, 1
      %s292 = smul.addr %s291, 24
      %s293 = smul.addr %s292, 8
      %s294 = scalar_lea.vmem %s1, %s293
      %p295 = pneg %p62
      %p296 = pneg %p59
      %p297 = scmp.lt.s32.totalorder %s20, 1
      %s298 = scalar_select %p297, %s20, 1
      %s299 = smul.addr %s298, 12
      %s300 = smul.addr %s299, 8
      %s301 = scalar_lea.vmem %s2, %s300
      %p302 = pneg %p88
      %p303 = pneg %p85
      %p304 = scmp.lt.s32.totalorder %s20, 1
      %s305 = scalar_select %p304, %s20, 1
      %s306 = smul.addr %s305, 3
      %s307 = scalar_lea.vmem %s3, %s306
      %p308 = pneg %p114
      %p309 = pneg %p111
      %p310 = scmp.lt.s32.totalorder %s20, 1
      %s311 = scalar_select %p310, %s20, 1
      %s312 = scalar_lea.vmem %s4, %s311
      %p313 = pneg %p140
      %p314 = pneg %p137
      %p315 = pneg %p161
      %p316 = pneg %p158
      %p317 = pneg %p182
      %p318 = pneg %p179
      %p319 = pneg %p203
      %p320 = pneg %p200
      %p321 = pneg %p224
      %p322 = pneg %p221
      %p323 = scmp.lt.s32.totalorder %s20, 1
      %s324 = scalar_select %p323, %s20, 1
      %s325 = smul.addr %s324, 24
      %s326 = smul.addr %s325, 8
      %s327 = scalar_lea.vmem %s1, %s326
      %p328 = scmp.lt.s32.totalorder %s20, 1
      %s329 = scalar_select %p328, %s20, 1
      %s330 = smul.addr %s329, 12
      %s331 = smul.addr %s330, 8
      %s332 = scalar_lea.vmem %s2, %s331
      %p333 = scmp.lt.s32.totalorder %s20, 1
      %s334 = scalar_select %p333, %s20, 1
      %s335 = smul.addr %s334, 3
      %s336 = scalar_lea.vmem %s3, %s335
      %p337 = scmp.lt.s32.totalorder %s20, 1
      %s338 = scalar_select %p337, %s20, 1
      %s339 = scalar_lea.vmem %s4, %s338
      %v340 = vld [vmem:[%s0] sm:$0xff]
      %v341 = vld [vmem:[%s0 + $0x8] sm:$0xff]
      %v342 = vld [vmem:[%s0 + $0x10] sm:$0xff]
      %v343 = vld [vmem:[%s0 + $0x18] sm:$0xff]
      %v344 = vld [vmem:[%s0 + $0x20] sm:$0xff]
      %v345 = vld [vmem:[%s0 + $0x28] sm:$0xff]
      %v346 = vld [vmem:[%s0 + $0x30] sm:$0xff]
      %v347 = vld [vmem:[%s0 + $0x38] sm:$0xff]
      %v348 = vld [vmem:[%s327] sm:$0xff]
      %v349 = vld [vmem:[%s327 + $0x8] sm:$0xff]
      %v350 = vld [vmem:[%s327 + $0x10] sm:$0xff]
      %v351 = vld [vmem:[%s327 + $0x18] sm:$0xff]
      %v352 = vld [vmem:[%s327 + $0x20] sm:$0xff]
      %v353 = vld [vmem:[%s327 + $0x28] sm:$0xff]
      %v354 = vld [vmem:[%s327 + $0x30] sm:$0xff]
      %v355 = vld [vmem:[%s327 + $0x38] sm:$0xff]
      %v356 = vld [vmem:[%s336] sm:$0x1]
      %v358 = vperm.slane %v356, 0
      %vm360 = vcmask 523264
      %v362 = vsel %vm360, %v340, 0
      %v365 = vsel %vm360, %v341, 0
      %v368 = vsel %vm360, %v342, 0
      %v371 = vsel %vm360, %v343, 0
      %v374 = vsel %vm360, %v344, 0
      %v377 = vsel %vm360, %v345, 0
      %v380 = vsel %vm360, %v346, 0
      %v383 = vsel %vm360, %v347, 0
      %385 = vmatpush.msra.mxu0 0.0
      %386 = vmatpush.msra.mxu0 0.0
      %387 = vmatpush.msra.mxu0 0.0
      %388 = vmatpush.msra.mxu0 0.0
      %389 = vmatpush.msra.mxu0 0.0
      %390 = vmatpush.msra.mxu0 0.0
      %391 = vmatpush.msra.mxu0 0.0
      %392 = vmatpush.msra.mxu0 0.0
      %393 = vmatpush.msra.mxu0 %v355
      %394 = vmatpush.msra.mxu0 %v354
      %395 = vmatpush.msra.mxu0 %v353
      %396 = vmatpush.msra.mxu0 %v352
      %397 = vmatpush.msra.mxu0 %v351
      %398 = vmatpush.msra.mxu0 %v350
      %399 = vmatpush.msra.mxu0 %v349
      %400 = vmatpush.msra.mxu0 %v348
      %401 = vmatmul.f32.gmra.mxu0 %v362
      %v402 = vpop.f32.mrf.mxu0
      %v403 = vadd.f32 %v358, %v402
      %404 = vmatmul.f32.gmra.mxu0 %v365
      %v405 = vpop.f32.mrf.mxu0
      %v406 = vadd.f32 %v358, %v405
      %407 = vmatmul.f32.gmra.mxu0 %v368
      %v408 = vpop.f32.mrf.mxu0
      %v409 = vadd.f32 %v358, %v408
      %410 = vmatmul.f32.gmra.mxu0 %v371
      %v411 = vpop.f32.mrf.mxu0
      %v412 = vadd.f32 %v358, %v411
      %413 = vmatmul.f32.gmra.mxu0 %v374
      %v414 = vpop.f32.mrf.mxu0
      %v415 = vadd.f32 %v358, %v414
      %416 = vmatmul.f32.gmra.mxu0 %v377
      %v417 = vpop.f32.mrf.mxu0
      %v418 = vadd.f32 %v358, %v417
      %419 = vmatmul.f32.gmra.mxu0 %v380
      %v420 = vpop.f32.mrf.mxu0
      %v421 = vadd.f32 %v358, %v420
      %422 = vmatmul.f32.gmra.mxu0 %v383
      %v423 = vpop.f32.mrf.mxu0
      %v424 = vadd.f32 %v358, %v423
      %425 = vdwg.mxu0
      %vm426 = vcmask 261120
      %427 = vst.msk [vmem:[#allocation2] sm:$0xff] %vm426, %v403
      %428 = vst.msk [vmem:[#allocation2 + $0x8] sm:$0xff] %vm426, %v406
      %429 = vst.msk [vmem:[#allocation2 + $0x10] sm:$0xff] %vm426, %v409
      %430 = vst.msk [vmem:[#allocation2 + $0x18] sm:$0xff] %vm426, %v412
      %431 = vst.msk [vmem:[#allocation2 + $0x20] sm:$0xff] %vm426, %v415
      %432 = vst.msk [vmem:[#allocation2 + $0x28] sm:$0xff] %vm426, %v418
      %433 = vst.msk [vmem:[#allocation2 + $0x30] sm:$0xff] %vm426, %v421
      %434 = vst.msk [vmem:[#allocation2 + $0x38] sm:$0xff] %vm426, %v424
      %s435 = scalar_lea.vmem %s327, 64
      %v436 = vld [vmem:[%s435] sm:$0xff]
      %v437 = vld [vmem:[%s435 + $0x8] sm:$0xff]
      %v438 = vld [vmem:[%s435 + $0x10] sm:$0xff]
      %v439 = vld [vmem:[%s435 + $0x18] sm:$0xff]
      %v440 = vld [vmem:[%s435 + $0x20] sm:$0xff]
      %v441 = vld [vmem:[%s435 + $0x28] sm:$0xff]
      %v442 = vld [vmem:[%s435 + $0x30] sm:$0xff]
      %v443 = vld [vmem:[%s435 + $0x38] sm:$0xff]
      %s444 = scalar_lea.vmem %s336, 1
      %v445 = vld [vmem:[%s444] sm:$0x1]
      %v447 = vperm.slane %v445, 0
      %449 = vmatpush.msra.mxu0 0.0
      %450 = vmatpush.msra.mxu0 0.0
      %451 = vmatpush.msra.mxu0 0.0
      %452 = vmatpush.msra.mxu0 0.0
      %453 = vmatpush.msra.mxu0 0.0
      %454 = vmatpush.msra.mxu0 0.0
      %455 = vmatpush.msra.mxu0 0.0
      %456 = vmatpush.msra.mxu0 0.0
      %457 = vmatpush.msra.mxu0 %v443
      %458 = vmatpush.msra.mxu0 %v442
      %459 = vmatpush.msra.mxu0 %v441
      %460 = vmatpush.msra.mxu0 %v440
      %461 = vmatpush.msra.mxu0 %v439
      %462 = vmatpush.msra.mxu0 %v438
      %463 = vmatpush.msra.mxu0 %v437
      %464 = vmatpush.msra.mxu0 %v436
      %465 = vmatmul.f32.gmra.mxu0 %v362
      %v466 = vpop.f32.mrf.mxu0
      %v467 = vadd.f32 %v447, %v466
      %468 = vmatmul.f32.gmra.mxu0 %v365
      %v469 = vpop.f32.mrf.mxu0
      %v470 = vadd.f32 %v447, %v469
      %471 = vmatmul.f32.gmra.mxu0 %v368
      %v472 = vpop.f32.mrf.mxu0
      %v473 = vadd.f32 %v447, %v472
      %474 = vmatmul.f32.gmra.mxu0 %v371
      %v475 = vpop.f32.mrf.mxu0
      %v476 = vadd.f32 %v447, %v475
      %477 = vmatmul.f32.gmra.mxu0 %v374
      %v478 = vpop.f32.mrf.mxu0
      %v479 = vadd.f32 %v447, %v478
      %480 = vmatmul.f32.gmra.mxu0 %v377
      %v481 = vpop.f32.mrf.mxu0
      %v482 = vadd.f32 %v447, %v481
      %483 = vmatmul.f32.gmra.mxu0 %v380
      %v484 = vpop.f32.mrf.mxu0
      %v485 = vadd.f32 %v447, %v484
      %486 = vmatmul.f32.gmra.mxu0 %v383
      %v487 = vpop.f32.mrf.mxu0
      %v488 = vadd.f32 %v447, %v487
      %489 = vdwg.mxu0
      %490 = vst.msk [vmem:[#allocation3] sm:$0xff] %vm426, %v467
      %491 = vst.msk [vmem:[#allocation3 + $0x8] sm:$0xff] %vm426, %v470
      %492 = vst.msk [vmem:[#allocation3 + $0x10] sm:$0xff] %vm426, %v473
      %493 = vst.msk [vmem:[#allocation3 + $0x18] sm:$0xff] %vm426, %v476
      %494 = vst.msk [vmem:[#allocation3 + $0x20] sm:$0xff] %vm426, %v479
      %495 = vst.msk [vmem:[#allocation3 + $0x28] sm:$0xff] %vm426, %v482
      %496 = vst.msk [vmem:[#allocation3 + $0x30] sm:$0xff] %vm426, %v485
      %497 = vst.msk [vmem:[#allocation3 + $0x38] sm:$0xff] %vm426, %v488
      %s498 = scalar_lea.vmem %s327, 128
      %v499 = vld [vmem:[%s498] sm:$0xff]
      %v500 = vld [vmem:[%s498 + $0x8] sm:$0xff]
      %v501 = vld [vmem:[%s498 + $0x10] sm:$0xff]
      %v502 = vld [vmem:[%s498 + $0x18] sm:$0xff]
      %v503 = vld [vmem:[%s498 + $0x20] sm:$0xff]
      %v504 = vld [vmem:[%s498 + $0x28] sm:$0xff]
      %v505 = vld [vmem:[%s498 + $0x30] sm:$0xff]
      %v506 = vld [vmem:[%s498 + $0x38] sm:$0xff]
      %s507 = scalar_lea.vmem %s336, 2
      %v508 = vld [vmem:[%s507] sm:$0x1]
      %v510 = vperm.slane %v508, 0
      %512 = vmatpush.msra.mxu0 0.0
      %513 = vmatpush.msra.mxu0 0.0
      %514 = vmatpush.msra.mxu0 0.0
      %515 = vmatpush.msra.mxu0 0.0
      %516 = vmatpush.msra.mxu0 0.0
      %517 = vmatpush.msra.mxu0 0.0
      %518 = vmatpush.msra.mxu0 0.0
      %519 = vmatpush.msra.mxu0 0.0
      %520 = vmatpush.msra.mxu0 %v506
      %521 = vmatpush.msra.mxu0 %v505
      %522 = vmatpush.msra.mxu0 %v504
      %523 = vmatpush.msra.mxu0 %v503
      %524 = vmatpush.msra.mxu0 %v502
      %525 = vmatpush.msra.mxu0 %v501
      %526 = vmatpush.msra.mxu0 %v500
      %527 = vmatpush.msra.mxu0 %v499
      %528 = vmatmul.f32.gmra.mxu0 %v362
      %v529 = vpop.f32.mrf.mxu0
      %v530 = vadd.f32 %v510, %v529
      %531 = vmatmul.f32.gmra.mxu0 %v365
      %v532 = vpop.f32.mrf.mxu0
      %v533 = vadd.f32 %v510, %v532
      %534 = vmatmul.f32.gmra.mxu0 %v368
      %v535 = vpop.f32.mrf.mxu0
      %v536 = vadd.f32 %v510, %v535
      %537 = vmatmul.f32.gmra.mxu0 %v371
      %v538 = vpop.f32.mrf.mxu0
      %v539 = vadd.f32 %v510, %v538
      %540 = vmatmul.f32.gmra.mxu0 %v374
      %v541 = vpop.f32.mrf.mxu0
      %v542 = vadd.f32 %v510, %v541
      %543 = vmatmul.f32.gmra.mxu0 %v377
      %v544 = vpop.f32.mrf.mxu0
      %v545 = vadd.f32 %v510, %v544
      %546 = vmatmul.f32.gmra.mxu0 %v380
      %v547 = vpop.f32.mrf.mxu0
      %v548 = vadd.f32 %v510, %v547
      %549 = vmatmul.f32.gmra.mxu0 %v383
      %v550 = vpop.f32.mrf.mxu0
      %v551 = vadd.f32 %v510, %v550
      %552 = vdwg.mxu0
      %553 = vst.msk [vmem:[#allocation4] sm:$0xff] %vm426, %v530
      %554 = vst.msk [vmem:[#allocation4 + $0x8] sm:$0xff] %vm426, %v533
      %555 = vst.msk [vmem:[#allocation4 + $0x10] sm:$0xff] %vm426, %v536
      %556 = vst.msk [vmem:[#allocation4 + $0x18] sm:$0xff] %vm426, %v539
      %557 = vst.msk [vmem:[#allocation4 + $0x20] sm:$0xff] %vm426, %v542
      %558 = vst.msk [vmem:[#allocation4 + $0x28] sm:$0xff] %vm426, %v545
      %559 = vst.msk [vmem:[#allocation4 + $0x30] sm:$0xff] %vm426, %v548
      %560 = vst.msk [vmem:[#allocation4 + $0x38] sm:$0xff] %vm426, %v551
      %v561 = vld [vmem:[%s332] sm:$0xff]
      %v562 = vld [vmem:[%s332 + $0x8] sm:$0xff]
      %v563 = vld [vmem:[%s332 + $0x10] sm:$0xff]
      %v564 = vld [vmem:[%s332 + $0x18] sm:$0xff]
      %s565 = scalar_lea.vmem %s332, 32
      %v566 = vld [vmem:[%s565] sm:$0xff]
      %v567 = vld [vmem:[%s565 + $0x8] sm:$0xff]
      %v568 = vld [vmem:[%s565 + $0x10] sm:$0xff]
      %v569 = vld [vmem:[%s565 + $0x18] sm:$0xff]
      %s570 = scalar_lea.vmem %s332, 64
      %v571 = vld [vmem:[%s570] sm:$0xff]
      %v572 = vld [vmem:[%s570 + $0x8] sm:$0xff]
      %v573 = vld [vmem:[%s570 + $0x10] sm:$0xff]
      %v574 = vld [vmem:[%s570 + $0x18] sm:$0xff]
      %v575 = vld [vmem:[%s339] sm:$0x1]
      %p576 = scmp.eq.s32.totalorder %s20, 0
      %s577 = scalar_select %p576, 0, 7
      %s578 = smul.u32 %s577, 8
      %v580 = vsel %vm426, 0.0, 0
      %582 = vmatpush.msra.mxu0 0.0
      %583 = vmatpush.msra.mxu0 0.0
      %584 = vmatpush.msra.mxu0 0.0
      %585 = vmatpush.msra.mxu0 0.0
      %586 = vmatpush.msra.mxu0 0.0
      %587 = vmatpush.msra.mxu0 0.0
      %588 = vmatpush.msra.mxu0 0.0
      %589 = vmatpush.msra.mxu0 0.0
      %590 = vmatpush.msra.mxu0 0.0
      %591 = vmatpush.msra.mxu0 0.0
      %592 = vmatpush.msra.mxu0 0.0
      %593 = vmatpush.msra.mxu0 0.0
      %594 = vmatpush.msra.mxu0 %v564
      %595 = vmatpush.msra.mxu0 %v563
      %596 = vmatpush.msra.mxu0 %v562
      %597 = vmatpush.msra.mxu0 %v561
      %598 = vmatmul.f32.gmra.mxu0 %v580
      %v599 = vpop.f32.mrf.mxu0
      %v600 = vadd.f32 0.0, %v599
      %601 = vdwg.mxu0
      %602 = vmatpush.msra.mxu0 0.0
      %603 = vmatpush.msra.mxu0 0.0
      %604 = vmatpush.msra.mxu0 0.0
      %605 = vmatpush.msra.mxu0 0.0
      %606 = vmatpush.msra.mxu0 0.0
      %607 = vmatpush.msra.mxu0 0.0
      %608 = vmatpush.msra.mxu0 0.0
      %609 = vmatpush.msra.mxu0 0.0
      %610 = vmatpush.msra.mxu0 0.0
      %611 = vmatpush.msra.mxu0 0.0
      %612 = vmatpush.msra.mxu0 0.0
      %613 = vmatpush.msra.mxu0 0.0
      %614 = vmatpush.msra.mxu0 %v569
      %615 = vmatpush.msra.mxu0 %v568
      %616 = vmatpush.msra.mxu0 %v567
      %617 = vmatpush.msra.mxu0 %v566
      %618 = vmatmul.f32.gmra.mxu0 %v580
      %v619 = vpop.f32.mrf.mxu0
      %v620 = vadd.f32 0.0, %v619
      %621 = vdwg.mxu0
      %s622 = scalar_lea.vmem [#allocation2], %s578
      %v623 = vld [vmem:[%s622] sm:$0xff]
      %v624 = vadd.f32 %v623, %v600
      %v625 = vxor.u32 %v624, 2147483648
      %v626 = vmul.f32 %v625, 1.442695
      %v627 = vpow.pop %v626
      %v628 = vadd.f32 %v627, 1.0
      %v629 = vrcp.pop %v628
      %v630 = vmul.f32 %v628, %v629
      %v631 = vsub.f32 1.0, %v630
      %v632 = vmul.f32 %v629, %v631
      %v633 = vadd.f32 %v629, %v632
      %vm634 = vweird.f32 %v628
      %vm635 = vweird.f32 %v629
      %vm636 = vmor %vm634, %vm635
      %v637 = vsel %vm636, %v629, %v633
      %v638 = vand.u32 2147483647, %v628
      %vm639 = vcmp.eq.f32.partialorder %v638, 8.507059e+37
      %v640 = vand.u32 %v628, 2147483648
      %v641 = vor.u32 1.1754944e-38, %v640
      %v642 = vsel %vm639, %v641, %v637
      %v643 = vmul.f32 1.0, %v642
      %s644 = scalar_lea.vmem [#allocation3], %s578
      %v645 = vld [vmem:[%s644] sm:$0xff]
      %v646 = vadd.f32 %v645, %v620
      %v647 = vxor.u32 %v646, 2147483648
      %v648 = vmul.f32 %v647, 1.442695
      %v649 = vpow.pop %v648
      %v650 = vadd.f32 %v649, 1.0
      %v651 = vrcp.pop %v650
      %v652 = vmul.f32 %v650, %v651
      %v653 = vsub.f32 1.0, %v652
      %v654 = vmul.f32 %v651, %v653
      %v655 = vadd.f32 %v651, %v654
      %vm656 = vweird.f32 %v650
      %vm657 = vweird.f32 %v651
      %vm658 = vmor %vm656, %vm657
      %v659 = vsel %vm658, %v651, %v655
      %v660 = vand.u32 2147483647, %v650
      %vm661 = vcmp.eq.f32.partialorder %v660, 8.507059e+37
      %v662 = vand.u32 %v650, 2147483648
      %v663 = vor.u32 1.1754944e-38, %v662
      %v664 = vsel %vm661, %v663, %v659
      %v665 = vmul.f32 1.0, %v664
      %s666 = scalar_lea.vmem [#allocation4], %s578
      %v667 = vld [vmem:[%s666] sm:$0xff]
      %v669 = vperm.slane %v575, 0
      %671 = vmatpush.msra.mxu0 0.0
      %672 = vmatpush.msra.mxu0 0.0
      %673 = vmatpush.msra.mxu0 0.0
      %674 = vmatpush.msra.mxu0 0.0
      %675 = vmatpush.msra.mxu0 0.0
      %676 = vmatpush.msra.mxu0 0.0
      %677 = vmatpush.msra.mxu0 0.0
      %678 = vmatpush.msra.mxu0 0.0
      %679 = vmatpush.msra.mxu0 0.0
      %680 = vmatpush.msra.mxu0 0.0
      %681 = vmatpush.msra.mxu0 0.0
      %682 = vmatpush.msra.mxu0 0.0
      %683 = vmatpush.msra.mxu0 %v574
      %684 = vmatpush.msra.mxu0 %v573
      %685 = vmatpush.msra.mxu0 %v572
      %686 = vmatpush.msra.mxu0 %v571
      %687 = vmatmul.f32.gmra.mxu0 %v580
      %v688 = vpop.f32.mrf.mxu0
      %v689 = vadd.f32 %v669, %v688
      %690 = vdwg.mxu0
      %v691 = vmul.f32 %v643, %v689
      %v692 = vadd.f32 %v667, %v691
      %v693 = vtanh.pop %v692
      %v694 = vsub.f32 1.0, %v665
      %v695 = vmul.f32 %v694, %v693
      %v696 = vmul.f32 %v665, 0.0
      %v697 = vadd.f32 %v695, %v696
      %s698 = scalar_lea.vmem [#allocation5], %s578
      %699 = vst.msk [vmem:[%s698] sm:$0xff] %vm426, %v697
      %s700 = scalar_select %p576, 1, 6
      %s701 = smul.u32 %s700, 8
      %v703 = vsel %vm426, %v697, 0
      %705 = vmatpush.msra.mxu0 0.0
      %706 = vmatpush.msra.mxu0 0.0
      %707 = vmatpush.msra.mxu0 0.0
      %708 = vmatpush.msra.mxu0 0.0
      %709 = vmatpush.msra.mxu0 0.0
      %710 = vmatpush.msra.mxu0 0.0
      %711 = vmatpush.msra.mxu0 0.0
      %712 = vmatpush.msra.mxu0 0.0
      %713 = vmatpush.msra.mxu0 0.0
      %714 = vmatpush.msra.mxu0 0.0
      %715 = vmatpush.msra.mxu0 0.0
      %716 = vmatpush.msra.mxu0 0.0
      %717 = vmatpush.msra.mxu0 %v564
      %718 = vmatpush.msra.mxu0 %v563
      %719 = vmatpush.msra.mxu0 %v562
      %720 = vmatpush.msra.mxu0 %v561
      %721 = vmatmul.f32.gmra.mxu0 %v703
      %v722 = vpop.f32.mrf.mxu0
      %v723 = vadd.f32 0.0, %v722
      %724 = vdwg.mxu0
      %725 = vmatpush.msra.mxu0 0.0
      %726 = vmatpush.msra.mxu0 0.0
      %727 = vmatpush.msra.mxu0 0.0
      %728 = vmatpush.msra.mxu0 0.0
      %729 = vmatpush.msra.mxu0 0.0
      %730 = vmatpush.msra.mxu0 0.0
      %731 = vmatpush.msra.mxu0 0.0
      %732 = vmatpush.msra.mxu0 0.0
      %733 = vmatpush.msra.mxu0 0.0
      %734 = vmatpush.msra.mxu0 0.0
      %735 = vmatpush.msra.mxu0 0.0
      %736 = vmatpush.msra.mxu0 0.0
      %737 = vmatpush.msra.mxu0 %v569
      %738 = vmatpush.msra.mxu0 %v568
      %739 = vmatpush.msra.mxu0 %v567
      %740 = vmatpush.msra.mxu0 %v566
      %741 = vmatmul.f32.gmra.mxu0 %v703
      %v742 = vpop.f32.mrf.mxu0
      %v743 = vadd.f32 0.0, %v742
      %744 = vdwg.mxu0
      %s745 = scalar_lea.vmem [#allocation2], %s701
      %v746 = vld [vmem:[%s745] sm:$0xff]
      %v747 = vadd.f32 %v746, %v723
      %v748 = vxor.u32 %v747, 2147483648
      %v749 = vmul.f32 %v748, 1.442695
      %v750 = vpow.pop %v749
      %v751 = vadd.f32 %v750, 1.0
      %v752 = vrcp.pop %v751
      %v753 = vmul.f32 %v751, %v752
      %v754 = vsub.f32 1.0, %v753
      %v755 = vmul.f32 %v752, %v754
      %v756 = vadd.f32 %v752, %v755
      %vm757 = vweird.f32 %v751
      %vm758 = vweird.f32 %v752
      %vm759 = vmor %vm757, %vm758
      %v760 = vsel %vm759, %v752, %v756
      %v761 = vand.u32 2147483647, %v751
      %vm762 = vcmp.eq.f32.partialorder %v761, 8.507059e+37
      %v763 = vand.u32 %v751, 2147483648
      %v764 = vor.u32 1.1754944e-38, %v763
      %v765 = vsel %vm762, %v764, %v760
      %v766 = vmul.f32 1.0, %v765
      %s767 = scalar_lea.vmem [#allocation3], %s701
      %v768 = vld [vmem:[%s767] sm:$0xff]
      %v769 = vadd.f32 %v768, %v743
      %v770 = vxor.u32 %v769, 2147483648
      %v771 = vmul.f32 %v770, 1.442695
      %v772 = vpow.pop %v771
      %v773 = vadd.f32 %v772, 1.0
      %v774 = vrcp.pop %v773
      %v775 = vmul.f32 %v773, %v774
      %v776 = vsub.f32 1.0, %v775
      %v777 = vmul.f32 %v774, %v776
      %v778 = vadd.f32 %v774, %v777
      %vm779 = vweird.f32 %v773
      %vm780 = vweird.f32 %v774
      %vm781 = vmor %vm779, %vm780
      %v782 = vsel %vm781, %v774, %v778
      %v783 = vand.u32 2147483647, %v773
      %vm784 = vcmp.eq.f32.partialorder %v783, 8.507059e+37
      %v785 = vand.u32 %v773, 2147483648
      %v786 = vor.u32 1.1754944e-38, %v785
      %v787 = vsel %vm784, %v786, %v782
      %v788 = vmul.f32 1.0, %v787
      %s789 = scalar_lea.vmem [#allocation4], %s701
      %v790 = vld [vmem:[%s789] sm:$0xff]
      %791 = vmatpush.msra.mxu0 0.0
      %792 = vmatpush.msra.mxu0 0.0
      %793 = vmatpush.msra.mxu0 0.0
      %794 = vmatpush.msra.mxu0 0.0
      %795 = vmatpush.msra.mxu0 0.0
      %796 = vmatpush.msra.mxu0 0.0
      %797 = vmatpush.msra.mxu0 0.0
      %798 = vmatpush.msra.mxu0 0.0
      %799 = vmatpush.msra.mxu0 0.0
      %800 = vmatpush.msra.mxu0 0.0
      %801 = vmatpush.msra.mxu0 0.0
      %802 = vmatpush.msra.mxu0 0.0
      %803 = vmatpush.msra.mxu0 %v574
      %804 = vmatpush.msra.mxu0 %v573
      %805 = vmatpush.msra.mxu0 %v572
      %806 = vmatpush.msra.mxu0 %v571
      %807 = vmatmul.f32.gmra.mxu0 %v703
      %v808 = vpop.f32.mrf.mxu0
      %v809 = vadd.f32 %v669, %v808
      %810 = vdwg.mxu0
      %v811 = vmul.f32 %v766, %v809
      %v812 = vadd.f32 %v790, %v811
      %v813 = vtanh.pop %v812
      %v814 = vsub.f32 1.0, %v788
      %v815 = vmul.f32 %v814, %v813
      %v816 = vmul.f32 %v788, %v697
      %v817 = vadd.f32 %v815, %v816
      %s818 = scalar_lea.vmem [#allocation5], %s701
      %819 = vst.msk [vmem:[%s818] sm:$0xff] %vm426, %v817
      %s820 = scalar_select %p576, 2, 5
      %s821 = smul.u32 %s820, 8
      %v823 = vsel %vm426, %v817, 0
      %825 = vmatpush.msra.mxu0 0.0
      %826 = vmatpush.msra.mxu0 0.0
      %827 = vmatpush.msra.mxu0 0.0
      %828 = vmatpush.msra.mxu0 0.0
      %829 = vmatpush.msra.mxu0 0.0
      %830 = vmatpush.msra.mxu0 0.0
      %831 = vmatpush.msra.mxu0 0.0
      %832 = vmatpush.msra.mxu0 0.0
      %833 = vmatpush.msra.mxu0 0.0
      %834 = vmatpush.msra.mxu0 0.0
      %835 = vmatpush.msra.mxu0 0.0
      %836 = vmatpush.msra.mxu0 0.0
      %837 = vmatpush.msra.mxu0 %v564
      %838 = vmatpush.msra.mxu0 %v563
      %839 = vmatpush.msra.mxu0 %v562
      %840 = vmatpush.msra.mxu0 %v561
      %841 = vmatmul.f32.gmra.mxu0 %v823
      %v842 = vpop.f32.mrf.mxu0
      %v843 = vadd.f32 0.0, %v842
      %844 = vdwg.mxu0
      %845 = vmatpush.msra.mxu0 0.0
      %846 = vmatpush.msra.mxu0 0.0
      %847 = vmatpush.msra.mxu0 0.0
      %848 = vmatpush.msra.mxu0 0.0
      %849 = vmatpush.msra.mxu0 0.0
      %850 = vmatpush.msra.mxu0 0.0
      %851 = vmatpush.msra.mxu0 0.0
      %852 = vmatpush.msra.mxu0 0.0
      %853 = vmatpush.msra.mxu0 0.0
      %854 = vmatpush.msra.mxu0 0.0
      %855 = vmatpush.msra.mxu0 0.0
      %856 = vmatpush.msra.mxu0 0.0
      %857 = vmatpush.msra.mxu0 %v569
      %858 = vmatpush.msra.mxu0 %v568
      %859 = vmatpush.msra.mxu0 %v567
      %860 = vmatpush.msra.mxu0 %v566
      %861 = vmatmul.f32.gmra.mxu0 %v823
      %v862 = vpop.f32.mrf.mxu0
      %v863 = vadd.f32 0.0, %v862
      %864 = vdwg.mxu0
      %s865 = scalar_lea.vmem [#allocation2], %s821
      %v866 = vld [vmem:[%s865] sm:$0xff]
      %v867 = vadd.f32 %v866, %v843
      %v868 = vxor.u32 %v867, 2147483648
      %v869 = vmul.f32 %v868, 1.442695
      %v870 = vpow.pop %v869
      %v871 = vadd.f32 %v870, 1.0
      %v872 = vrcp.pop %v871
      %v873 = vmul.f32 %v871, %v872
      %v874 = vsub.f32 1.0, %v873
      %v875 = vmul.f32 %v872, %v874
      %v876 = vadd.f32 %v872, %v875
      %vm877 = vweird.f32 %v871
      %vm878 = vweird.f32 %v872
      %vm879 = vmor %vm877, %vm878
      %v880 = vsel %vm879, %v872, %v876
      %v881 = vand.u32 2147483647, %v871
      %vm882 = vcmp.eq.f32.partialorder %v881, 8.507059e+37
      %v883 = vand.u32 %v871, 2147483648
      %v884 = vor.u32 1.1754944e-38, %v883
      %v885 = vsel %vm882, %v884, %v880
      %v886 = vmul.f32 1.0, %v885
      %s887 = scalar_lea.vmem [#allocation3], %s821
      %v888 = vld [vmem:[%s887] sm:$0xff]
      %v889 = vadd.f32 %v888, %v863
      %v890 = vxor.u32 %v889, 2147483648
      %v891 = vmul.f32 %v890, 1.442695
      %v892 = vpow.pop %v891
      %v893 = vadd.f32 %v892, 1.0
      %v894 = vrcp.pop %v893
      %v895 = vmul.f32 %v893, %v894
      %v896 = vsub.f32 1.0, %v895
      %v897 = vmul.f32 %v894, %v896
      %v898 = vadd.f32 %v894, %v897
      %vm899 = vweird.f32 %v893
      %vm900 = vweird.f32 %v894
      %vm901 = vmor %vm899, %vm900
      %v902 = vsel %vm901, %v894, %v898
      %v903 = vand.u32 2147483647, %v893
      %vm904 = vcmp.eq.f32.partialorder %v903, 8.507059e+37
      %v905 = vand.u32 %v893, 2147483648
      %v906 = vor.u32 1.1754944e-38, %v905
      %v907 = vsel %vm904, %v906, %v902
      %v908 = vmul.f32 1.0, %v907
      %s909 = scalar_lea.vmem [#allocation4], %s821
      %v910 = vld [vmem:[%s909] sm:$0xff]
      %911 = vmatpush.msra.mxu0 0.0
      %912 = vmatpush.msra.mxu0 0.0
      %913 = vmatpush.msra.mxu0 0.0
      %914 = vmatpush.msra.mxu0 0.0
      %915 = vmatpush.msra.mxu0 0.0
      %916 = vmatpush.msra.mxu0 0.0
      %917 = vmatpush.msra.mxu0 0.0
      %918 = vmatpush.msra.mxu0 0.0
      %919 = vmatpush.msra.mxu0 0.0
      %920 = vmatpush.msra.mxu0 0.0
      %921 = vmatpush.msra.mxu0 0.0
      %922 = vmatpush.msra.mxu0 0.0
      %923 = vmatpush.msra.mxu0 %v574
      %924 = vmatpush.msra.mxu0 %v573
      %925 = vmatpush.msra.mxu0 %v572
      %926 = vmatpush.msra.mxu0 %v571
      %927 = vmatmul.f32.gmra.mxu0 %v823
      %v928 = vpop.f32.mrf.mxu0
      %v929 = vadd.f32 %v669, %v928
      %930 = vdwg.mxu0
      %v931 = vmul.f32 %v886, %v929
      %v932 = vadd.f32 %v910, %v931
      %v933 = vtanh.pop %v932
      %v934 = vsub.f32 1.0, %v908
      %v935 = vmul.f32 %v934, %v933
      %v936 = vmul.f32 %v908, %v817
      %v937 = vadd.f32 %v935, %v936
      %s938 = scalar_lea.vmem [#allocation5], %s821
      %939 = vst.msk [vmem:[%s938] sm:$0xff] %vm426, %v937
      %s940 = scalar_select %p576, 3, 4
      %s941 = smul.u32 %s940, 8
      %v943 = vsel %vm426, %v937, 0
      %945 = vmatpush.msra.mxu0 0.0
      %946 = vmatpush.msra.mxu0 0.0
      %947 = vmatpush.msra.mxu0 0.0
      %948 = vmatpush.msra.mxu0 0.0
      %949 = vmatpush.msra.mxu0 0.0
      %950 = vmatpush.msra.mxu0 0.0
      %951 = vmatpush.msra.mxu0 0.0
      %952 = vmatpush.msra.mxu0 0.0
      %953 = vmatpush.msra.mxu0 0.0
      %954 = vmatpush.msra.mxu0 0.0
      %955 = vmatpush.msra.mxu0 0.0
      %956 = vmatpush.msra.mxu0 0.0
      %957 = vmatpush.msra.mxu0 %v564
      %958 = vmatpush.msra.mxu0 %v563
      %959 = vmatpush.msra.mxu0 %v562
      %960 = vmatpush.msra.mxu0 %v561
      %961 = vmatmul.f32.gmra.mxu0 %v943
      %v962 = vpop.f32.mrf.mxu0
      %v963 = vadd.f32 0.0, %v962
      %964 = vdwg.mxu0
      %965 = vmatpush.msra.mxu0 0.0
      %966 = vmatpush.msra.mxu0 0.0
      %967 = vmatpush.msra.mxu0 0.0
      %968 = vmatpush.msra.mxu0 0.0
      %969 = vmatpush.msra.mxu0 0.0
      %970 = vmatpush.msra.mxu0 0.0
      %971 = vmatpush.msra.mxu0 0.0
      %972 = vmatpush.msra.mxu0 0.0
      %973 = vmatpush.msra.mxu0 0.0
      %974 = vmatpush.msra.mxu0 0.0
      %975 = vmatpush.msra.mxu0 0.0
      %976 = vmatpush.msra.mxu0 0.0
      %977 = vmatpush.msra.mxu0 %v569
      %978 = vmatpush.msra.mxu0 %v568
      %979 = vmatpush.msra.mxu0 %v567
      %980 = vmatpush.msra.mxu0 %v566
      %981 = vmatmul.f32.gmra.mxu0 %v943
      %v982 = vpop.f32.mrf.mxu0
      %v983 = vadd.f32 0.0, %v982
      %984 = vdwg.mxu0
      %s985 = scalar_lea.vmem [#allocation2], %s941
      %v986 = vld [vmem:[%s985] sm:$0xff]
      %v987 = vadd.f32 %v986, %v963
      %v988 = vxor.u32 %v987, 2147483648
      %v989 = vmul.f32 %v988, 1.442695
      %v990 = vpow.pop %v989
      %v991 = vadd.f32 %v990, 1.0
      %v992 = vrcp.pop %v991
      %v993 = vmul.f32 %v991, %v992
      %v994 = vsub.f32 1.0, %v993
      %v995 = vmul.f32 %v992, %v994
      %v996 = vadd.f32 %v992, %v995
      %vm997 = vweird.f32 %v991
      %vm998 = vweird.f32 %v992
      %vm999 = vmor %vm997, %vm998
      %v1000 = vsel %vm999, %v992, %v996
      %v1001 = vand.u32 2147483647, %v991
      %vm1002 = vcmp.eq.f32.partialorder %v1001, 8.507059e+37
      %v1003 = vand.u32 %v991, 2147483648
      %v1004 = vor.u32 1.1754944e-38, %v1003
      %v1005 = vsel %vm1002, %v1004, %v1000
      %v1006 = vmul.f32 1.0, %v1005
      %s1007 = scalar_lea.vmem [#allocation3], %s941
      %v1008 = vld [vmem:[%s1007] sm:$0xff]
      %v1009 = vadd.f32 %v1008, %v983
      %v1010 = vxor.u32 %v1009, 2147483648
      %v1011 = vmul.f32 %v1010, 1.442695
      %v1012 = vpow.pop %v1011
      %v1013 = vadd.f32 %v1012, 1.0
      %v1014 = vrcp.pop %v1013
      %v1015 = vmul.f32 %v1013, %v1014
      %v1016 = vsub.f32 1.0, %v1015
      %v1017 = vmul.f32 %v1014, %v1016
      %v1018 = vadd.f32 %v1014, %v1017
      %vm1019 = vweird.f32 %v1013
      %vm1020 = vweird.f32 %v1014
      %vm1021 = vmor %vm1019, %vm1020
      %v1022 = vsel %vm1021, %v1014, %v1018
      %v1023 = vand.u32 2147483647, %v1013
      %vm1024 = vcmp.eq.f32.partialorder %v1023, 8.507059e+37
      %v1025 = vand.u32 %v1013, 2147483648
      %v1026 = vor.u32 1.1754944e-38, %v1025
      %v1027 = vsel %vm1024, %v1026, %v1022
      %v1028 = vmul.f32 1.0, %v1027
      %s1029 = scalar_lea.vmem [#allocation4], %s941
      %v1030 = vld [vmem:[%s1029] sm:$0xff]
      %1031 = vmatpush.msra.mxu0 0.0
      %1032 = vmatpush.msra.mxu0 0.0
      %1033 = vmatpush.msra.mxu0 0.0
      %1034 = vmatpush.msra.mxu0 0.0
      %1035 = vmatpush.msra.mxu0 0.0
      %1036 = vmatpush.msra.mxu0 0.0
      %1037 = vmatpush.msra.mxu0 0.0
      %1038 = vmatpush.msra.mxu0 0.0
      %1039 = vmatpush.msra.mxu0 0.0
      %1040 = vmatpush.msra.mxu0 0.0
      %1041 = vmatpush.msra.mxu0 0.0
      %1042 = vmatpush.msra.mxu0 0.0
      %1043 = vmatpush.msra.mxu0 %v574
      %1044 = vmatpush.msra.mxu0 %v573
      %1045 = vmatpush.msra.mxu0 %v572
      %1046 = vmatpush.msra.mxu0 %v571
      %1047 = vmatmul.f32.gmra.mxu0 %v943
      %v1048 = vpop.f32.mrf.mxu0
      %v1049 = vadd.f32 %v669, %v1048
      %1050 = vdwg.mxu0
      %v1051 = vmul.f32 %v1006, %v1049
      %v1052 = vadd.f32 %v1030, %v1051
      %v1053 = vtanh.pop %v1052
      %v1054 = vsub.f32 1.0, %v1028
      %v1055 = vmul.f32 %v1054, %v1053
      %v1056 = vmul.f32 %v1028, %v937
      %v1057 = vadd.f32 %v1055, %v1056
      %s1058 = scalar_lea.vmem [#allocation5], %s941
      %1059 = vst.msk [vmem:[%s1058] sm:$0xff] %vm426, %v1057
      %s1060 = scalar_select %p576, 4, 3
      %s1061 = smul.u32 %s1060, 8
      %v1063 = vsel %vm426, %v1057, 0
      %1065 = vmatpush.msra.mxu0 0.0
      %1066 = vmatpush.msra.mxu0 0.0
      %1067 = vmatpush.msra.mxu0 0.0
      %1068 = vmatpush.msra.mxu0 0.0
      %1069 = vmatpush.msra.mxu0 0.0
      %1070 = vmatpush.msra.mxu0 0.0
      %1071 = vmatpush.msra.mxu0 0.0
      %1072 = vmatpush.msra.mxu0 0.0
      %1073 = vmatpush.msra.mxu0 0.0
      %1074 = vmatpush.msra.mxu0 0.0
      %1075 = vmatpush.msra.mxu0 0.0
      %1076 = vmatpush.msra.mxu0 0.0
      %1077 = vmatpush.msra.mxu0 %v564
      %1078 = vmatpush.msra.mxu0 %v563
      %1079 = vmatpush.msra.mxu0 %v562
      %1080 = vmatpush.msra.mxu0 %v561
      %1081 = vmatmul.f32.gmra.mxu0 %v1063
      %v1082 = vpop.f32.mrf.mxu0
      %v1083 = vadd.f32 0.0, %v1082
      %1084 = vdwg.mxu0
      %1085 = vmatpush.msra.mxu0 0.0
      %1086 = vmatpush.msra.mxu0 0.0
      %1087 = vmatpush.msra.mxu0 0.0
      %1088 = vmatpush.msra.mxu0 0.0
      %1089 = vmatpush.msra.mxu0 0.0
      %1090 = vmatpush.msra.mxu0 0.0
      %1091 = vmatpush.msra.mxu0 0.0
      %1092 = vmatpush.msra.mxu0 0.0
      %1093 = vmatpush.msra.mxu0 0.0
      %1094 = vmatpush.msra.mxu0 0.0
      %1095 = vmatpush.msra.mxu0 0.0
      %1096 = vmatpush.msra.mxu0 0.0
      %1097 = vmatpush.msra.mxu0 %v569
      %1098 = vmatpush.msra.mxu0 %v568
      %1099 = vmatpush.msra.mxu0 %v567
      %1100 = vmatpush.msra.mxu0 %v566
      %1101 = vmatmul.f32.gmra.mxu0 %v1063
      %v1102 = vpop.f32.mrf.mxu0
      %v1103 = vadd.f32 0.0, %v1102
      %1104 = vdwg.mxu0
      %s1105 = scalar_lea.vmem [#allocation2], %s1061
      %v1106 = vld [vmem:[%s1105] sm:$0xff]
      %v1107 = vadd.f32 %v1106, %v1083
      %v1108 = vxor.u32 %v1107, 2147483648
      %v1109 = vmul.f32 %v1108, 1.442695
      %v1110 = vpow.pop %v1109
      %v1111 = vadd.f32 %v1110, 1.0
      %v1112 = vrcp.pop %v1111
      %v1113 = vmul.f32 %v1111, %v1112
      %v1114 = vsub.f32 1.0, %v1113
      %v1115 = vmul.f32 %v1112, %v1114
      %v1116 = vadd.f32 %v1112, %v1115
      %vm1117 = vweird.f32 %v1111
      %vm1118 = vweird.f32 %v1112
      %vm1119 = vmor %vm1117, %vm1118
      %v1120 = vsel %vm1119, %v1112, %v1116
      %v1121 = vand.u32 2147483647, %v1111
      %vm1122 = vcmp.eq.f32.partialorder %v1121, 8.507059e+37
      %v1123 = vand.u32 %v1111, 2147483648
      %v1124 = vor.u32 1.1754944e-38, %v1123
      %v1125 = vsel %vm1122, %v1124, %v1120
      %v1126 = vmul.f32 1.0, %v1125
      %s1127 = scalar_lea.vmem [#allocation3], %s1061
      %v1128 = vld [vmem:[%s1127] sm:$0xff]
      %v1129 = vadd.f32 %v1128, %v1103
      %v1130 = vxor.u32 %v1129, 2147483648
      %v1131 = vmul.f32 %v1130, 1.442695
      %v1132 = vpow.pop %v1131
      %v1133 = vadd.f32 %v1132, 1.0
      %v1134 = vrcp.pop %v1133
      %v1135 = vmul.f32 %v1133, %v1134
      %v1136 = vsub.f32 1.0, %v1135
      %v1137 = vmul.f32 %v1134, %v1136
      %v1138 = vadd.f32 %v1134, %v1137
      %vm1139 = vweird.f32 %v1133
      %vm1140 = vweird.f32 %v1134
      %vm1141 = vmor %vm1139, %vm1140
      %v1142 = vsel %vm1141, %v1134, %v1138
      %v1143 = vand.u32 2147483647, %v1133
      %vm1144 = vcmp.eq.f32.partialorder %v1143, 8.507059e+37
      %v1145 = vand.u32 %v1133, 2147483648
      %v1146 = vor.u32 1.1754944e-38, %v1145
      %v1147 = vsel %vm1144, %v1146, %v1142
      %v1148 = vmul.f32 1.0, %v1147
      %s1149 = scalar_lea.vmem [#allocation4], %s1061
      %v1150 = vld [vmem:[%s1149] sm:$0xff]
      %1151 = vmatpush.msra.mxu0 0.0
      %1152 = vmatpush.msra.mxu0 0.0
      %1153 = vmatpush.msra.mxu0 0.0
      %1154 = vmatpush.msra.mxu0 0.0
      %1155 = vmatpush.msra.mxu0 0.0
      %1156 = vmatpush.msra.mxu0 0.0
      %1157 = vmatpush.msra.mxu0 0.0
      %1158 = vmatpush.msra.mxu0 0.0
      %1159 = vmatpush.msra.mxu0 0.0
      %1160 = vmatpush.msra.mxu0 0.0
      %1161 = vmatpush.msra.mxu0 0.0
      %1162 = vmatpush.msra.mxu0 0.0
      %1163 = vmatpush.msra.mxu0 %v574
      %1164 = vmatpush.msra.mxu0 %v573
      %1165 = vmatpush.msra.mxu0 %v572
      %1166 = vmatpush.msra.mxu0 %v571
      %1167 = vmatmul.f32.gmra.mxu0 %v1063
      %v1168 = vpop.f32.mrf.mxu0
      %v1169 = vadd.f32 %v669, %v1168
      %1170 = vdwg.mxu0
      %v1171 = vmul.f32 %v1126, %v1169
      %v1172 = vadd.f32 %v1150, %v1171
      %v1173 = vtanh.pop %v1172
      %v1174 = vsub.f32 1.0, %v1148
      %v1175 = vmul.f32 %v1174, %v1173
      %v1176 = vmul.f32 %v1148, %v1057
      %v1177 = vadd.f32 %v1175, %v1176
      %s1178 = scalar_lea.vmem [#allocation5], %s1061
      %1179 = vst.msk [vmem:[%s1178] sm:$0xff] %vm426, %v1177
      %s1180 = scalar_select %p576, 5, 2
      %s1181 = smul.u32 %s1180, 8
      %v1183 = vsel %vm426, %v1177, 0
      %1185 = vmatpush.msra.mxu0 0.0
      %1186 = vmatpush.msra.mxu0 0.0
      %1187 = vmatpush.msra.mxu0 0.0
      %1188 = vmatpush.msra.mxu0 0.0
      %1189 = vmatpush.msra.mxu0 0.0
      %1190 = vmatpush.msra.mxu0 0.0
      %1191 = vmatpush.msra.mxu0 0.0
      %1192 = vmatpush.msra.mxu0 0.0
      %1193 = vmatpush.msra.mxu0 0.0
      %1194 = vmatpush.msra.mxu0 0.0
      %1195 = vmatpush.msra.mxu0 0.0
      %1196 = vmatpush.msra.mxu0 0.0
      %1197 = vmatpush.msra.mxu0 %v564
      %1198 = vmatpush.msra.mxu0 %v563
      %1199 = vmatpush.msra.mxu0 %v562
      %1200 = vmatpush.msra.mxu0 %v561
      %1201 = vmatmul.f32.gmra.mxu0 %v1183
      %v1202 = vpop.f32.mrf.mxu0
      %v1203 = vadd.f32 0.0, %v1202
      %1204 = vdwg.mxu0
      %1205 = vmatpush.msra.mxu0 0.0
      %1206 = vmatpush.msra.mxu0 0.0
      %1207 = vmatpush.msra.mxu0 0.0
      %1208 = vmatpush.msra.mxu0 0.0
      %1209 = vmatpush.msra.mxu0 0.0
      %1210 = vmatpush.msra.mxu0 0.0
      %1211 = vmatpush.msra.mxu0 0.0
      %1212 = vmatpush.msra.mxu0 0.0
      %1213 = vmatpush.msra.mxu0 0.0
      %1214 = vmatpush.msra.mxu0 0.0
      %1215 = vmatpush.msra.mxu0 0.0
      %1216 = vmatpush.msra.mxu0 0.0
      %1217 = vmatpush.msra.mxu0 %v569
      %1218 = vmatpush.msra.mxu0 %v568
      %1219 = vmatpush.msra.mxu0 %v567
      %1220 = vmatpush.msra.mxu0 %v566
      %1221 = vmatmul.f32.gmra.mxu0 %v1183
      %v1222 = vpop.f32.mrf.mxu0
      %v1223 = vadd.f32 0.0, %v1222
      %1224 = vdwg.mxu0
      %s1225 = scalar_lea.vmem [#allocation2], %s1181
      %v1226 = vld [vmem:[%s1225] sm:$0xff]
      %v1227 = vadd.f32 %v1226, %v1203
      %v1228 = vxor.u32 %v1227, 2147483648
      %v1229 = vmul.f32 %v1228, 1.442695
      %v1230 = vpow.pop %v1229
      %v1231 = vadd.f32 %v1230, 1.0
      %v1232 = vrcp.pop %v1231
      %v1233 = vmul.f32 %v1231, %v1232
      %v1234 = vsub.f32 1.0, %v1233
      %v1235 = vmul.f32 %v1232, %v1234
      %v1236 = vadd.f32 %v1232, %v1235
      %vm1237 = vweird.f32 %v1231
      %vm1238 = vweird.f32 %v1232
      %vm1239 = vmor %vm1237, %vm1238
      %v1240 = vsel %vm1239, %v1232, %v1236
      %v1241 = vand.u32 2147483647, %v1231
      %vm1242 = vcmp.eq.f32.partialorder %v1241, 8.507059e+37
      %v1243 = vand.u32 %v1231, 2147483648
      %v1244 = vor.u32 1.1754944e-38, %v1243
      %v1245 = vsel %vm1242, %v1244, %v1240
      %v1246 = vmul.f32 1.0, %v1245
      %s1247 = scalar_lea.vmem [#allocation3], %s1181
      %v1248 = vld [vmem:[%s1247] sm:$0xff]
      %v1249 = vadd.f32 %v1248, %v1223
      %v1250 = vxor.u32 %v1249, 2147483648
      %v1251 = vmul.f32 %v1250, 1.442695
      %v1252 = vpow.pop %v1251
      %v1253 = vadd.f32 %v1252, 1.0
      %v1254 = vrcp.pop %v1253
      %v1255 = vmul.f32 %v1253, %v1254
      %v1256 = vsub.f32 1.0, %v1255
      %v1257 = vmul.f32 %v1254, %v1256
      %v1258 = vadd.f32 %v1254, %v1257
      %vm1259 = vweird.f32 %v1253
      %vm1260 = vweird.f32 %v1254
      %vm1261 = vmor %vm1259, %vm1260
      %v1262 = vsel %vm1261, %v1254, %v1258
      %v1263 = vand.u32 2147483647, %v1253
      %vm1264 = vcmp.eq.f32.partialorder %v1263, 8.507059e+37
      %v1265 = vand.u32 %v1253, 2147483648
      %v1266 = vor.u32 1.1754944e-38, %v1265
      %v1267 = vsel %vm1264, %v1266, %v1262
      %v1268 = vmul.f32 1.0, %v1267
      %s1269 = scalar_lea.vmem [#allocation4], %s1181
      %v1270 = vld [vmem:[%s1269] sm:$0xff]
      %1271 = vmatpush.msra.mxu0 0.0
      %1272 = vmatpush.msra.mxu0 0.0
      %1273 = vmatpush.msra.mxu0 0.0
      %1274 = vmatpush.msra.mxu0 0.0
      %1275 = vmatpush.msra.mxu0 0.0
      %1276 = vmatpush.msra.mxu0 0.0
      %1277 = vmatpush.msra.mxu0 0.0
      %1278 = vmatpush.msra.mxu0 0.0
      %1279 = vmatpush.msra.mxu0 0.0
      %1280 = vmatpush.msra.mxu0 0.0
      %1281 = vmatpush.msra.mxu0 0.0
      %1282 = vmatpush.msra.mxu0 0.0
      %1283 = vmatpush.msra.mxu0 %v574
      %1284 = vmatpush.msra.mxu0 %v573
      %1285 = vmatpush.msra.mxu0 %v572
      %1286 = vmatpush.msra.mxu0 %v571
      %1287 = vmatmul.f32.gmra.mxu0 %v1183
      %v1288 = vpop.f32.mrf.mxu0
      %v1289 = vadd.f32 %v669, %v1288
      %1290 = vdwg.mxu0
      %v1291 = vmul.f32 %v1246, %v1289
      %v1292 = vadd.f32 %v1270, %v1291
      %v1293 = vtanh.pop %v1292
      %v1294 = vsub.f32 1.0, %v1268
      %v1295 = vmul.f32 %v1294, %v1293
      %v1296 = vmul.f32 %v1268, %v1177
      %v1297 = vadd.f32 %v1295, %v1296
      %s1298 = scalar_lea.vmem [#allocation5], %s1181
      %1299 = vst.msk [vmem:[%s1298] sm:$0xff] %vm426, %v1297
      %s1300 = scalar_select %p576, 6, 1
      %s1301 = smul.u32 %s1300, 8
      %v1303 = vsel %vm426, %v1297, 0
      %1305 = vmatpush.msra.mxu0 0.0
      %1306 = vmatpush.msra.mxu0 0.0
      %1307 = vmatpush.msra.mxu0 0.0
      %1308 = vmatpush.msra.mxu0 0.0
      %1309 = vmatpush.msra.mxu0 0.0
      %1310 = vmatpush.msra.mxu0 0.0
      %1311 = vmatpush.msra.mxu0 0.0
      %1312 = vmatpush.msra.mxu0 0.0
      %1313 = vmatpush.msra.mxu0 0.0
      %1314 = vmatpush.msra.mxu0 0.0
      %1315 = vmatpush.msra.mxu0 0.0
      %1316 = vmatpush.msra.mxu0 0.0
      %1317 = vmatpush.msra.mxu0 %v564
      %1318 = vmatpush.msra.mxu0 %v563
      %1319 = vmatpush.msra.mxu0 %v562
      %1320 = vmatpush.msra.mxu0 %v561
      %1321 = vmatmul.f32.gmra.mxu0 %v1303
      %v1322 = vpop.f32.mrf.mxu0
      %v1323 = vadd.f32 0.0, %v1322
      %1324 = vdwg.mxu0
      %1325 = vmatpush.msra.mxu0 0.0
      %1326 = vmatpush.msra.mxu0 0.0
      %1327 = vmatpush.msra.mxu0 0.0
      %1328 = vmatpush.msra.mxu0 0.0
      %1329 = vmatpush.msra.mxu0 0.0
      %1330 = vmatpush.msra.mxu0 0.0
      %1331 = vmatpush.msra.mxu0 0.0
      %1332 = vmatpush.msra.mxu0 0.0
      %1333 = vmatpush.msra.mxu0 0.0
      %1334 = vmatpush.msra.mxu0 0.0
      %1335 = vmatpush.msra.mxu0 0.0
      %1336 = vmatpush.msra.mxu0 0.0
      %1337 = vmatpush.msra.mxu0 %v569
      %1338 = vmatpush.msra.mxu0 %v568
      %1339 = vmatpush.msra.mxu0 %v567
      %1340 = vmatpush.msra.mxu0 %v566
      %1341 = vmatmul.f32.gmra.mxu0 %v1303
      %v1342 = vpop.f32.mrf.mxu0
      %v1343 = vadd.f32 0.0, %v1342
      %1344 = vdwg.mxu0
      %s1345 = scalar_lea.vmem [#allocation2], %s1301
      %v1346 = vld [vmem:[%s1345] sm:$0xff]
      %v1347 = vadd.f32 %v1346, %v1323
      %v1348 = vxor.u32 %v1347, 2147483648
      %v1349 = vmul.f32 %v1348, 1.442695
      %v1350 = vpow.pop %v1349
      %v1351 = vadd.f32 %v1350, 1.0
      %v1352 = vrcp.pop %v1351
      %v1353 = vmul.f32 %v1351, %v1352
      %v1354 = vsub.f32 1.0, %v1353
      %v1355 = vmul.f32 %v1352, %v1354
      %v1356 = vadd.f32 %v1352, %v1355
      %vm1357 = vweird.f32 %v1351
      %vm1358 = vweird.f32 %v1352
      %vm1359 = vmor %vm1357, %vm1358
      %v1360 = vsel %vm1359, %v1352, %v1356
      %v1361 = vand.u32 2147483647, %v1351
      %vm1362 = vcmp.eq.f32.partialorder %v1361, 8.507059e+37
      %v1363 = vand.u32 %v1351, 2147483648
      %v1364 = vor.u32 1.1754944e-38, %v1363
      %v1365 = vsel %vm1362, %v1364, %v1360
      %v1366 = vmul.f32 1.0, %v1365
      %s1367 = scalar_lea.vmem [#allocation3], %s1301
      %v1368 = vld [vmem:[%s1367] sm:$0xff]
      %v1369 = vadd.f32 %v1368, %v1343
      %v1370 = vxor.u32 %v1369, 2147483648
      %v1371 = vmul.f32 %v1370, 1.442695
      %v1372 = vpow.pop %v1371
      %v1373 = vadd.f32 %v1372, 1.0
      %v1374 = vrcp.pop %v1373
      %v1375 = vmul.f32 %v1373, %v1374
      %v1376 = vsub.f32 1.0, %v1375
      %v1377 = vmul.f32 %v1374, %v1376
      %v1378 = vadd.f32 %v1374, %v1377
      %vm1379 = vweird.f32 %v1373
      %vm1380 = vweird.f32 %v1374
      %vm1381 = vmor %vm1379, %vm1380
      %v1382 = vsel %vm1381, %v1374, %v1378
      %v1383 = vand.u32 2147483647, %v1373
      %vm1384 = vcmp.eq.f32.partialorder %v1383, 8.507059e+37
      %v1385 = vand.u32 %v1373, 2147483648
      %v1386 = vor.u32 1.1754944e-38, %v1385
      %v1387 = vsel %vm1384, %v1386, %v1382
      %v1388 = vmul.f32 1.0, %v1387
      %s1389 = scalar_lea.vmem [#allocation4], %s1301
      %v1390 = vld [vmem:[%s1389] sm:$0xff]
      %1391 = vmatpush.msra.mxu0 0.0
      %1392 = vmatpush.msra.mxu0 0.0
      %1393 = vmatpush.msra.mxu0 0.0
      %1394 = vmatpush.msra.mxu0 0.0
      %1395 = vmatpush.msra.mxu0 0.0
      %1396 = vmatpush.msra.mxu0 0.0
      %1397 = vmatpush.msra.mxu0 0.0
      %1398 = vmatpush.msra.mxu0 0.0
      %1399 = vmatpush.msra.mxu0 0.0
      %1400 = vmatpush.msra.mxu0 0.0
      %1401 = vmatpush.msra.mxu0 0.0
      %1402 = vmatpush.msra.mxu0 0.0
      %1403 = vmatpush.msra.mxu0 %v574
      %1404 = vmatpush.msra.mxu0 %v573
      %1405 = vmatpush.msra.mxu0 %v572
      %1406 = vmatpush.msra.mxu0 %v571
      %1407 = vmatmul.f32.gmra.mxu0 %v1303
      %v1408 = vpop.f32.mrf.mxu0
      %v1409 = vadd.f32 %v669, %v1408
      %1410 = vdwg.mxu0
      %v1411 = vmul.f32 %v1366, %v1409
      %v1412 = vadd.f32 %v1390, %v1411
      %v1413 = vtanh.pop %v1412
      %v1414 = vsub.f32 1.0, %v1388
      %v1415 = vmul.f32 %v1414, %v1413
      %v1416 = vmul.f32 %v1388, %v1297
      %v1417 = vadd.f32 %v1415, %v1416
      %s1418 = scalar_lea.vmem [#allocation5], %s1301
      %1419 = vst.msk [vmem:[%s1418] sm:$0xff] %vm426, %v1417
      %s1420 = scalar_select %p576, 7, 0
      %s1421 = smul.u32 %s1420, 8
      %v1423 = vsel %vm426, %v1417, 0
      %1425 = vmatpush.msra.mxu0 0.0
      %1426 = vmatpush.msra.mxu0 0.0
      %1427 = vmatpush.msra.mxu0 0.0
      %1428 = vmatpush.msra.mxu0 0.0
      %1429 = vmatpush.msra.mxu0 0.0
      %1430 = vmatpush.msra.mxu0 0.0
      %1431 = vmatpush.msra.mxu0 0.0
      %1432 = vmatpush.msra.mxu0 0.0
      %1433 = vmatpush.msra.mxu0 0.0
      %1434 = vmatpush.msra.mxu0 0.0
      %1435 = vmatpush.msra.mxu0 0.0
      %1436 = vmatpush.msra.mxu0 0.0
      %1437 = vmatpush.msra.mxu0 %v564
      %1438 = vmatpush.msra.mxu0 %v563
      %1439 = vmatpush.msra.mxu0 %v562
      %1440 = vmatpush.msra.mxu0 %v561
      %1441 = vmatmul.f32.gmra.mxu0 %v1423
      %v1442 = vpop.f32.mrf.mxu0
      %v1443 = vadd.f32 0.0, %v1442
      %1444 = vdwg.mxu0
      %1445 = vmatpush.msra.mxu0 0.0
      %1446 = vmatpush.msra.mxu0 0.0
      %1447 = vmatpush.msra.mxu0 0.0
      %1448 = vmatpush.msra.mxu0 0.0
      %1449 = vmatpush.msra.mxu0 0.0
      %1450 = vmatpush.msra.mxu0 0.0
      %1451 = vmatpush.msra.mxu0 0.0
      %1452 = vmatpush.msra.mxu0 0.0
      %1453 = vmatpush.msra.mxu0 0.0
      %1454 = vmatpush.msra.mxu0 0.0
      %1455 = vmatpush.msra.mxu0 0.0
      %1456 = vmatpush.msra.mxu0 0.0
      %1457 = vmatpush.msra.mxu0 %v569
      %1458 = vmatpush.msra.mxu0 %v568
      %1459 = vmatpush.msra.mxu0 %v567
      %1460 = vmatpush.msra.mxu0 %v566
      %1461 = vmatmul.f32.gmra.mxu0 %v1423
      %v1462 = vpop.f32.mrf.mxu0
      %v1463 = vadd.f32 0.0, %v1462
      %1464 = vdwg.mxu0
      %s1465 = scalar_lea.vmem [#allocation2], %s1421
      %v1466 = vld [vmem:[%s1465] sm:$0xff]
      %v1467 = vadd.f32 %v1466, %v1443
      %v1468 = vxor.u32 %v1467, 2147483648
      %v1469 = vmul.f32 %v1468, 1.442695
      %v1470 = vpow.pop %v1469
      %v1471 = vadd.f32 %v1470, 1.0
      %v1472 = vrcp.pop %v1471
      %v1473 = vmul.f32 %v1471, %v1472
      %v1474 = vsub.f32 1.0, %v1473
      %v1475 = vmul.f32 %v1472, %v1474
      %v1476 = vadd.f32 %v1472, %v1475
      %vm1477 = vweird.f32 %v1471
      %vm1478 = vweird.f32 %v1472
      %vm1479 = vmor %vm1477, %vm1478
      %v1480 = vsel %vm1479, %v1472, %v1476
      %v1481 = vand.u32 2147483647, %v1471
      %vm1482 = vcmp.eq.f32.partialorder %v1481, 8.507059e+37
      %v1483 = vand.u32 %v1471, 2147483648
      %v1484 = vor.u32 1.1754944e-38, %v1483
      %v1485 = vsel %vm1482, %v1484, %v1480
      %v1486 = vmul.f32 1.0, %v1485
      %s1487 = scalar_lea.vmem [#allocation3], %s1421
      %v1488 = vld [vmem:[%s1487] sm:$0xff]
      %v1489 = vadd.f32 %v1488, %v1463
      %v1490 = vxor.u32 %v1489, 2147483648
      %v1491 = vmul.f32 %v1490, 1.442695
      %v1492 = vpow.pop %v1491
      %v1493 = vadd.f32 %v1492, 1.0
      %v1494 = vrcp.pop %v1493
      %v1495 = vmul.f32 %v1493, %v1494
      %v1496 = vsub.f32 1.0, %v1495
      %v1497 = vmul.f32 %v1494, %v1496
      %v1498 = vadd.f32 %v1494, %v1497
      %vm1499 = vweird.f32 %v1493
      %vm1500 = vweird.f32 %v1494
      %vm1501 = vmor %vm1499, %vm1500
      %v1502 = vsel %vm1501, %v1494, %v1498
      %v1503 = vand.u32 2147483647, %v1493
      %vm1504 = vcmp.eq.f32.partialorder %v1503, 8.507059e+37
      %v1505 = vand.u32 %v1493, 2147483648
      %v1506 = vor.u32 1.1754944e-38, %v1505
      %v1507 = vsel %vm1504, %v1506, %v1502
      %v1508 = vmul.f32 1.0, %v1507
      %s1509 = scalar_lea.vmem [#allocation4], %s1421
      %v1510 = vld [vmem:[%s1509] sm:$0xff]
      %1511 = vmatpush.msra.mxu0 0.0
      %1512 = vmatpush.msra.mxu0 0.0
      %1513 = vmatpush.msra.mxu0 0.0
      %1514 = vmatpush.msra.mxu0 0.0
      %1515 = vmatpush.msra.mxu0 0.0
      %1516 = vmatpush.msra.mxu0 0.0
      %1517 = vmatpush.msra.mxu0 0.0
      %1518 = vmatpush.msra.mxu0 0.0
      %1519 = vmatpush.msra.mxu0 0.0
      %1520 = vmatpush.msra.mxu0 0.0
      %1521 = vmatpush.msra.mxu0 0.0
      %1522 = vmatpush.msra.mxu0 0.0
      %1523 = vmatpush.msra.mxu0 %v574
      %1524 = vmatpush.msra.mxu0 %v573
      %1525 = vmatpush.msra.mxu0 %v572
      %1526 = vmatpush.msra.mxu0 %v571
      %1527 = vmatmul.f32.gmra.mxu0 %v1423
      %v1528 = vpop.f32.mrf.mxu0
      %v1529 = vadd.f32 %v669, %v1528
      %1530 = vdwg.mxu0
      %v1531 = vmul.f32 %v1486, %v1529
      %v1532 = vadd.f32 %v1510, %v1531
      %v1533 = vtanh.pop %v1532
      %v1534 = vsub.f32 1.0, %v1508
      %v1535 = vmul.f32 %v1534, %v1533
      %v1536 = vmul.f32 %v1508, %v1417
      %v1537 = vadd.f32 %v1535, %v1536
      %s1538 = scalar_lea.vmem [#allocation5], %s1421
      %1539 = vst.msk [vmem:[%s1538] sm:$0xff] %vm426, %v1537
      // Predicated region
      $region49: #{encoder_forward.3} parent=47 // pred_check
        %p1540 = pneg %p576
      $region50: #{encoder_forward.3} parent=47 // pred_check_branch
        %1542 = sbr.rel (%p1540) target = $region52
      $region51: #{encoder_forward.3} parent=47 // pred_region
        %v1543 = vld [vmem:[#allocation5] sm:$0xff]
        %v1544 = vld [vmem:[#allocation5 + $0x8] sm:$0xff]
        %v1545 = vld [vmem:[#allocation5 + $0x10] sm:$0xff]
        %v1546 = vld [vmem:[#allocation5 + $0x18] sm:$0xff]
        %v1547 = vld [vmem:[#allocation5 + $0x20] sm:$0xff]
        %v1548 = vld [vmem:[#allocation5 + $0x28] sm:$0xff]
        %v1549 = vld [vmem:[#allocation5 + $0x30] sm:$0xff]
        %v1550 = vld [vmem:[#allocation5 + $0x38] sm:$0xff]
        %1551 = vst.msk [vmem:[%s7] sm:$0xff] %vm426, %v1543
        %1552 = vst.msk [vmem:[%s7 + $0x8] sm:$0xff] %vm426, %v1544
        %1553 = vst.msk [vmem:[%s7 + $0x10] sm:$0xff] %vm426, %v1545
        %1554 = vst.msk [vmem:[%s7 + $0x18] sm:$0xff] %vm426, %v1546
        %1555 = vst.msk [vmem:[%s7 + $0x20] sm:$0xff] %vm426, %v1547
        %1556 = vst.msk [vmem:[%s7 + $0x28] sm:$0xff] %vm426, %v1548
        %1557 = vst.msk [vmem:[%s7 + $0x30] sm:$0xff] %vm426, %v1549
        %1558 = vst.msk [vmem:[%s7 + $0x38] sm:$0xff] %vm426, %v1550
        %1559 = vst.msk [vmem:[#allocation6] sm:$0xff] %vm426, %v1537
      $region52: #{encoder_forward.3} parent=47 // pred_fallthru
        _
      %p1560 = scmp.eq.s32.totalorder %s20, 1
      // Predicated region
      $region53: #{encoder_forward.3} parent=47 // pred_check
        %p1561 = pneg %p1560
      $region54: #{encoder_forward.3} parent=47 // pred_check_branch
        %1563 = sbr.rel (%p1561) target = $region56
      $region55: #{encoder_forward.3} parent=47 // pred_region
        %v1564 = vld [vmem:[#allocation5] sm:$0xff]
        %v1565 = vld [vmem:[#allocation5 + $0x8] sm:$0xff]
        %v1566 = vld [vmem:[#allocation5 + $0x10] sm:$0xff]
        %v1567 = vld [vmem:[#allocation5 + $0x18] sm:$0xff]
        %v1568 = vld [vmem:[#allocation5 + $0x20] sm:$0xff]
        %v1569 = vld [vmem:[#allocation5 + $0x28] sm:$0xff]
        %v1570 = vld [vmem:[#allocation5 + $0x30] sm:$0xff]
        %v1571 = vld [vmem:[#allocation5 + $0x38] sm:$0xff]
        %1580 = vrot.lane.b32.xlu0 %v1564, 32
        %v1581 = vpop.permute.xlu0 %1580
        %1582 = vrot.lane.b32.xlu0 %v1565, 32
        %v1583 = vpop.permute.xlu0 %1582
        %1584 = vrot.lane.b32.xlu0 %v1566, 32
        %v1585 = vpop.permute.xlu0 %1584
        %1586 = vrot.lane.b32.xlu0 %v1567, 32
        %v1587 = vpop.permute.xlu0 %1586
        %1588 = vrot.lane.b32.xlu0 %v1568, 32
        %v1589 = vpop.permute.xlu0 %1588
        %1590 = vrot.lane.b32.xlu0 %v1569, 32
        %v1591 = vpop.permute.xlu0 %1590
        %1592 = vrot.lane.b32.xlu0 %v1570, 32
        %v1593 = vpop.permute.xlu0 %1592
        %1594 = vrot.lane.b32.xlu0 %v1571, 32
        %v1595 = vpop.permute.xlu0 %1594
        %vm1604 = vcmask 523520
        %1605 = vst.msk [vmem:[%s7] sm:$0xff] %vm1604, %v1581
        %1606 = vst.msk [vmem:[%s7 + $0x8] sm:$0xff] %vm1604, %v1583
        %1607 = vst.msk [vmem:[%s7 + $0x10] sm:$0xff] %vm1604, %v1585
        %1608 = vst.msk [vmem:[%s7 + $0x18] sm:$0xff] %vm1604, %v1587
        %1609 = vst.msk [vmem:[%s7 + $0x20] sm:$0xff] %vm1604, %v1589
        %1610 = vst.msk [vmem:[%s7 + $0x28] sm:$0xff] %vm1604, %v1591
        %1611 = vst.msk [vmem:[%s7 + $0x30] sm:$0xff] %vm1604, %v1593
        %1612 = vst.msk [vmem:[%s7 + $0x38] sm:$0xff] %vm1604, %v1595
        %v1613 = vld [vmem:[#allocation6] sm:$0xff]
        %v1614 = vld [vmem:[%s5] sm:$0xff]
        %v1615 = vld [vmem:[%s5 + $0x8] sm:$0xff]
        %v1616 = vld [vmem:[%s5 + $0x10] sm:$0xff]
        %v1617 = vld [vmem:[%s5 + $0x18] sm:$0xff]
        %s1618 = scalar_lea.vmem %s5, 32
        %v1619 = vld [vmem:[%s1618] sm:$0xff]
        %v1620 = vld [vmem:[%s1618 + $0x8] sm:$0xff]
        %v1621 = vld [vmem:[%s1618 + $0x10] sm:$0xff]
        %v1622 = vld [vmem:[%s1618 + $0x18] sm:$0xff]
        %v1624 = vsel %vm426, %v1537, 0
        %1626 = vmatpush.msra.mxu0 0.0
        %1627 = vmatpush.msra.mxu0 0.0
        %1628 = vmatpush.msra.mxu0 0.0
        %1629 = vmatpush.msra.mxu0 0.0
        %1630 = vmatpush.msra.mxu0 0.0
        %1631 = vmatpush.msra.mxu0 0.0
        %1632 = vmatpush.msra.mxu0 0.0
        %1633 = vmatpush.msra.mxu0 0.0
        %1634 = vmatpush.msra.mxu0 0.0
        %1635 = vmatpush.msra.mxu0 0.0
        %1636 = vmatpush.msra.mxu0 0.0
        %1637 = vmatpush.msra.mxu0 0.0
        %1638 = vmatpush.msra.mxu0 %v1622
        %1639 = vmatpush.msra.mxu0 %v1621
        %1640 = vmatpush.msra.mxu0 %v1620
        %1641 = vmatpush.msra.mxu0 %v1619
        %1642 = vmatmul.f32.gmra.mxu0 %v1624
        %v1643 = vpop.f32.mrf.mxu0
        %v1644 = vadd.f32 0.0, %v1643
        %1645 = vdwg.mxu0
        %v1647 = vsel %vm426, %v1613, 0
        %1649 = vmatpush.msra.mxu0 0.0
        %1650 = vmatpush.msra.mxu0 0.0
        %1651 = vmatpush.msra.mxu0 0.0
        %1652 = vmatpush.msra.mxu0 0.0
        %1653 = vmatpush.msra.mxu0 0.0
        %1654 = vmatpush.msra.mxu0 0.0
        %1655 = vmatpush.msra.mxu0 0.0
        %1656 = vmatpush.msra.mxu0 0.0
        %1657 = vmatpush.msra.mxu0 0.0
        %1658 = vmatpush.msra.mxu0 0.0
        %1659 = vmatpush.msra.mxu0 0.0
        %1660 = vmatpush.msra.mxu0 0.0
        %1661 = vmatpush.msra.mxu0 %v1617
        %1662 = vmatpush.msra.mxu0 %v1616
        %1663 = vmatpush.msra.mxu0 %v1615
        %1664 = vmatpush.msra.mxu0 %v1614
        %1665 = vmatmul.f32.gmra.mxu0 %v1647
        %v1666 = vpop.f32.mrf.mxu0
        %v1667 = vadd.f32 %v1644, %v1666
        %1668 = vdwg.mxu0
        %v1669 = vld [vmem:[%s6] sm:$0x1]
        %v1671 = vperm.slane %v1669, 0
        %v1673 = vadd.f32 %v1667, %v1671
        %v1674 = vtanh.pop %v1673
        %1675 = vst.msk [vmem:[%s8] sm:$0xff] %vm426, %v1674
      $region56: #{encoder_forward.3} parent=47 // pred_fallthru
        _
      // Predicated region
      $region57: #{encoder_forward.3} parent=47 // pred_check
        %p1676 = pneg %p200
      $region58: #{encoder_forward.3} parent=47 // pred_check_branch
        %1678 = sbr.rel (%p1676) target = $region60
      $region59: #{encoder_forward.3} parent=47 // pred_region
        _
      $region60: #{encoder_forward.3} parent=47 // pred_fallthru
        _
      // Predicated region
      $region61: #{encoder_forward.3} parent=47 // pred_check
        %p1679 = pneg %p221
      $region62: #{encoder_forward.3} parent=47 // pred_check_branch
        %1681 = sbr.rel (%p1679) target = $region64
      $region63: #{encoder_forward.3} parent=47 // pred_region
        _
      $region64: #{encoder_forward.3} parent=47 // pred_fallthru
        _
      // Predicated region
      $region65: #{encoder_forward.3} parent=47 // pred_check
        %p1682 = pneg %p200
      $region66: #{encoder_forward.3} parent=47 // pred_check_branch
        %1684 = sbr.rel (%p1682) target = $region68
      $region67: #{encoder_forward.3} parent=47 // pred_region
        _
      $region68: #{encoder_forward.3} parent=47 // pred_fallthru
        _
      // Predicated region
      $region69: #{encoder_forward.3} parent=47 // pred_check
        %p1685 = pneg %p221
      $region70: #{encoder_forward.3} parent=47 // pred_check_branch
        %1687 = sbr.rel (%p1685) target = $region72
      $region71: #{encoder_forward.3} parent=47 // pred_region
        _
      $region72: #{encoder_forward.3} parent=47 // pred_fallthru
        _
    $region48: #{encoder_forward.3} parent=5 // pred_fallthru
      _
    %p1688 = scmp.le.s32.totalorder 2, %s15
    // Predicated region
    $region73: #{encoder_forward.3} parent=5 // pred_check
      %p1689 = pneg %p1688
    $region74: #{encoder_forward.3} parent=5 // pred_check_branch
      %1691 = sbr.rel (%p1689) target = $region76
    $region75: #{encoder_forward.3} parent=5 // pred_region
      %s1692 = ssub.s32 %s15, 2
    $region76: #{encoder_forward.3} parent=5 // pred_fallthru
      _
  $region6: #{encoder_forward.3} parent=0 // loop_footer
    %s19 = sadd.s32 1, %s15
  $region7: #{encoder_forward.3} parent=0 // loop_footer_branch
    %14 = sbr.rel target = $region3
  $region8: #{encoder_forward.3} parent=0 // loop_exit
    _

</llo_original>
